<compile_context>
chip_gen: v7x
topology: tpu7x:2x2x1
jax: 0.10.0
libtpu: 0.0.40
codegen_flags: <defaults>
</compile_context>

<pallas_src>
import jax
import jax.numpy as jnp
from jax.experimental import pallas as pl
from jax.experimental.pallas import tpu as pltpu

PATCH = 16       # ViT patch size
EMBED = 768      # ViT-Base feature width (fc1 input) == C*PATCH*PATCH for C=3
HIDDEN = 512     # stand-in for dim=4096 (kept small for the demo)
GENE = 256       # stand-in for CFG['label_size'] (gene_size)
TILE_B = 8       # batch rows per grid step (use 128 on v5e / 256 on v6e,v7x
                 # once the real batch is large enough)


def _geneex_kernel(p_ref, wpe_ref, bpe_ref,
                   w1_ref, b1_ref, w2_ref, b2_ref, w3_ref, b3_ref, o_ref):
    # ---- backbone stub: mean pool over patches, then linear patch embed ----
    # TODO(synk): frozen pretrained ViT transformer blocks have no clean
    # in-script equivalent; the backbone is a deterministic patch-embed + pool.
    # mean_p(patch_p @ Wpe + bpe) == (mean_p patch_p) @ Wpe + bpe, so pool
    # first (cheap reduction on the idle VPU/XLU slot) and run ONE MXU matmul.
    pooled = jnp.sum(p_ref[...].astype(jnp.float32), axis=1) * (
        1.0 / p_ref.shape[1])                                         # (TB, 768) f32
    feat = jnp.dot(pooled.astype(jnp.bfloat16), wpe_ref[...],
                   preferred_element_type=jnp.float32) + bpe_ref[...]  # (TB, 768)

    # ---- MLP head: fc1 -> relu -> fc2 -> relu -> fc3 -----------------------
    h1 = jnp.maximum(
        jnp.dot(feat.astype(jnp.bfloat16), w1_ref[...],
                preferred_element_type=jnp.float32) + b1_ref[...], 0.0)  # (TB, HIDDEN)
    h2 = jnp.maximum(
        jnp.dot(h1.astype(jnp.bfloat16), w2_ref[...],
                preferred_element_type=jnp.float32) + b2_ref[...], 0.0)  # (TB, HIDDEN)
    o_ref[...] = (
        jnp.dot(h2.astype(jnp.bfloat16), w3_ref[...],
                preferred_element_type=jnp.float32)
        + b3_ref[...]).astype(o_ref.dtype)                               # (TB, GENE)


def init_params(key):
    ks = jax.random.split(key, 4)
    scale = 0.02

    def w(k, shape):
        # weights stored bf16 (MXU-native on v5e/v6e/v7x); biases stay f32
        return (scale * jax.random.normal(k, shape, jnp.float32)).astype(jnp.bfloat16)

    return {
        # patch-embed ("backbone" stub): (C*ph*pw=768) -> 768
        "wpe": w(ks[0], (EMBED, EMBED)),
        "bpe": jnp.zeros((1, EMBED), jnp.float32),
        # fc1: 768 -> HIDDEN
        "w1": w(ks[1], (EMBED, HIDDEN)),
        "b1": jnp.zeros((1, HIDDEN), jnp.float32),
        # fc2: HIDDEN -> HIDDEN
        "w2": w(ks[2], (HIDDEN, HIDDEN)),
        "b2": jnp.zeros((1, HIDDEN), jnp.float32),
        # fc3: HIDDEN -> GENE
        "w3": w(ks[3], (HIDDEN, GENE)),
        "b3": jnp.zeros((1, GENE), jnp.float32),
    }


def geneex_forward(x_img, params, *, tile_b=TILE_B):
    B, C, H, W = x_img.shape
    assert H % PATCH == 0 and W % PATCH == 0, "H, W must be multiples of 16"
    nph, npw = H // PATCH, W // PATCH
    P = nph * npw
    assert C * PATCH * PATCH == EMBED, "patch dim must equal 768 (ViT-Base)"

    # glue: NCHW -> (B, P, C*ph*pw), channel-major within each patch (same
    # flattening order as a conv patch-embed weight), cast to bf16.
    # TODO(synk): patch extraction could move into a BlockSpec index_map so
    # the DMA does the gather; kept as a one-shot XLA transform here.
    patches = x_img.reshape(B, C, nph, PATCH, npw, PATCH)
    patches = patches.transpose(0, 2, 4, 1, 3, 5).reshape(B, P, EMBED)
    patches = patches.astype(jnp.bfloat16)

    # pad batch to a multiple of the tile (>= f32 sublane of 8) so the output
    # store is unmasked and the grid divides evenly.
    B_pad = ((B + tile_b - 1) // tile_b) * tile_b
    if B_pad != B:
        patches = jnp.pad(patches, ((0, B_pad - B), (0, 0), (0, 0)))

    grid = (B_pad // tile_b,)

    flops = 2 * B_pad * (EMBED * EMBED + EMBED * HIDDEN
                         + HIDDEN * HIDDEN + HIDDEN * GENE)
    bytes_accessed = (patches.size * 2
                      + sum(int(v.size) * v.dtype.itemsize for v in params.values())
                      + B_pad * GENE * 4)

    out = pl.pallas_call(
        _geneex_kernel,
        out_shape=jax.ShapeDtypeStruct((B_pad, GENE), jnp.float32),
        grid_spec=pltpu.PrefetchScalarGridSpec(
            num_scalar_prefetch=0,
            grid=grid,
            in_specs=[
                # per-tile patch rows: pipelined HBM->VMEM as the grid advances
                pl.BlockSpec((tile_b, P, EMBED), lambda i: (i, 0, 0)),
                # weights / biases: constant index_map -> VMEM-resident
                pl.BlockSpec((EMBED, EMBED), lambda i: (0, 0)),
                pl.BlockSpec((1, EMBED), lambda i: (0, 0)),
                pl.BlockSpec((EMBED, HIDDEN), lambda i: (0, 0)),
                pl.BlockSpec((1, HIDDEN), lambda i: (0, 0)),
                pl.BlockSpec((HIDDEN, HIDDEN), lambda i: (0, 0)),
                pl.BlockSpec((1, HIDDEN), lambda i: (0, 0)),
                pl.BlockSpec((HIDDEN, GENE), lambda i: (0, 0)),
                pl.BlockSpec((1, GENE), lambda i: (0, 0)),
            ],
            # lane-dense (tile_b, GENE) output tile, GENE multiple of 128
            out_specs=pl.BlockSpec((tile_b, GENE), lambda i: (i, 0)),
        ),
        compiler_params=pltpu.CompilerParams(
            dimension_semantics=("parallel",),       # shards tiles on v7x 2-TC
            vmem_limit_bytes=32 * 1024 * 1024,       # explicit, safe on v5e..v7x
        ),
        cost_estimate=pl.CostEstimate(flops=flops, transcendentals=0,
                                      bytes_accessed=bytes_accessed),
    )(patches,
      params["wpe"], params["bpe"],
      params["w1"], params["b1"],
      params["w2"], params["b2"],
      params["w3"], params["b3"])
    return out[:B]


if __name__ == "__main__":
    key = jax.random.PRNGKey(0)
    k_img, k_params = jax.random.split(key)

    # small NCHW image: batch=2, channels=3, spatial=32 -> 4 patches of 16x16
    x = jax.random.normal(k_img, (2, 3, 32, 32), jnp.float32)
    params = init_params(k_params)

    y = geneex_forward(x, params)
    y = jax.block_until_ready(y)
    assert y.shape == (2, GENE) and y.dtype == jnp.float32
    assert bool(jnp.all(jnp.isfinite(y)))
    print("KERNEL_OK")
</pallas_src>

<mosaic_0001>
module attributes {stable_mosaic.version = 11 : i64} {
  func.func @_geneex_kernel(%arg0: i32, %arg1: memref<8x4x768xbf16, #tpu.memory_space<vmem>>, %arg2: memref<768x768xbf16, #tpu.memory_space<vmem>>, %arg3: memref<1x768xf32, #tpu.memory_space<vmem>>, %arg4: memref<768x512xbf16, #tpu.memory_space<vmem>>, %arg5: memref<1x512xf32, #tpu.memory_space<vmem>>, %arg6: memref<512x512xbf16, #tpu.memory_space<vmem>>, %arg7: memref<1x512xf32, #tpu.memory_space<vmem>>, %arg8: memref<512x256xbf16, #tpu.memory_space<vmem>>, %arg9: memref<1x256xf32, #tpu.memory_space<vmem>>, %arg10: memref<8x256xf32, #tpu.memory_space<vmem>>) attributes {dimension_semantics = [#tpu.dimension_semantics<parallel>], iteration_bounds = array<i64: 1>, scalar_prefetch = 0 : i64, scratch_operands = 0 : i64, tpu.core_type = #tpu.core_type<tc>, window_params = [{transform_indices = @transform_0, window_bounds = array<i64: 8, 4, 768>}, {pipeline_mode = #tpu.pipeline_mode<synchronous>, transform_indices = @transform_1, window_bounds = array<i64: 768, 768>}, {pipeline_mode = #tpu.pipeline_mode<synchronous>, transform_indices = @transform_2, window_bounds = array<i64: 1, 768>}, {pipeline_mode = #tpu.pipeline_mode<synchronous>, transform_indices = @transform_3, window_bounds = array<i64: 768, 512>}, {pipeline_mode = #tpu.pipeline_mode<synchronous>, transform_indices = @transform_4, window_bounds = array<i64: 1, 512>}, {pipeline_mode = #tpu.pipeline_mode<synchronous>, transform_indices = @transform_5, window_bounds = array<i64: 512, 512>}, {pipeline_mode = #tpu.pipeline_mode<synchronous>, transform_indices = @transform_6, window_bounds = array<i64: 1, 512>}, {pipeline_mode = #tpu.pipeline_mode<synchronous>, transform_indices = @transform_7, window_bounds = array<i64: 512, 256>}, {pipeline_mode = #tpu.pipeline_mode<synchronous>, transform_indices = @transform_8, window_bounds = array<i64: 1, 256>}, {transform_indices = @transform_9, window_bounds = array<i64: 8, 256>}]} {
    %c0 = arith.constant 0 : index
    %c0_0 = arith.constant 0 : index
    %c0_1 = arith.constant 0 : index
    %0 = vector.load %arg1[%c0, %c0_0, %c0_1] : memref<8x4x768xbf16, #tpu.memory_space<vmem>>, vector<8x4x768xbf16>
    %1 = arith.extf %0 : vector<8x4x768xbf16> to vector<8x4x768xf32>
    %cst = arith.constant dense<0.000000e+00> : vector<8x768xf32>
    %2 = vector.multi_reduction <add>, %1, %cst [1] : vector<8x4x768xf32> to vector<8x768xf32>
    %cst_2 = arith.constant 2.500000e-01 : f32
    %3 = vector.broadcast %cst_2 : f32 to vector<8x768xf32>
    %4 = arith.mulf %2, %3 : vector<8x768xf32>
    %5 = arith.truncf %4 : vector<8x768xf32> to vector<8x768xbf16>
    %c0_3 = arith.constant 0 : index
    %c0_4 = arith.constant 0 : index
    %6 = vector.load %arg2[%c0_3, %c0_4] : memref<768x768xbf16, #tpu.memory_space<vmem>>, vector<768x768xbf16>
    %cst_5 = arith.constant dense<0.000000e+00> : vector<8x768xf32>
    %7 = tpu.matmul %5, %6, %cst_5 {dimension_numbers = #tpu.dot_dimension_numbers<[1], [0], [0], [1], [0, 0, 1, 1], [], []>} : vector<8x768xbf16>, vector<768x768xbf16>, vector<8x768xf32> -> vector<8x768xf32>
    %c0_6 = arith.constant 0 : index
    %c0_7 = arith.constant 0 : index
    %8 = vector.load %arg3[%c0_6, %c0_7] : memref<1x768xf32, #tpu.memory_space<vmem>>, vector<1x768xf32>
    %9 = vector.broadcast %8 : vector<1x768xf32> to vector<8x768xf32>
    %10 = arith.addf %7, %9 : vector<8x768xf32>
    %11 = arith.truncf %10 : vector<8x768xf32> to vector<8x768xbf16>
    %c0_8 = arith.constant 0 : index
    %c0_9 = arith.constant 0 : index
    %12 = vector.load %arg4[%c0_8, %c0_9] : memref<768x512xbf16, #tpu.memory_space<vmem>>, vector<768x512xbf16>
    %cst_10 = arith.constant dense<0.000000e+00> : vector<8x512xf32>
    %13 = tpu.matmul %11, %12, %cst_10 {dimension_numbers = #tpu.dot_dimension_numbers<[1], [0], [0], [1], [0, 0, 1, 1], [], []>} : vector<8x768xbf16>, vector<768x512xbf16>, vector<8x512xf32> -> vector<8x512xf32>
    %c0_11 = arith.constant 0 : index
    %c0_12 = arith.constant 0 : index
    %14 = vector.load %arg5[%c0_11, %c0_12] : memref<1x512xf32, #tpu.memory_space<vmem>>, vector<1x512xf32>
    %15 = vector.broadcast %14 : vector<1x512xf32> to vector<8x512xf32>
    %16 = arith.addf %13, %15 : vector<8x512xf32>
    %cst_13 = arith.constant 0.000000e+00 : f32
    %17 = vector.broadcast %cst_13 : f32 to vector<8x512xf32>
    %18 = arith.maximumf %16, %17 : vector<8x512xf32>
    %19 = arith.truncf %18 : vector<8x512xf32> to vector<8x512xbf16>
    %c0_14 = arith.constant 0 : index
    %c0_15 = arith.constant 0 : index
    %20 = vector.load %arg6[%c0_14, %c0_15] : memref<512x512xbf16, #tpu.memory_space<vmem>>, vector<512x512xbf16>
    %cst_16 = arith.constant dense<0.000000e+00> : vector<8x512xf32>
    %21 = tpu.matmul %19, %20, %cst_16 {dimension_numbers = #tpu.dot_dimension_numbers<[1], [0], [0], [1], [0, 0, 1, 1], [], []>} : vector<8x512xbf16>, vector<512x512xbf16>, vector<8x512xf32> -> vector<8x512xf32>
    %c0_17 = arith.constant 0 : index
    %c0_18 = arith.constant 0 : index
    %22 = vector.load %arg7[%c0_17, %c0_18] : memref<1x512xf32, #tpu.memory_space<vmem>>, vector<1x512xf32>
    %23 = vector.broadcast %22 : vector<1x512xf32> to vector<8x512xf32>
    %24 = arith.addf %21, %23 : vector<8x512xf32>
    %cst_19 = arith.constant 0.000000e+00 : f32
    %25 = vector.broadcast %cst_19 : f32 to vector<8x512xf32>
    %26 = arith.maximumf %24, %25 : vector<8x512xf32>
    %27 = arith.truncf %26 : vector<8x512xf32> to vector<8x512xbf16>
    %c0_20 = arith.constant 0 : index
    %c0_21 = arith.constant 0 : index
    %28 = vector.load %arg8[%c0_20, %c0_21] : memref<512x256xbf16, #tpu.memory_space<vmem>>, vector<512x256xbf16>
    %cst_22 = arith.constant dense<0.000000e+00> : vector<8x256xf32>
    %29 = tpu.matmul %27, %28, %cst_22 {dimension_numbers = #tpu.dot_dimension_numbers<[1], [0], [0], [1], [0, 0, 1, 1], [], []>} : vector<8x512xbf16>, vector<512x256xbf16>, vector<8x256xf32> -> vector<8x256xf32>
    %c0_23 = arith.constant 0 : index
    %c0_24 = arith.constant 0 : index
    %30 = vector.load %arg9[%c0_23, %c0_24] : memref<1x256xf32, #tpu.memory_space<vmem>>, vector<1x256xf32>
    %31 = vector.broadcast %30 : vector<1x256xf32> to vector<8x256xf32>
    %32 = arith.addf %29, %31 : vector<8x256xf32>
    %c0_25 = arith.constant 0 : index
    %c0_26 = arith.constant 0 : index
    %33 = vector.load %arg10[%c0_25, %c0_26] : memref<8x256xf32, #tpu.memory_space<vmem>>, vector<8x256xf32>
    tpu.vector_store %arg10[%c0_25, %c0_26], %32 {strides = array<i32>} : memref<8x256xf32, #tpu.memory_space<vmem>>, vector<8x256xf32>,
    return
  }
  func.func @transform_0(%arg0: i32) -> (i32, i32, i32) {
    %c0_i32 = arith.constant 0 : i32
    %c0_i32_0 = arith.constant 0 : i32
    %c0_i32_1 = arith.constant 0 : i32
    return %arg0, %c0_i32, %c0_i32_0 : i32, i32, i32
  }
  func.func @transform_1(%arg0: i32) -> (i32, i32) {
    %c0_i32 = arith.constant 0 : i32
    %c0_i32_0 = arith.constant 0 : i32
    %c0_i32_1 = arith.constant 0 : i32
    return %c0_i32, %c0_i32_0 : i32, i32
  }
  func.func @transform_2(%arg0: i32) -> (i32, i32) {
    %c0_i32 = arith.constant 0 : i32
    %c0_i32_0 = arith.constant 0 : i32
    %c0_i32_1 = arith.constant 0 : i32
    return %c0_i32, %c0_i32_0 : i32, i32
  }
  func.func @transform_3(%arg0: i32) -> (i32, i32) {
    %c0_i32 = arith.constant 0 : i32
    %c0_i32_0 = arith.constant 0 : i32
    %c0_i32_1 = arith.constant 0 : i32
    return %c0_i32, %c0_i32_0 : i32, i32
  }
  func.func @transform_4(%arg0: i32) -> (i32, i32) {
    %c0_i32 = arith.constant 0 : i32
    %c0_i32_0 = arith.constant 0 : i32
    %c0_i32_1 = arith.constant 0 : i32
    return %c0_i32, %c0_i32_0 : i32, i32
  }
  func.func @transform_5(%arg0: i32) -> (i32, i32) {
    %c0_i32 = arith.constant 0 : i32
    %c0_i32_0 = arith.constant 0 : i32
    %c0_i32_1 = arith.constant 0 : i32
    return %c0_i32, %c0_i32_0 : i32, i32
  }
  func.func @transform_6(%arg0: i32) -> (i32, i32) {
    %c0_i32 = arith.constant 0 : i32
    %c0_i32_0 = arith.constant 0 : i32
    %c0_i32_1 = arith.constant 0 : i32
    return %c0_i32, %c0_i32_0 : i32, i32
  }
  func.func @transform_7(%arg0: i32) -> (i32, i32) {
    %c0_i32 = arith.constant 0 : i32
    %c0_i32_0 = arith.constant 0 : i32
    %c0_i32_1 = arith.constant 0 : i32
    return %c0_i32, %c0_i32_0 : i32, i32
  }
  func.func @transform_8(%arg0: i32) -> (i32, i32) {
    %c0_i32 = arith.constant 0 : i32
    %c0_i32_0 = arith.constant 0 : i32
    %c0_i32_1 = arith.constant 0 : i32
    return %c0_i32, %c0_i32_0 : i32, i32
  }
  func.func @transform_9(%arg0: i32) -> (i32, i32) {
    %c0_i32 = arith.constant 0 : i32
    %c0_i32_0 = arith.constant 0 : i32
    return %arg0, %c0_i32 : i32, i32
  }
}

</mosaic_0001>

<llo_original>
// kernel: tpu_custom_call.1
$region0: #{tpu_custom_call.1}
  #allocation0 [shape = 'u32[]', space=smem, size = 0x4, offset = 0x4, fixed_abs, tag = 'smem constant byte address 0x4 - core index']
  #allocation1 [shape = 'u32[144,128]{1,0:T(1,128)}', space=vmem, size = 0x12000, scoped, tag = 'internal scratch']
  %s0 = inlined_call_operand.hbm [shape: bf16[8,4,768], index: 0, kind: input, shape index: {}]
  %s1 = inlined_call_operand.hbm [shape: bf16[768,768], index: 1, kind: input, shape index: {}]
  %s2 = inlined_call_operand.hbm [shape: f32[1,768], index: 2, kind: input, shape index: {}]
  %s3 = inlined_call_operand.hbm [shape: bf16[768,512], index: 3, kind: input, shape index: {}]
  %s4 = inlined_call_operand.hbm [shape: f32[1,512], index: 4, kind: input, shape index: {}]
  %s5 = inlined_call_operand.hbm [shape: bf16[512,512], index: 5, kind: input, shape index: {}]
  %s6 = inlined_call_operand.hbm [shape: f32[1,512], index: 6, kind: input, shape index: {}]
  %s7 = inlined_call_operand.hbm [shape: bf16[512,256], index: 7, kind: input, shape index: {}]
  %s8 = inlined_call_operand.hbm [shape: f32[1,256], index: 8, kind: input, shape index: {}]
  %s9 = inlined_call_operand.hbm [shape: f32[8,256], index: 9, kind: output, shape index: {}]
  %s10 = sld [smem:[#allocation0]]
  $region82: #{tpu_custom_call.1} parent=0
    _
  %s12 = ssub.s32 1, %s10
  %s13 = scalar_select 0, %s12, %s10
  $region1: #{tpu_custom_call.1} parent=0
    #allocation2 [shape = 'u8[49152]{0}', space=vmem, size = 0xc000, scoped, tag = 'input window, operand 0, single buffered']
    #allocation3 [shape = 's32[1]{0}', space=sflag, size = 0x4, scoped, tag = 'scoped memory for tpu_custom_call.1']
    #allocation4 [shape = 's32[1]{0}', space=sflag, size = 0x4, scoped, tag = 'scoped memory for tpu_custom_call.1']
    #allocation5 [shape = 'u8[1179648]{0}', space=vmem, size = 0x120000, scoped, tag = 'input window, operand 1, single buffered']
    #allocation6 [shape = 's32[1]{0}', space=sflag, size = 0x4, scoped, tag = 'scoped memory for tpu_custom_call.1']
    #allocation7 [shape = 'u8[3072]{0}', space=vmem, size = 0xc00, scoped, tag = 'input window, operand 2, single buffered']
    #allocation8 [shape = 'u8[786432]{0}', space=vmem, size = 0xc0000, scoped, tag = 'input window, operand 3, single buffered']
    #allocation9 [shape = 's32[1]{0}', space=sflag, size = 0x4, scoped, tag = 'scoped memory for tpu_custom_call.1']
    #allocation10 [shape = 'u8[2048]{0}', space=vmem, size = 0x800, scoped, tag = 'input window, operand 4, single buffered']
    #allocation11 [shape = 'u8[524288]{0}', space=vmem, size = 0x80000, scoped, tag = 'input window, operand 5, single buffered']
    #allocation12 [shape = 's32[1]{0}', space=sflag, size = 0x4, scoped, tag = 'scoped memory for tpu_custom_call.1']
    #allocation13 [shape = 'u8[2048]{0}', space=vmem, size = 0x800, scoped, tag = 'input window, operand 6, single buffered']
    #allocation14 [shape = 'u8[262144]{0}', space=vmem, size = 0x40000, scoped, tag = 'input window, operand 7, single buffered']
    #allocation15 [shape = 's32[1]{0}', space=sflag, size = 0x4, scoped, tag = 'scoped memory for tpu_custom_call.1']
    #allocation16 [shape = 'u8[1024]{0}', space=vmem, size = 0x400, scoped, tag = 'input window, operand 8, single buffered']
    #allocation17 [shape = 'u8[8192]{0}', space=vmem, size = 0x2000, scoped, tag = 'output window, operand 0, single buffered']
    %14 = vsyncpa [#allocation3], 0
    %15 = vsyncpa [#allocation6], 0
    %16 = vsyncpa [#allocation9], 0
    %17 = vsyncpa [#allocation12], 0
    %18 = vsyncpa [#allocation15], 0
    %19 = vsyncpa [#allocation4], 0
    // Predicated region
    $region2: #{tpu_custom_call.1} parent=1 // pred_check
      _
    $region3: #{tpu_custom_call.1} parent=1 // pred_check_branch
      %21 = sbr.rel (0) target = $region5
    $region4: #{tpu_custom_call.1} parent=1 // pred_region
      %s23 = ssub.s32 1536, 1536
      %24 = vsyncadd [#allocation3], %s23
      %s25 = sshll.u32 [#allocation2], 4
      %s26 = int_to_ptr.vmem [resolvable:$true] %s25
      %31 = dma.hbm_to_vmem [thread:$0]  %s0, 1536, %s26, [#allocation3], 192, 192, 12
    $region5: #{tpu_custom_call.1} parent=1 // pred_fallthru
      _
    // Predicated region
    $region6: #{tpu_custom_call.1} parent=1 // pred_check
      _
    $region7: #{tpu_custom_call.1} parent=1 // pred_check_branch
      %33 = sbr.rel (0) target = $region9
    $region8: #{tpu_custom_call.1} parent=1 // pred_region
      %s35 = ssub.s32 36864, 36864
      %36 = vsyncadd [#allocation6], %s35
      %s37 = sshll.u32 [#allocation5], 4
      %s38 = int_to_ptr.vmem [resolvable:$true] %s37
      %43 = dma.hbm_to_vmem [thread:$0]  %s1, 36864, %s38, [#allocation6], 384, 384, 24
    $region9: #{tpu_custom_call.1} parent=1 // pred_fallthru
      _
    // Predicated region
    $region10: #{tpu_custom_call.1} parent=1 // pred_check
      _
    $region11: #{tpu_custom_call.1} parent=1 // pred_check_branch
      %45 = sbr.rel (0) target = $region13
    $region12: #{tpu_custom_call.1} parent=1 // pred_region
      %s47 = ssub.s32 96, 96
      %48 = vsyncadd [#allocation6], %s47
      %s50 = sshll.u32 [#allocation7], 4
      %s51 = int_to_ptr.vmem [resolvable:$true] %s50
      %53 = dma.hbm_to_vmem [thread:$0]  %s2, 96, %s51, [#allocation6]
    $region13: #{tpu_custom_call.1} parent=1 // pred_fallthru
      _
    // Predicated region
    $region14: #{tpu_custom_call.1} parent=1 // pred_check
      _
    $region15: #{tpu_custom_call.1} parent=1 // pred_check_branch
      %55 = sbr.rel (0) target = $region17
    $region16: #{tpu_custom_call.1} parent=1 // pred_region
      %s57 = ssub.s32 24576, 24576
      %58 = vsyncadd [#allocation9], %s57
      %s59 = sshll.u32 [#allocation8], 4
      %s60 = int_to_ptr.vmem [resolvable:$true] %s59
      %65 = dma.hbm_to_vmem [thread:$0]  %s3, 24576, %s60, [#allocation9], 256, 256, 16
    $region17: #{tpu_custom_call.1} parent=1 // pred_fallthru
      _
    // Predicated region
    $region18: #{tpu_custom_call.1} parent=1 // pred_check
      _
    $region19: #{tpu_custom_call.1} parent=1 // pred_check_branch
      %67 = sbr.rel (0) target = $region21
    $region20: #{tpu_custom_call.1} parent=1 // pred_region
      %s69 = ssub.s32 64, 64
      %70 = vsyncadd [#allocation9], %s69
      %s72 = sshll.u32 [#allocation10], 4
      %s73 = int_to_ptr.vmem [resolvable:$true] %s72
      %75 = dma.hbm_to_vmem [thread:$0]  %s4, 64, %s73, [#allocation9]
    $region21: #{tpu_custom_call.1} parent=1 // pred_fallthru
      _
    // Predicated region
    $region22: #{tpu_custom_call.1} parent=1 // pred_check
      _
    $region23: #{tpu_custom_call.1} parent=1 // pred_check_branch
      %77 = sbr.rel (0) target = $region25
    $region24: #{tpu_custom_call.1} parent=1 // pred_region
      %s79 = ssub.s32 16384, 16384
      %80 = vsyncadd [#allocation12], %s79
      %s81 = sshll.u32 [#allocation11], 4
      %s82 = int_to_ptr.vmem [resolvable:$true] %s81
      %87 = dma.hbm_to_vmem [thread:$0]  %s5, 16384, %s82, [#allocation12], 256, 256, 16
    $region25: #{tpu_custom_call.1} parent=1 // pred_fallthru
      _
    // Predicated region
    $region26: #{tpu_custom_call.1} parent=1 // pred_check
      _
    $region27: #{tpu_custom_call.1} parent=1 // pred_check_branch
      %89 = sbr.rel (0) target = $region29
    $region28: #{tpu_custom_call.1} parent=1 // pred_region
      %s91 = ssub.s32 64, 64
      %92 = vsyncadd [#allocation12], %s91
      %s94 = sshll.u32 [#allocation13], 4
      %s95 = int_to_ptr.vmem [resolvable:$true] %s94
      %97 = dma.hbm_to_vmem [thread:$0]  %s6, 64, %s95, [#allocation12]
    $region29: #{tpu_custom_call.1} parent=1 // pred_fallthru
      _
    // Predicated region
    $region30: #{tpu_custom_call.1} parent=1 // pred_check
      _
    $region31: #{tpu_custom_call.1} parent=1 // pred_check_branch
      %99 = sbr.rel (0) target = $region33
    $region32: #{tpu_custom_call.1} parent=1 // pred_region
      %s101 = ssub.s32 8192, 8192
      %102 = vsyncadd [#allocation15], %s101
      %s103 = sshll.u32 [#allocation14], 4
      %s104 = int_to_ptr.vmem [resolvable:$true] %s103
      %109 = dma.hbm_to_vmem [thread:$0]  %s7, 8192, %s104, [#allocation15], 128, 128, 8
    $region33: #{tpu_custom_call.1} parent=1 // pred_fallthru
      _
    // Predicated region
    $region34: #{tpu_custom_call.1} parent=1 // pred_check
      _
    $region35: #{tpu_custom_call.1} parent=1 // pred_check_branch
      %111 = sbr.rel (0) target = $region37
    $region36: #{tpu_custom_call.1} parent=1 // pred_region
      %s113 = ssub.s32 32, 32
      %114 = vsyncadd [#allocation15], %s113
      %s116 = sshll.u32 [#allocation16], 4
      %s117 = int_to_ptr.vmem [resolvable:$true] %s116
      %119 = dma.hbm_to_vmem [thread:$0]  %s8, 32, %s117, [#allocation15]
    $region37: #{tpu_custom_call.1} parent=1 // pred_fallthru
      _
    // Predicated region
    $region38: #{tpu_custom_call.1} parent=1 // pred_check
      _
    $region39: #{tpu_custom_call.1} parent=1 // pred_check_branch
      %121 = sbr.rel (0) target = $region41
    $region40: #{tpu_custom_call.1} parent=1 // pred_region
      %122 = dma.done [#allocation3], 1536
    $region41: #{tpu_custom_call.1} parent=1 // pred_fallthru
      _
    // Predicated region
    $region42: #{tpu_custom_call.1} parent=1 // pred_check
      _
    $region43: #{tpu_custom_call.1} parent=1 // pred_check_branch
      %124 = sbr.rel (0) target = $region45
    $region44: #{tpu_custom_call.1} parent=1 // pred_region
      %125 = dma.done [#allocation6], 36864
    $region45: #{tpu_custom_call.1} parent=1 // pred_fallthru
      _
    // Predicated region
    $region46: #{tpu_custom_call.1} parent=1 // pred_check
      _
    $region47: #{tpu_custom_call.1} parent=1 // pred_check_branch
      %127 = sbr.rel (0) target = $region49
    $region48: #{tpu_custom_call.1} parent=1 // pred_region
      %128 = dma.done [#allocation6], 96
    $region49: #{tpu_custom_call.1} parent=1 // pred_fallthru
      _
    // Predicated region
    $region50: #{tpu_custom_call.1} parent=1 // pred_check
      _
    $region51: #{tpu_custom_call.1} parent=1 // pred_check_branch
      %130 = sbr.rel (0) target = $region53
    $region52: #{tpu_custom_call.1} parent=1 // pred_region
      %131 = dma.done [#allocation9], 24576
    $region53: #{tpu_custom_call.1} parent=1 // pred_fallthru
      _
    // Predicated region
    $region54: #{tpu_custom_call.1} parent=1 // pred_check
      _
    $region55: #{tpu_custom_call.1} parent=1 // pred_check_branch
      %133 = sbr.rel (0) target = $region57
    $region56: #{tpu_custom_call.1} parent=1 // pred_region
      %134 = dma.done [#allocation9], 64
    $region57: #{tpu_custom_call.1} parent=1 // pred_fallthru
      _
    // Predicated region
    $region58: #{tpu_custom_call.1} parent=1 // pred_check
      _
    $region59: #{tpu_custom_call.1} parent=1 // pred_check_branch
      %136 = sbr.rel (0) target = $region61
    $region60: #{tpu_custom_call.1} parent=1 // pred_region
      %137 = dma.done [#allocation12], 16384
    $region61: #{tpu_custom_call.1} parent=1 // pred_fallthru
      _
    // Predicated region
    $region62: #{tpu_custom_call.1} parent=1 // pred_check
      _
    $region63: #{tpu_custom_call.1} parent=1 // pred_check_branch
      %139 = sbr.rel (0) target = $region65
    $region64: #{tpu_custom_call.1} parent=1 // pred_region
      %140 = dma.done [#allocation12], 64
    $region65: #{tpu_custom_call.1} parent=1 // pred_fallthru
      _
    // Predicated region
    $region66: #{tpu_custom_call.1} parent=1 // pred_check
      _
    $region67: #{tpu_custom_call.1} parent=1 // pred_check_branch
      %142 = sbr.rel (0) target = $region69
    $region68: #{tpu_custom_call.1} parent=1 // pred_region
      %143 = dma.done [#allocation15], 8192
    $region69: #{tpu_custom_call.1} parent=1 // pred_fallthru
      _
    // Predicated region
    $region70: #{tpu_custom_call.1} parent=1 // pred_check
      _
    $region71: #{tpu_custom_call.1} parent=1 // pred_check_branch
      %145 = sbr.rel (0) target = $region73
    $region72: #{tpu_custom_call.1} parent=1 // pred_region
      %146 = dma.done [#allocation15], 32
    $region73: #{tpu_custom_call.1} parent=1 // pred_fallthru
      _
    %v147 = vld [vmem:[#allocation2] sm:$0xff]
    %v148 = vld [vmem:[#allocation2 + $0x8] sm:$0xf]
    %v149 = vld [vmem:[#allocation2 + $0xc] sm:$0xff]
    %v150 = vld [vmem:[#allocation2 + $0x14] sm:$0xf]
    %v151 = vld [vmem:[#allocation2 + $0x18] sm:$0xff]
    %v152 = vld [vmem:[#allocation2 + $0x20] sm:$0xf]
    %v153 = vld [vmem:[#allocation2 + $0x24] sm:$0xff]
    %v154 = vld [vmem:[#allocation2 + $0x2c] sm:$0xf]
    %v155 = vld [vmem:[#allocation2 + $0x30] sm:$0xff]
    %v156 = vld [vmem:[#allocation2 + $0x38] sm:$0xf]
    %v157 = vld [vmem:[#allocation2 + $0x3c] sm:$0xff]
    %v158 = vld [vmem:[#allocation2 + $0x44] sm:$0xf]
    %v159 = vld [vmem:[#allocation2 + $0x48] sm:$0xff]
    %v160 = vld [vmem:[#allocation2 + $0x50] sm:$0xf]
    %v161 = vld [vmem:[#allocation2 + $0x54] sm:$0xff]
    %v162 = vld [vmem:[#allocation2 + $0x5c] sm:$0xf]
    %v163 = vunpack.c.l.bf16 %v147
    %v164 = vunpack.c.h.bf16 %v147
    %v165 = vunpack.c.l.bf16 %v148
    %v166 = vunpack.c.l.bf16 %v149
    %v167 = vunpack.c.h.bf16 %v149
    %v168 = vunpack.c.l.bf16 %v150
    %v169 = vunpack.c.l.bf16 %v151
    %v170 = vunpack.c.h.bf16 %v151
    %v171 = vunpack.c.l.bf16 %v152
    %v172 = vunpack.c.l.bf16 %v153
    %v173 = vunpack.c.h.bf16 %v153
    %v174 = vunpack.c.l.bf16 %v154
    %v175 = vunpack.c.l.bf16 %v155
    %v176 = vunpack.c.h.bf16 %v155
    %v177 = vunpack.c.l.bf16 %v156
    %v178 = vunpack.c.l.bf16 %v157
    %v179 = vunpack.c.h.bf16 %v157
    %v180 = vunpack.c.l.bf16 %v158
    %v181 = vunpack.c.l.bf16 %v159
    %v182 = vunpack.c.h.bf16 %v159
    %v183 = vunpack.c.l.bf16 %v160
    %v184 = vunpack.c.l.bf16 %v161
    %v185 = vunpack.c.h.bf16 %v161
    %v186 = vunpack.c.l.bf16 %v162
    %v211 = vcombine.high %v163, %v163
    %v212 = vcombine.high %v164, %v164
    %v213 = vcombine.high %v165, %v165
    %v214 = vcombine.high %v166, %v166
    %v215 = vcombine.high %v167, %v167
    %v216 = vcombine.high %v168, %v168
    %v217 = vcombine.high %v169, %v169
    %v218 = vcombine.high %v170, %v170
    %v219 = vcombine.high %v171, %v171
    %v220 = vcombine.high %v172, %v172
    %v221 = vcombine.high %v173, %v173
    %v222 = vcombine.high %v174, %v174
    %v223 = vcombine.high %v175, %v175
    %v224 = vcombine.high %v176, %v176
    %v225 = vcombine.high %v177, %v177
    %v226 = vcombine.high %v178, %v178
    %v227 = vcombine.high %v179, %v179
    %v228 = vcombine.high %v180, %v180
    %v229 = vcombine.high %v181, %v181
    %v230 = vcombine.high %v182, %v182
    %v231 = vcombine.high %v183, %v183
    %v232 = vcombine.high %v184, %v184
    %v233 = vcombine.high %v185, %v185
    %v234 = vcombine.high %v186, %v186
    %vm259 = vcmask 1043456
    %v260 = vsel %vm259, %v163, 0.0
    %v261 = vrot.slane %v260, 4
    %v262 = vadd.f32 %v260, %v261
    %v263 = vrot.slane %v262, 2
    %v264 = vadd.f32 %v262, %v263
    %v265 = vrot.slane %v264, 1
    %v266 = vadd.f32 %v264, %v265
    %v267 = vsel %vm259, %v211, 0.0
    %v268 = vrot.slane %v267, 4
    %v269 = vadd.f32 %v267, %v268
    %v270 = vrot.slane %v269, 2
    %v271 = vadd.f32 %v269, %v270
    %v272 = vrot.slane %v271, 1
    %v273 = vadd.f32 %v271, %v272
    %v274 = vsel %vm259, %v164, 0.0
    %v275 = vrot.slane %v274, 4
    %v276 = vadd.f32 %v274, %v275
    %v277 = vrot.slane %v276, 2
    %v278 = vadd.f32 %v276, %v277
    %v279 = vrot.slane %v278, 1
    %v280 = vadd.f32 %v278, %v279
    %v281 = vsel %vm259, %v212, 0.0
    %v282 = vrot.slane %v281, 4
    %v283 = vadd.f32 %v281, %v282
    %v284 = vrot.slane %v283, 2
    %v285 = vadd.f32 %v283, %v284
    %v286 = vrot.slane %v285, 1
    %v287 = vadd.f32 %v285, %v286
    %v288 = vsel %vm259, %v165, 0.0
    %v289 = vrot.slane %v288, 4
    %v290 = vadd.f32 %v288, %v289
    %v291 = vrot.slane %v290, 2
    %v292 = vadd.f32 %v290, %v291
    %v293 = vrot.slane %v292, 1
    %v294 = vadd.f32 %v292, %v293
    %v295 = vsel %vm259, %v213, 0.0
    %v296 = vrot.slane %v295, 4
    %v297 = vadd.f32 %v295, %v296
    %v298 = vrot.slane %v297, 2
    %v299 = vadd.f32 %v297, %v298
    %v300 = vrot.slane %v299, 1
    %v301 = vadd.f32 %v299, %v300
    %v302 = vsel %vm259, %v166, 0.0
    %v303 = vrot.slane %v302, 4
    %v304 = vadd.f32 %v302, %v303
    %v305 = vrot.slane %v304, 2
    %v306 = vadd.f32 %v304, %v305
    %v307 = vrot.slane %v306, 1
    %v308 = vadd.f32 %v306, %v307
    %v309 = vsel %vm259, %v214, 0.0
    %v310 = vrot.slane %v309, 4
    %v311 = vadd.f32 %v309, %v310
    %v312 = vrot.slane %v311, 2
    %v313 = vadd.f32 %v311, %v312
    %v314 = vrot.slane %v313, 1
    %v315 = vadd.f32 %v313, %v314
    %v316 = vsel %vm259, %v167, 0.0
    %v317 = vrot.slane %v316, 4
    %v318 = vadd.f32 %v316, %v317
    %v319 = vrot.slane %v318, 2
    %v320 = vadd.f32 %v318, %v319
    %v321 = vrot.slane %v320, 1
    %v322 = vadd.f32 %v320, %v321
    %v323 = vsel %vm259, %v215, 0.0
    %v324 = vrot.slane %v323, 4
    %v325 = vadd.f32 %v323, %v324
    %v326 = vrot.slane %v325, 2
    %v327 = vadd.f32 %v325, %v326
    %v328 = vrot.slane %v327, 1
    %v329 = vadd.f32 %v327, %v328
    %v330 = vsel %vm259, %v168, 0.0
    %v331 = vrot.slane %v330, 4
    %v332 = vadd.f32 %v330, %v331
    %v333 = vrot.slane %v332, 2
    %v334 = vadd.f32 %v332, %v333
    %v335 = vrot.slane %v334, 1
    %v336 = vadd.f32 %v334, %v335
    %v337 = vsel %vm259, %v216, 0.0
    %v338 = vrot.slane %v337, 4
    %v339 = vadd.f32 %v337, %v338
    %v340 = vrot.slane %v339, 2
    %v341 = vadd.f32 %v339, %v340
    %v342 = vrot.slane %v341, 1
    %v343 = vadd.f32 %v341, %v342
    %v344 = vsel %vm259, %v169, 0.0
    %v345 = vrot.slane %v344, 4
    %v346 = vadd.f32 %v344, %v345
    %v347 = vrot.slane %v346, 2
    %v348 = vadd.f32 %v346, %v347
    %v349 = vrot.slane %v348, 1
    %v350 = vadd.f32 %v348, %v349
    %v351 = vsel %vm259, %v217, 0.0
    %v352 = vrot.slane %v351, 4
    %v353 = vadd.f32 %v351, %v352
    %v354 = vrot.slane %v353, 2
    %v355 = vadd.f32 %v353, %v354
    %v356 = vrot.slane %v355, 1
    %v357 = vadd.f32 %v355, %v356
    %v358 = vsel %vm259, %v170, 0.0
    %v359 = vrot.slane %v358, 4
    %v360 = vadd.f32 %v358, %v359
    %v361 = vrot.slane %v360, 2
    %v362 = vadd.f32 %v360, %v361
    %v363 = vrot.slane %v362, 1
    %v364 = vadd.f32 %v362, %v363
    %v365 = vsel %vm259, %v218, 0.0
    %v366 = vrot.slane %v365, 4
    %v367 = vadd.f32 %v365, %v366
    %v368 = vrot.slane %v367, 2
    %v369 = vadd.f32 %v367, %v368
    %v370 = vrot.slane %v369, 1
    %v371 = vadd.f32 %v369, %v370
    %v372 = vsel %vm259, %v171, 0.0
    %v373 = vrot.slane %v372, 4
    %v374 = vadd.f32 %v372, %v373
    %v375 = vrot.slane %v374, 2
    %v376 = vadd.f32 %v374, %v375
    %v377 = vrot.slane %v376, 1
    %v378 = vadd.f32 %v376, %v377
    %v379 = vsel %vm259, %v219, 0.0
    %v380 = vrot.slane %v379, 4
    %v381 = vadd.f32 %v379, %v380
    %v382 = vrot.slane %v381, 2
    %v383 = vadd.f32 %v381, %v382
    %v384 = vrot.slane %v383, 1
    %v385 = vadd.f32 %v383, %v384
    %v386 = vsel %vm259, %v172, 0.0
    %v387 = vrot.slane %v386, 4
    %v388 = vadd.f32 %v386, %v387
    %v389 = vrot.slane %v388, 2
    %v390 = vadd.f32 %v388, %v389
    %v391 = vrot.slane %v390, 1
    %v392 = vadd.f32 %v390, %v391
    %v393 = vsel %vm259, %v220, 0.0
    %v394 = vrot.slane %v393, 4
    %v395 = vadd.f32 %v393, %v394
    %v396 = vrot.slane %v395, 2
    %v397 = vadd.f32 %v395, %v396
    %v398 = vrot.slane %v397, 1
    %v399 = vadd.f32 %v397, %v398
    %v400 = vsel %vm259, %v173, 0.0
    %v401 = vrot.slane %v400, 4
    %v402 = vadd.f32 %v400, %v401
    %v403 = vrot.slane %v402, 2
    %v404 = vadd.f32 %v402, %v403
    %v405 = vrot.slane %v404, 1
    %v406 = vadd.f32 %v404, %v405
    %v407 = vsel %vm259, %v221, 0.0
    %v408 = vrot.slane %v407, 4
    %v409 = vadd.f32 %v407, %v408
    %v410 = vrot.slane %v409, 2
    %v411 = vadd.f32 %v409, %v410
    %v412 = vrot.slane %v411, 1
    %v413 = vadd.f32 %v411, %v412
    %v414 = vsel %vm259, %v174, 0.0
    %v415 = vrot.slane %v414, 4
    %v416 = vadd.f32 %v414, %v415
    %v417 = vrot.slane %v416, 2
    %v418 = vadd.f32 %v416, %v417
    %v419 = vrot.slane %v418, 1
    %v420 = vadd.f32 %v418, %v419
    %v421 = vsel %vm259, %v222, 0.0
    %v422 = vrot.slane %v421, 4
    %v423 = vadd.f32 %v421, %v422
    %v424 = vrot.slane %v423, 2
    %v425 = vadd.f32 %v423, %v424
    %v426 = vrot.slane %v425, 1
    %v427 = vadd.f32 %v425, %v426
    %v428 = vsel %vm259, %v175, 0.0
    %v429 = vrot.slane %v428, 4
    %v430 = vadd.f32 %v428, %v429
    %v431 = vrot.slane %v430, 2
    %v432 = vadd.f32 %v430, %v431
    %v433 = vrot.slane %v432, 1
    %v434 = vadd.f32 %v432, %v433
    %v435 = vsel %vm259, %v223, 0.0
    %v436 = vrot.slane %v435, 4
    %v437 = vadd.f32 %v435, %v436
    %v438 = vrot.slane %v437, 2
    %v439 = vadd.f32 %v437, %v438
    %v440 = vrot.slane %v439, 1
    %v441 = vadd.f32 %v439, %v440
    %v442 = vsel %vm259, %v176, 0.0
    %v443 = vrot.slane %v442, 4
    %v444 = vadd.f32 %v442, %v443
    %v445 = vrot.slane %v444, 2
    %v446 = vadd.f32 %v444, %v445
    %v447 = vrot.slane %v446, 1
    %v448 = vadd.f32 %v446, %v447
    %v449 = vsel %vm259, %v224, 0.0
    %v450 = vrot.slane %v449, 4
    %v451 = vadd.f32 %v449, %v450
    %v452 = vrot.slane %v451, 2
    %v453 = vadd.f32 %v451, %v452
    %v454 = vrot.slane %v453, 1
    %v455 = vadd.f32 %v453, %v454
    %v456 = vsel %vm259, %v177, 0.0
    %v457 = vrot.slane %v456, 4
    %v458 = vadd.f32 %v456, %v457
    %v459 = vrot.slane %v458, 2
    %v460 = vadd.f32 %v458, %v459
    %v461 = vrot.slane %v460, 1
    %v462 = vadd.f32 %v460, %v461
    %v463 = vsel %vm259, %v225, 0.0
    %v464 = vrot.slane %v463, 4
    %v465 = vadd.f32 %v463, %v464
    %v466 = vrot.slane %v465, 2
    %v467 = vadd.f32 %v465, %v466
    %v468 = vrot.slane %v467, 1
    %v469 = vadd.f32 %v467, %v468
    %v470 = vsel %vm259, %v178, 0.0
    %v471 = vrot.slane %v470, 4
    %v472 = vadd.f32 %v470, %v471
    %v473 = vrot.slane %v472, 2
    %v474 = vadd.f32 %v472, %v473
    %v475 = vrot.slane %v474, 1
    %v476 = vadd.f32 %v474, %v475
    %v477 = vsel %vm259, %v226, 0.0
    %v478 = vrot.slane %v477, 4
    %v479 = vadd.f32 %v477, %v478
    %v480 = vrot.slane %v479, 2
    %v481 = vadd.f32 %v479, %v480
    %v482 = vrot.slane %v481, 1
    %v483 = vadd.f32 %v481, %v482
    %v484 = vsel %vm259, %v179, 0.0
    %v485 = vrot.slane %v484, 4
    %v486 = vadd.f32 %v484, %v485
    %v487 = vrot.slane %v486, 2
    %v488 = vadd.f32 %v486, %v487
    %v489 = vrot.slane %v488, 1
    %v490 = vadd.f32 %v488, %v489
    %v491 = vsel %vm259, %v227, 0.0
    %v492 = vrot.slane %v491, 4
    %v493 = vadd.f32 %v491, %v492
    %v494 = vrot.slane %v493, 2
    %v495 = vadd.f32 %v493, %v494
    %v496 = vrot.slane %v495, 1
    %v497 = vadd.f32 %v495, %v496
    %v498 = vsel %vm259, %v180, 0.0
    %v499 = vrot.slane %v498, 4
    %v500 = vadd.f32 %v498, %v499
    %v501 = vrot.slane %v500, 2
    %v502 = vadd.f32 %v500, %v501
    %v503 = vrot.slane %v502, 1
    %v504 = vadd.f32 %v502, %v503
    %v505 = vsel %vm259, %v228, 0.0
    %v506 = vrot.slane %v505, 4
    %v507 = vadd.f32 %v505, %v506
    %v508 = vrot.slane %v507, 2
    %v509 = vadd.f32 %v507, %v508
    %v510 = vrot.slane %v509, 1
    %v511 = vadd.f32 %v509, %v510
    %v512 = vsel %vm259, %v181, 0.0
    %v513 = vrot.slane %v512, 4
    %v514 = vadd.f32 %v512, %v513
    %v515 = vrot.slane %v514, 2
    %v516 = vadd.f32 %v514, %v515
    %v517 = vrot.slane %v516, 1
    %v518 = vadd.f32 %v516, %v517
    %v519 = vsel %vm259, %v229, 0.0
    %v520 = vrot.slane %v519, 4
    %v521 = vadd.f32 %v519, %v520
    %v522 = vrot.slane %v521, 2
    %v523 = vadd.f32 %v521, %v522
    %v524 = vrot.slane %v523, 1
    %v525 = vadd.f32 %v523, %v524
    %v526 = vsel %vm259, %v182, 0.0
    %v527 = vrot.slane %v526, 4
    %v528 = vadd.f32 %v526, %v527
    %v529 = vrot.slane %v528, 2
    %v530 = vadd.f32 %v528, %v529
    %v531 = vrot.slane %v530, 1
    %v532 = vadd.f32 %v530, %v531
    %v533 = vsel %vm259, %v230, 0.0
    %v534 = vrot.slane %v533, 4
    %v535 = vadd.f32 %v533, %v534
    %v536 = vrot.slane %v535, 2
    %v537 = vadd.f32 %v535, %v536
    %v538 = vrot.slane %v537, 1
    %v539 = vadd.f32 %v537, %v538
    %v540 = vsel %vm259, %v183, 0.0
    %v541 = vrot.slane %v540, 4
    %v542 = vadd.f32 %v540, %v541
    %v543 = vrot.slane %v542, 2
    %v544 = vadd.f32 %v542, %v543
    %v545 = vrot.slane %v544, 1
    %v546 = vadd.f32 %v544, %v545
    %v547 = vsel %vm259, %v231, 0.0
    %v548 = vrot.slane %v547, 4
    %v549 = vadd.f32 %v547, %v548
    %v550 = vrot.slane %v549, 2
    %v551 = vadd.f32 %v549, %v550
    %v552 = vrot.slane %v551, 1
    %v553 = vadd.f32 %v551, %v552
    %v554 = vsel %vm259, %v184, 0.0
    %v555 = vrot.slane %v554, 4
    %v556 = vadd.f32 %v554, %v555
    %v557 = vrot.slane %v556, 2
    %v558 = vadd.f32 %v556, %v557
    %v559 = vrot.slane %v558, 1
    %v560 = vadd.f32 %v558, %v559
    %v561 = vsel %vm259, %v232, 0.0
    %v562 = vrot.slane %v561, 4
    %v563 = vadd.f32 %v561, %v562
    %v564 = vrot.slane %v563, 2
    %v565 = vadd.f32 %v563, %v564
    %v566 = vrot.slane %v565, 1
    %v567 = vadd.f32 %v565, %v566
    %v568 = vsel %vm259, %v185, 0.0
    %v569 = vrot.slane %v568, 4
    %v570 = vadd.f32 %v568, %v569
    %v571 = vrot.slane %v570, 2
    %v572 = vadd.f32 %v570, %v571
    %v573 = vrot.slane %v572, 1
    %v574 = vadd.f32 %v572, %v573
    %v575 = vsel %vm259, %v233, 0.0
    %v576 = vrot.slane %v575, 4
    %v577 = vadd.f32 %v575, %v576
    %v578 = vrot.slane %v577, 2
    %v579 = vadd.f32 %v577, %v578
    %v580 = vrot.slane %v579, 1
    %v581 = vadd.f32 %v579, %v580
    %v582 = vsel %vm259, %v186, 0.0
    %v583 = vrot.slane %v582, 4
    %v584 = vadd.f32 %v582, %v583
    %v585 = vrot.slane %v584, 2
    %v586 = vadd.f32 %v584, %v585
    %v587 = vrot.slane %v586, 1
    %v588 = vadd.f32 %v586, %v587
    %v589 = vsel %vm259, %v234, 0.0
    %v590 = vrot.slane %v589, 4
    %v591 = vadd.f32 %v589, %v590
    %v592 = vrot.slane %v591, 2
    %v593 = vadd.f32 %v591, %v592
    %v594 = vrot.slane %v593, 1
    %v595 = vadd.f32 %v593, %v594
    %v596 = vmul.f32 %v266, 0.25
    %v597 = vmul.f32 %v273, 0.25
    %v598 = vmul.f32 %v280, 0.25
    %v599 = vmul.f32 %v287, 0.25
    %v600 = vmul.f32 %v294, 0.25
    %v601 = vmul.f32 %v301, 0.25
    %v602 = vmul.f32 %v308, 0.25
    %v603 = vmul.f32 %v315, 0.25
    %v604 = vmul.f32 %v322, 0.25
    %v605 = vmul.f32 %v329, 0.25
    %v606 = vmul.f32 %v336, 0.25
    %v607 = vmul.f32 %v343, 0.25
    %v608 = vmul.f32 %v350, 0.25
    %v609 = vmul.f32 %v357, 0.25
    %v610 = vmul.f32 %v364, 0.25
    %v611 = vmul.f32 %v371, 0.25
    %v612 = vmul.f32 %v378, 0.25
    %v613 = vmul.f32 %v385, 0.25
    %v614 = vmul.f32 %v392, 0.25
    %v615 = vmul.f32 %v399, 0.25
    %v616 = vmul.f32 %v406, 0.25
    %v617 = vmul.f32 %v413, 0.25
    %v618 = vmul.f32 %v420, 0.25
    %v619 = vmul.f32 %v427, 0.25
    %v620 = vmul.f32 %v434, 0.25
    %v621 = vmul.f32 %v441, 0.25
    %v622 = vmul.f32 %v448, 0.25
    %v623 = vmul.f32 %v455, 0.25
    %v624 = vmul.f32 %v462, 0.25
    %v625 = vmul.f32 %v469, 0.25
    %v626 = vmul.f32 %v476, 0.25
    %v627 = vmul.f32 %v483, 0.25
    %v628 = vmul.f32 %v490, 0.25
    %v629 = vmul.f32 %v497, 0.25
    %v630 = vmul.f32 %v504, 0.25
    %v631 = vmul.f32 %v511, 0.25
    %v632 = vmul.f32 %v518, 0.25
    %v633 = vmul.f32 %v525, 0.25
    %v634 = vmul.f32 %v532, 0.25
    %v635 = vmul.f32 %v539, 0.25
    %v636 = vmul.f32 %v546, 0.25
    %v637 = vmul.f32 %v553, 0.25
    %v638 = vmul.f32 %v560, 0.25
    %v639 = vmul.f32 %v567, 0.25
    %v640 = vmul.f32 %v574, 0.25
    %v641 = vmul.f32 %v581, 0.25
    %v642 = vmul.f32 %v588, 0.25
    %v643 = vmul.f32 %v595, 0.25
    %v644 = vpack.c.bf16 %v596, %v596
    %v645 = vpack.c.bf16 %v597, %v597
    %v646 = vpack.c.bf16 %v598, %v598
    %v647 = vpack.c.bf16 %v599, %v599
    %v648 = vpack.c.bf16 %v600, %v600
    %v649 = vpack.c.bf16 %v601, %v601
    %v650 = vpack.c.bf16 %v602, %v602
    %v651 = vpack.c.bf16 %v603, %v603
    %v652 = vpack.c.bf16 %v604, %v604
    %v653 = vpack.c.bf16 %v605, %v605
    %v654 = vpack.c.bf16 %v606, %v606
    %v655 = vpack.c.bf16 %v607, %v607
    %v656 = vpack.c.bf16 %v608, %v608
    %v657 = vpack.c.bf16 %v609, %v609
    %v658 = vpack.c.bf16 %v610, %v610
    %v659 = vpack.c.bf16 %v611, %v611
    %v660 = vpack.c.bf16 %v612, %v612
    %v661 = vpack.c.bf16 %v613, %v613
    %v662 = vpack.c.bf16 %v614, %v614
    %v663 = vpack.c.bf16 %v615, %v615
    %v664 = vpack.c.bf16 %v616, %v616
    %v665 = vpack.c.bf16 %v617, %v617
    %v666 = vpack.c.bf16 %v618, %v618
    %v667 = vpack.c.bf16 %v619, %v619
    %v668 = vpack.c.bf16 %v620, %v620
    %v669 = vpack.c.bf16 %v621, %v621
    %v670 = vpack.c.bf16 %v622, %v622
    %v671 = vpack.c.bf16 %v623, %v623
    %v672 = vpack.c.bf16 %v624, %v624
    %v673 = vpack.c.bf16 %v625, %v625
    %v674 = vpack.c.bf16 %v626, %v626
    %v675 = vpack.c.bf16 %v627, %v627
    %v676 = vpack.c.bf16 %v628, %v628
    %v677 = vpack.c.bf16 %v629, %v629
    %v678 = vpack.c.bf16 %v630, %v630
    %v679 = vpack.c.bf16 %v631, %v631
    %v680 = vpack.c.bf16 %v632, %v632
    %v681 = vpack.c.bf16 %v633, %v633
    %v682 = vpack.c.bf16 %v634, %v634
    %v683 = vpack.c.bf16 %v635, %v635
    %v684 = vpack.c.bf16 %v636, %v636
    %v685 = vpack.c.bf16 %v637, %v637
    %v686 = vpack.c.bf16 %v638, %v638
    %v687 = vpack.c.bf16 %v639, %v639
    %v688 = vpack.c.bf16 %v640, %v640
    %v689 = vpack.c.bf16 %v641, %v641
    %v690 = vpack.c.bf16 %v642, %v642
    %v691 = vpack.c.bf16 %v643, %v643
    %v692 = vld [vmem:[#allocation5] sm:$0xff]
    %v693 = vld [vmem:[#allocation5 + $0x8] sm:$0xff]
    %v694 = vld [vmem:[#allocation5 + $0x10] sm:$0xff]
    %v695 = vld [vmem:[#allocation5 + $0x18] sm:$0xff]
    %v696 = vld [vmem:[#allocation5 + $0x20] sm:$0xff]
    %v697 = vld [vmem:[#allocation5 + $0x28] sm:$0xff]
    %v698 = vld [vmem:[#allocation5 + $0x30] sm:$0xff]
    %v699 = vld [vmem:[#allocation5 + $0x38] sm:$0xff]
    %v700 = vld [vmem:[#allocation5 + $0x40] sm:$0xff]
    %v701 = vld [vmem:[#allocation5 + $0x48] sm:$0xff]
    %v702 = vld [vmem:[#allocation5 + $0x50] sm:$0xff]
    %v703 = vld [vmem:[#allocation5 + $0x58] sm:$0xff]
    %v704 = vld [vmem:[#allocation5 + $0x60] sm:$0xff]
    %v705 = vld [vmem:[#allocation5 + $0x68] sm:$0xff]
    %v706 = vld [vmem:[#allocation5 + $0x70] sm:$0xff]
    %v707 = vld [vmem:[#allocation5 + $0x78] sm:$0xff]
    %v708 = vld [vmem:[#allocation5 + $0x80] sm:$0xff]
    %v709 = vld [vmem:[#allocation5 + $0x88] sm:$0xff]
    %v710 = vld [vmem:[#allocation5 + $0x90] sm:$0xff]
    %v711 = vld [vmem:[#allocation5 + $0x98] sm:$0xff]
    %v712 = vld [vmem:[#allocation5 + $0xa0] sm:$0xff]
    %v713 = vld [vmem:[#allocation5 + $0xa8] sm:$0xff]
    %v714 = vld [vmem:[#allocation5 + $0xb0] sm:$0xff]
    %v715 = vld [vmem:[#allocation5 + $0xb8] sm:$0xff]
    %v716 = vld [vmem:[#allocation5 + $0xc0] sm:$0xff]
    %v717 = vld [vmem:[#allocation5 + $0xc8] sm:$0xff]
    %v718 = vld [vmem:[#allocation5 + $0xd0] sm:$0xff]
    %v719 = vld [vmem:[#allocation5 + $0xd8] sm:$0xff]
    %v720 = vld [vmem:[#allocation5 + $0xe0] sm:$0xff]
    %v721 = vld [vmem:[#allocation5 + $0xe8] sm:$0xff]
    %v722 = vld [vmem:[#allocation5 + $0xf0] sm:$0xff]
    %v723 = vld [vmem:[#allocation5 + $0xf8] sm:$0xff]
    %v724 = vld [vmem:[#allocation5 + $0x100] sm:$0xff]
    %v725 = vld [vmem:[#allocation5 + $0x108] sm:$0xff]
    %v726 = vld [vmem:[#allocation5 + $0x110] sm:$0xff]
    %v727 = vld [vmem:[#allocation5 + $0x118] sm:$0xff]
    %v728 = vld [vmem:[#allocation5 + $0x120] sm:$0xff]
    %v729 = vld [vmem:[#allocation5 + $0x128] sm:$0xff]
    %v730 = vld [vmem:[#allocation5 + $0x130] sm:$0xff]
    %v731 = vld [vmem:[#allocation5 + $0x138] sm:$0xff]
    %v732 = vld [vmem:[#allocation5 + $0x140] sm:$0xff]
    %v733 = vld [vmem:[#allocation5 + $0x148] sm:$0xff]
    %v734 = vld [vmem:[#allocation5 + $0x150] sm:$0xff]
    %v735 = vld [vmem:[#allocation5 + $0x158] sm:$0xff]
    %v736 = vld [vmem:[#allocation5 + $0x160] sm:$0xff]
    %v737 = vld [vmem:[#allocation5 + $0x168] sm:$0xff]
    %v738 = vld [vmem:[#allocation5 + $0x170] sm:$0xff]
    %v739 = vld [vmem:[#allocation5 + $0x178] sm:$0xff]
    %v740 = vld [vmem:[#allocation5 + $0x180] sm:$0xff]
    %v741 = vld [vmem:[#allocation5 + $0x188] sm:$0xff]
    %v742 = vld [vmem:[#allocation5 + $0x190] sm:$0xff]
    %v743 = vld [vmem:[#allocation5 + $0x198] sm:$0xff]
    %v744 = vld [vmem:[#allocation5 + $0x1a0] sm:$0xff]
    %v745 = vld [vmem:[#allocation5 + $0x1a8] sm:$0xff]
    %v746 = vld [vmem:[#allocation5 + $0x1b0] sm:$0xff]
    %v747 = vld [vmem:[#allocation5 + $0x1b8] sm:$0xff]
    %v748 = vld [vmem:[#allocation5 + $0x1c0] sm:$0xff]
    %v749 = vld [vmem:[#allocation5 + $0x1c8] sm:$0xff]
    %v750 = vld [vmem:[#allocation5 + $0x1d0] sm:$0xff]
    %v751 = vld [vmem:[#allocation5 + $0x1d8] sm:$0xff]
    %v752 = vld [vmem:[#allocation5 + $0x1e0] sm:$0xff]
    %v753 = vld [vmem:[#allocation5 + $0x1e8] sm:$0xff]
    %v754 = vld [vmem:[#allocation5 + $0x1f0] sm:$0xff]
    %v755 = vld [vmem:[#allocation5 + $0x1f8] sm:$0xff]
    %v756 = vld [vmem:[#allocation5 + $0x200] sm:$0xff]
    %v757 = vld [vmem:[#allocation5 + $0x208] sm:$0xff]
    %v758 = vld [vmem:[#allocation5 + $0x210] sm:$0xff]
    %v759 = vld [vmem:[#allocation5 + $0x218] sm:$0xff]
    %v760 = vld [vmem:[#allocation5 + $0x220] sm:$0xff]
    %v761 = vld [vmem:[#allocation5 + $0x228] sm:$0xff]
    %v762 = vld [vmem:[#allocation5 + $0x230] sm:$0xff]
    %v763 = vld [vmem:[#allocation5 + $0x238] sm:$0xff]
    %v764 = vld [vmem:[#allocation5 + $0x240] sm:$0xff]
    %v765 = vld [vmem:[#allocation5 + $0x248] sm:$0xff]
    %v766 = vld [vmem:[#allocation5 + $0x250] sm:$0xff]
    %v767 = vld [vmem:[#allocation5 + $0x258] sm:$0xff]
    %v768 = vld [vmem:[#allocation5 + $0x260] sm:$0xff]
    %v769 = vld [vmem:[#allocation5 + $0x268] sm:$0xff]
    %v770 = vld [vmem:[#allocation5 + $0x270] sm:$0xff]
    %v771 = vld [vmem:[#allocation5 + $0x278] sm:$0xff]
    %v772 = vld [vmem:[#allocation5 + $0x280] sm:$0xff]
    %v773 = vld [vmem:[#allocation5 + $0x288] sm:$0xff]
    %v774 = vld [vmem:[#allocation5 + $0x290] sm:$0xff]
    %v775 = vld [vmem:[#allocation5 + $0x298] sm:$0xff]
    %v776 = vld [vmem:[#allocation5 + $0x2a0] sm:$0xff]
    %v777 = vld [vmem:[#allocation5 + $0x2a8] sm:$0xff]
    %v778 = vld [vmem:[#allocation5 + $0x2b0] sm:$0xff]
    %v779 = vld [vmem:[#allocation5 + $0x2b8] sm:$0xff]
    %v780 = vld [vmem:[#allocation5 + $0x2c0] sm:$0xff]
    %v781 = vld [vmem:[#allocation5 + $0x2c8] sm:$0xff]
    %v782 = vld [vmem:[#allocation5 + $0x2d0] sm:$0xff]
    %v783 = vld [vmem:[#allocation5 + $0x2d8] sm:$0xff]
    %v784 = vld [vmem:[#allocation5 + $0x2e0] sm:$0xff]
    %v785 = vld [vmem:[#allocation5 + $0x2e8] sm:$0xff]
    %v786 = vld [vmem:[#allocation5 + $0x2f0] sm:$0xff]
    %v787 = vld [vmem:[#allocation5 + $0x2f8] sm:$0xff]
    %v788 = vld [vmem:[#allocation5 + $0x300] sm:$0xff]
    %v789 = vld [vmem:[#allocation5 + $0x308] sm:$0xff]
    %v790 = vld [vmem:[#allocation5 + $0x310] sm:$0xff]
    %v791 = vld [vmem:[#allocation5 + $0x318] sm:$0xff]
    %v792 = vld [vmem:[#allocation5 + $0x320] sm:$0xff]
    %v793 = vld [vmem:[#allocation5 + $0x328] sm:$0xff]
    %v794 = vld [vmem:[#allocation5 + $0x330] sm:$0xff]
    %v795 = vld [vmem:[#allocation5 + $0x338] sm:$0xff]
    %v796 = vld [vmem:[#allocation5 + $0x340] sm:$0xff]
    %v797 = vld [vmem:[#allocation5 + $0x348] sm:$0xff]
    %v798 = vld [vmem:[#allocation5 + $0x350] sm:$0xff]
    %v799 = vld [vmem:[#allocation5 + $0x358] sm:$0xff]
    %v800 = vld [vmem:[#allocation5 + $0x360] sm:$0xff]
    %v801 = vld [vmem:[#allocation5 + $0x368] sm:$0xff]
    %v802 = vld [vmem:[#allocation5 + $0x370] sm:$0xff]
    %v803 = vld [vmem:[#allocation5 + $0x378] sm:$0xff]
    %v804 = vld [vmem:[#allocation5 + $0x380] sm:$0xff]
    %v805 = vld [vmem:[#allocation5 + $0x388] sm:$0xff]
    %v806 = vld [vmem:[#allocation5 + $0x390] sm:$0xff]
    %v807 = vld [vmem:[#allocation5 + $0x398] sm:$0xff]
    %v808 = vld [vmem:[#allocation5 + $0x3a0] sm:$0xff]
    %v809 = vld [vmem:[#allocation5 + $0x3a8] sm:$0xff]
    %v810 = vld [vmem:[#allocation5 + $0x3b0] sm:$0xff]
    %v811 = vld [vmem:[#allocation5 + $0x3b8] sm:$0xff]
    %v812 = vld [vmem:[#allocation5 + $0x3c0] sm:$0xff]
    %v813 = vld [vmem:[#allocation5 + $0x3c8] sm:$0xff]
    %v814 = vld [vmem:[#allocation5 + $0x3d0] sm:$0xff]
    %v815 = vld [vmem:[#allocation5 + $0x3d8] sm:$0xff]
    %v816 = vld [vmem:[#allocation5 + $0x3e0] sm:$0xff]
    %v817 = vld [vmem:[#allocation5 + $0x3e8] sm:$0xff]
    %v818 = vld [vmem:[#allocation5 + $0x3f0] sm:$0xff]
    %v819 = vld [vmem:[#allocation5 + $0x3f8] sm:$0xff]
    %v820 = vld [vmem:[#allocation5 + $0x400] sm:$0xff]
    %v821 = vld [vmem:[#allocation5 + $0x408] sm:$0xff]
    %v822 = vld [vmem:[#allocation5 + $0x410] sm:$0xff]
    %v823 = vld [vmem:[#allocation5 + $0x418] sm:$0xff]
    %v824 = vld [vmem:[#allocation5 + $0x420] sm:$0xff]
    %v825 = vld [vmem:[#allocation5 + $0x428] sm:$0xff]
    %v826 = vld [vmem:[#allocation5 + $0x430] sm:$0xff]
    %v827 = vld [vmem:[#allocation5 + $0x438] sm:$0xff]
    %v828 = vld [vmem:[#allocation5 + $0x440] sm:$0xff]
    %v829 = vld [vmem:[#allocation5 + $0x448] sm:$0xff]
    %v830 = vld [vmem:[#allocation5 + $0x450] sm:$0xff]
    %v831 = vld [vmem:[#allocation5 + $0x458] sm:$0xff]
    %v832 = vld [vmem:[#allocation5 + $0x460] sm:$0xff]
    %v833 = vld [vmem:[#allocation5 + $0x468] sm:$0xff]
    %v834 = vld [vmem:[#allocation5 + $0x470] sm:$0xff]
    %v835 = vld [vmem:[#allocation5 + $0x478] sm:$0xff]
    %v836 = vld [vmem:[#allocation5 + $0x480] sm:$0xff]
    %v837 = vld [vmem:[#allocation5 + $0x488] sm:$0xff]
    %v838 = vld [vmem:[#allocation5 + $0x490] sm:$0xff]
    %v839 = vld [vmem:[#allocation5 + $0x498] sm:$0xff]
    %v840 = vld [vmem:[#allocation5 + $0x4a0] sm:$0xff]
    %v841 = vld [vmem:[#allocation5 + $0x4a8] sm:$0xff]
    %v842 = vld [vmem:[#allocation5 + $0x4b0] sm:$0xff]
    %v843 = vld [vmem:[#allocation5 + $0x4b8] sm:$0xff]
    %v844 = vld [vmem:[#allocation5 + $0x4c0] sm:$0xff]
    %v845 = vld [vmem:[#allocation5 + $0x4c8] sm:$0xff]
    %v846 = vld [vmem:[#allocation5 + $0x4d0] sm:$0xff]
    %v847 = vld [vmem:[#allocation5 + $0x4d8] sm:$0xff]
    %v848 = vld [vmem:[#allocation5 + $0x4e0] sm:$0xff]
    %v849 = vld [vmem:[#allocation5 + $0x4e8] sm:$0xff]
    %v850 = vld [vmem:[#allocation5 + $0x4f0] sm:$0xff]
    %v851 = vld [vmem:[#allocation5 + $0x4f8] sm:$0xff]
    %v852 = vld [vmem:[#allocation5 + $0x500] sm:$0xff]
    %v853 = vld [vmem:[#allocation5 + $0x508] sm:$0xff]
    %v854 = vld [vmem:[#allocation5 + $0x510] sm:$0xff]
    %v855 = vld [vmem:[#allocation5 + $0x518] sm:$0xff]
    %v856 = vld [vmem:[#allocation5 + $0x520] sm:$0xff]
    %v857 = vld [vmem:[#allocation5 + $0x528] sm:$0xff]
    %v858 = vld [vmem:[#allocation5 + $0x530] sm:$0xff]
    %v859 = vld [vmem:[#allocation5 + $0x538] sm:$0xff]
    %v860 = vld [vmem:[#allocation5 + $0x540] sm:$0xff]
    %v861 = vld [vmem:[#allocation5 + $0x548] sm:$0xff]
    %v862 = vld [vmem:[#allocation5 + $0x550] sm:$0xff]
    %v863 = vld [vmem:[#allocation5 + $0x558] sm:$0xff]
    %v864 = vld [vmem:[#allocation5 + $0x560] sm:$0xff]
    %v865 = vld [vmem:[#allocation5 + $0x568] sm:$0xff]
    %v866 = vld [vmem:[#allocation5 + $0x570] sm:$0xff]
    %v867 = vld [vmem:[#allocation5 + $0x578] sm:$0xff]
    %v868 = vld [vmem:[#allocation5 + $0x580] sm:$0xff]
    %v869 = vld [vmem:[#allocation5 + $0x588] sm:$0xff]
    %v870 = vld [vmem:[#allocation5 + $0x590] sm:$0xff]
    %v871 = vld [vmem:[#allocation5 + $0x598] sm:$0xff]
    %v872 = vld [vmem:[#allocation5 + $0x5a0] sm:$0xff]
    %v873 = vld [vmem:[#allocation5 + $0x5a8] sm:$0xff]
    %v874 = vld [vmem:[#allocation5 + $0x5b0] sm:$0xff]
    %v875 = vld [vmem:[#allocation5 + $0x5b8] sm:$0xff]
    %v876 = vld [vmem:[#allocation5 + $0x5c0] sm:$0xff]
    %v877 = vld [vmem:[#allocation5 + $0x5c8] sm:$0xff]
    %v878 = vld [vmem:[#allocation5 + $0x5d0] sm:$0xff]
    %v879 = vld [vmem:[#allocation5 + $0x5d8] sm:$0xff]
    %v880 = vld [vmem:[#allocation5 + $0x5e0] sm:$0xff]
    %v881 = vld [vmem:[#allocation5 + $0x5e8] sm:$0xff]
    %v882 = vld [vmem:[#allocation5 + $0x5f0] sm:$0xff]
    %v883 = vld [vmem:[#allocation5 + $0x5f8] sm:$0xff]
    %v884 = vld [vmem:[#allocation5 + $0x600] sm:$0xff]
    %v885 = vld [vmem:[#allocation5 + $0x608] sm:$0xff]
    %v886 = vld [vmem:[#allocation5 + $0x610] sm:$0xff]
    %v887 = vld [vmem:[#allocation5 + $0x618] sm:$0xff]
    %v888 = vld [vmem:[#allocation5 + $0x620] sm:$0xff]
    %v889 = vld [vmem:[#allocation5 + $0x628] sm:$0xff]
    %v890 = vld [vmem:[#allocation5 + $0x630] sm:$0xff]
    %v891 = vld [vmem:[#allocation5 + $0x638] sm:$0xff]
    %v892 = vld [vmem:[#allocation5 + $0x640] sm:$0xff]
    %v893 = vld [vmem:[#allocation5 + $0x648] sm:$0xff]
    %v894 = vld [vmem:[#allocation5 + $0x650] sm:$0xff]
    %v895 = vld [vmem:[#allocation5 + $0x658] sm:$0xff]
    %v896 = vld [vmem:[#allocation5 + $0x660] sm:$0xff]
    %v897 = vld [vmem:[#allocation5 + $0x668] sm:$0xff]
    %v898 = vld [vmem:[#allocation5 + $0x670] sm:$0xff]
    %v899 = vld [vmem:[#allocation5 + $0x678] sm:$0xff]
    %v900 = vld [vmem:[#allocation5 + $0x680] sm:$0xff]
    %v901 = vld [vmem:[#allocation5 + $0x688] sm:$0xff]
    %v902 = vld [vmem:[#allocation5 + $0x690] sm:$0xff]
    %v903 = vld [vmem:[#allocation5 + $0x698] sm:$0xff]
    %v904 = vld [vmem:[#allocation5 + $0x6a0] sm:$0xff]
    %v905 = vld [vmem:[#allocation5 + $0x6a8] sm:$0xff]
    %v906 = vld [vmem:[#allocation5 + $0x6b0] sm:$0xff]
    %v907 = vld [vmem:[#allocation5 + $0x6b8] sm:$0xff]
    %v908 = vld [vmem:[#allocation5 + $0x6c0] sm:$0xff]
    %v909 = vld [vmem:[#allocation5 + $0x6c8] sm:$0xff]
    %v910 = vld [vmem:[#allocation5 + $0x6d0] sm:$0xff]
    %v911 = vld [vmem:[#allocation5 + $0x6d8] sm:$0xff]
    %v912 = vld [vmem:[#allocation5 + $0x6e0] sm:$0xff]
    %v913 = vld [vmem:[#allocation5 + $0x6e8] sm:$0xff]
    %v914 = vld [vmem:[#allocation5 + $0x6f0] sm:$0xff]
    %v915 = vld [vmem:[#allocation5 + $0x6f8] sm:$0xff]
    %v916 = vld [vmem:[#allocation5 + $0x700] sm:$0xff]
    %v917 = vld [vmem:[#allocation5 + $0x708] sm:$0xff]
    %v918 = vld [vmem:[#allocation5 + $0x710] sm:$0xff]
    %v919 = vld [vmem:[#allocation5 + $0x718] sm:$0xff]
    %v920 = vld [vmem:[#allocation5 + $0x720] sm:$0xff]
    %v921 = vld [vmem:[#allocation5 + $0x728] sm:$0xff]
    %v922 = vld [vmem:[#allocation5 + $0x730] sm:$0xff]
    %v923 = vld [vmem:[#allocation5 + $0x738] sm:$0xff]
    %v924 = vld [vmem:[#allocation5 + $0x740] sm:$0xff]
    %v925 = vld [vmem:[#allocation5 + $0x748] sm:$0xff]
    %v926 = vld [vmem:[#allocation5 + $0x750] sm:$0xff]
    %v927 = vld [vmem:[#allocation5 + $0x758] sm:$0xff]
    %v928 = vld [vmem:[#allocation5 + $0x760] sm:$0xff]
    %v929 = vld [vmem:[#allocation5 + $0x768] sm:$0xff]
    %v930 = vld [vmem:[#allocation5 + $0x770] sm:$0xff]
    %v931 = vld [vmem:[#allocation5 + $0x778] sm:$0xff]
    %v932 = vld [vmem:[#allocation5 + $0x780] sm:$0xff]
    %v933 = vld [vmem:[#allocation5 + $0x788] sm:$0xff]
    %v934 = vld [vmem:[#allocation5 + $0x790] sm:$0xff]
    %v935 = vld [vmem:[#allocation5 + $0x798] sm:$0xff]
    %v936 = vld [vmem:[#allocation5 + $0x7a0] sm:$0xff]
    %v937 = vld [vmem:[#allocation5 + $0x7a8] sm:$0xff]
    %v938 = vld [vmem:[#allocation5 + $0x7b0] sm:$0xff]
    %v939 = vld [vmem:[#allocation5 + $0x7b8] sm:$0xff]
    %v940 = vld [vmem:[#allocation5 + $0x7c0] sm:$0xff]
    %v941 = vld [vmem:[#allocation5 + $0x7c8] sm:$0xff]
    %v942 = vld [vmem:[#allocation5 + $0x7d0] sm:$0xff]
    %v943 = vld [vmem:[#allocation5 + $0x7d8] sm:$0xff]
    %v944 = vld [vmem:[#allocation5 + $0x7e0] sm:$0xff]
    %v945 = vld [vmem:[#allocation5 + $0x7e8] sm:$0xff]
    %v946 = vld [vmem:[#allocation5 + $0x7f0] sm:$0xff]
    %v947 = vld [vmem:[#allocation5 + $0x7f8] sm:$0xff]
    %v948 = vld [vmem:[#allocation5 + $0x800] sm:$0xff]
    %v949 = vld [vmem:[#allocation5 + $0x808] sm:$0xff]
    %v950 = vld [vmem:[#allocation5 + $0x810] sm:$0xff]
    %v951 = vld [vmem:[#allocation5 + $0x818] sm:$0xff]
    %v952 = vld [vmem:[#allocation5 + $0x820] sm:$0xff]
    %v953 = vld [vmem:[#allocation5 + $0x828] sm:$0xff]
    %v954 = vld [vmem:[#allocation5 + $0x830] sm:$0xff]
    %v955 = vld [vmem:[#allocation5 + $0x838] sm:$0xff]
    %v956 = vld [vmem:[#allocation5 + $0x840] sm:$0xff]
    %v957 = vld [vmem:[#allocation5 + $0x848] sm:$0xff]
    %v958 = vld [vmem:[#allocation5 + $0x850] sm:$0xff]
    %v959 = vld [vmem:[#allocation5 + $0x858] sm:$0xff]
    %v960 = vld [vmem:[#allocation5 + $0x860] sm:$0xff]
    %v961 = vld [vmem:[#allocation5 + $0x868] sm:$0xff]
    %v962 = vld [vmem:[#allocation5 + $0x870] sm:$0xff]
    %v963 = vld [vmem:[#allocation5 + $0x878] sm:$0xff]
    %v964 = vld [vmem:[#allocation5 + $0x880] sm:$0xff]
    %v965 = vld [vmem:[#allocation5 + $0x888] sm:$0xff]
    %v966 = vld [vmem:[#allocation5 + $0x890] sm:$0xff]
    %v967 = vld [vmem:[#allocation5 + $0x898] sm:$0xff]
    %v968 = vld [vmem:[#allocation5 + $0x8a0] sm:$0xff]
    %v969 = vld [vmem:[#allocation5 + $0x8a8] sm:$0xff]
    %v970 = vld [vmem:[#allocation5 + $0x8b0] sm:$0xff]
    %v971 = vld [vmem:[#allocation5 + $0x8b8] sm:$0xff]
    %v972 = vld [vmem:[#allocation5 + $0x8c0] sm:$0xff]
    %v973 = vld [vmem:[#allocation5 + $0x8c8] sm:$0xff]
    %v974 = vld [vmem:[#allocation5 + $0x8d0] sm:$0xff]
    %v975 = vld [vmem:[#allocation5 + $0x8d8] sm:$0xff]
    %v976 = vld [vmem:[#allocation5 + $0x8e0] sm:$0xff]
    %v977 = vld [vmem:[#allocation5 + $0x8e8] sm:$0xff]
    %v978 = vld [vmem:[#allocation5 + $0x8f0] sm:$0xff]
    %v979 = vld [vmem:[#allocation5 + $0x8f8] sm:$0xff]
    %v980 = vld [vmem:[#allocation7] sm:$0x3f]
    %v982 = vlaneseq
    %v983 = vshrl.u32 %v982, 7
    %v984 = vsub.s32 0, %v983
    %v985 = vrot.slane %v980, %v984
    %v986 = vlaneseq
    %v987 = vshrl.u32 %v986, 7
    %v988 = vsub.s32 1, %v987
    %v989 = vrot.slane %v980, %v988
    %v990 = vlaneseq
    %v991 = vshrl.u32 %v990, 7
    %v992 = vsub.s32 2, %v991
    %v993 = vrot.slane %v980, %v992
    %v994 = vlaneseq
    %v995 = vshrl.u32 %v994, 7
    %v996 = vsub.s32 3, %v995
    %v997 = vrot.slane %v980, %v996
    %v998 = vlaneseq
    %v999 = vshrl.u32 %v998, 7
    %v1000 = vsub.s32 4, %v999
    %v1001 = vrot.slane %v980, %v1000
    %v1002 = vlaneseq
    %v1003 = vshrl.u32 %v1002, 7
    %v1004 = vsub.s32 5, %v1003
    %v1005 = vrot.slane %v980, %v1004
    %v1060 = vunpack.c.l.b16 %v644
    %v1061 = vunpack.c.l.b16 %v645
    %v1062 = vunpack.c.l.b16 %v646
    %v1063 = vunpack.c.l.b16 %v647
    %v1064 = vunpack.c.l.b16 %v648
    %v1065 = vunpack.c.l.b16 %v649
    %v1066 = vunpack.c.l.b16 %v650
    %v1067 = vunpack.c.l.b16 %v651
    %v1068 = vunpack.c.l.b16 %v652
    %v1069 = vunpack.c.l.b16 %v653
    %v1070 = vunpack.c.l.b16 %v654
    %v1071 = vunpack.c.l.b16 %v655
    %v1072 = vunpack.c.l.b16 %v656
    %v1073 = vunpack.c.l.b16 %v657
    %v1074 = vunpack.c.l.b16 %v658
    %v1075 = vunpack.c.l.b16 %v659
    %v1076 = vunpack.c.l.b16 %v660
    %v1077 = vunpack.c.l.b16 %v661
    %v1078 = vunpack.c.l.b16 %v662
    %v1079 = vunpack.c.l.b16 %v663
    %v1080 = vunpack.c.l.b16 %v664
    %v1081 = vunpack.c.l.b16 %v665
    %v1082 = vunpack.c.l.b16 %v666
    %v1083 = vunpack.c.l.b16 %v667
    %v1084 = vunpack.c.l.b16 %v668
    %v1085 = vunpack.c.l.b16 %v669
    %v1086 = vunpack.c.l.b16 %v670
    %v1087 = vunpack.c.l.b16 %v671
    %v1088 = vunpack.c.l.b16 %v672
    %v1089 = vunpack.c.l.b16 %v673
    %v1090 = vunpack.c.l.b16 %v674
    %v1091 = vunpack.c.l.b16 %v675
    %v1092 = vunpack.c.l.b16 %v676
    %v1093 = vunpack.c.l.b16 %v677
    %v1094 = vunpack.c.l.b16 %v678
    %v1095 = vunpack.c.l.b16 %v679
    %v1096 = vunpack.c.l.b16 %v680
    %v1097 = vunpack.c.l.b16 %v681
    %v1098 = vunpack.c.l.b16 %v682
    %v1099 = vunpack.c.l.b16 %v683
    %v1100 = vunpack.c.l.b16 %v684
    %v1101 = vunpack.c.l.b16 %v685
    %v1102 = vunpack.c.l.b16 %v686
    %v1103 = vunpack.c.l.b16 %v687
    %v1104 = vunpack.c.l.b16 %v688
    %v1105 = vunpack.c.l.b16 %v689
    %v1106 = vunpack.c.l.b16 %v690
    %v1107 = vunpack.c.l.b16 %v691
    %vm1108 = vcmask 1041409
    %v1109 = vsel %vm1108, %v1066, %v1060
    %vm1110 = vcmask 1042434
    %v1111 = vsel %vm1110, %v1072, %v1109
    %vm1112 = vcmask 1043459
    %v1113 = vsel %vm1112, %v1078, %v1111
    %vm1114 = vcmask 1044484
    %v1115 = vsel %vm1114, %v1084, %v1113
    %vm1116 = vcmask 1045509
    %v1117 = vsel %vm1116, %v1090, %v1115
    %vm1118 = vcmask 1046534
    %v1119 = vsel %vm1118, %v1096, %v1117
    %vm1120 = vcmask 1047559
    %v1121 = vsel %vm1120, %v1102, %v1119
    %v1122 = vsel %vm1108, %v1067, %v1061
    %v1123 = vsel %vm1110, %v1073, %v1122
    %v1124 = vsel %vm1112, %v1079, %v1123
    %v1125 = vsel %vm1114, %v1085, %v1124
    %v1126 = vsel %vm1116, %v1091, %v1125
    %v1127 = vsel %vm1118, %v1097, %v1126
    %v1128 = vsel %vm1120, %v1103, %v1127
    %v1129 = vsel %vm1108, %v1068, %v1062
    %v1130 = vsel %vm1110, %v1074, %v1129
    %v1131 = vsel %vm1112, %v1080, %v1130
    %v1132 = vsel %vm1114, %v1086, %v1131
    %v1133 = vsel %vm1116, %v1092, %v1132
    %v1134 = vsel %vm1118, %v1098, %v1133
    %v1135 = vsel %vm1120, %v1104, %v1134
    %v1136 = vsel %vm1108, %v1069, %v1063
    %v1137 = vsel %vm1110, %v1075, %v1136
    %v1138 = vsel %vm1112, %v1081, %v1137
    %v1139 = vsel %vm1114, %v1087, %v1138
    %v1140 = vsel %vm1116, %v1093, %v1139
    %v1141 = vsel %vm1118, %v1099, %v1140
    %v1142 = vsel %vm1120, %v1105, %v1141
    %v1143 = vsel %vm1108, %v1070, %v1064
    %v1144 = vsel %vm1110, %v1076, %v1143
    %v1145 = vsel %vm1112, %v1082, %v1144
    %v1146 = vsel %vm1114, %v1088, %v1145
    %v1147 = vsel %vm1116, %v1094, %v1146
    %v1148 = vsel %vm1118, %v1100, %v1147
    %v1149 = vsel %vm1120, %v1106, %v1148
    %v1150 = vsel %vm1108, %v1071, %v1065
    %v1151 = vsel %vm1110, %v1077, %v1150
    %v1152 = vsel %vm1112, %v1083, %v1151
    %v1153 = vsel %vm1114, %v1089, %v1152
    %v1154 = vsel %vm1116, %v1095, %v1153
    %v1155 = vsel %vm1118, %v1101, %v1154
    %v1156 = vsel %vm1120, %v1107, %v1155
    %v1157 = vpack.c.b16 %v1121, %v1121
    %v1158 = vpack.c.b16 %v1128, %v1128
    %v1159 = vpack.c.b16 %v1135, %v1135
    %v1160 = vpack.c.b16 %v1142, %v1142
    %v1161 = vpack.c.b16 %v1149, %v1149
    %v1162 = vpack.c.b16 %v1156, %v1156
    %v1457 = vunpack.c.l.b16 %v692
    %v1458 = vunpack.c.h.b16 %v692
    %v1459 = vunpack.c.l.b16 %v693
    %v1460 = vunpack.c.h.b16 %v693
    %v1461 = vunpack.c.l.b16 %v694
    %v1462 = vunpack.c.h.b16 %v694
    %v1463 = vunpack.c.l.b16 %v695
    %v1464 = vunpack.c.h.b16 %v695
    %v1465 = vunpack.c.l.b16 %v696
    %v1466 = vunpack.c.h.b16 %v696
    %v1467 = vunpack.c.l.b16 %v697
    %v1468 = vunpack.c.h.b16 %v697
    %v1469 = vunpack.c.l.b16 %v698
    %v1470 = vunpack.c.h.b16 %v698
    %v1471 = vunpack.c.l.b16 %v699
    %v1472 = vunpack.c.h.b16 %v699
    %v1473 = vunpack.c.l.b16 %v700
    %v1474 = vunpack.c.h.b16 %v700
    %v1475 = vunpack.c.l.b16 %v701
    %v1476 = vunpack.c.h.b16 %v701
    %v1477 = vunpack.c.l.b16 %v702
    %v1478 = vunpack.c.h.b16 %v702
    %v1479 = vunpack.c.l.b16 %v703
    %v1480 = vunpack.c.h.b16 %v703
    %v1481 = vunpack.c.l.b16 %v704
    %v1482 = vunpack.c.h.b16 %v704
    %v1483 = vunpack.c.l.b16 %v705
    %v1484 = vunpack.c.h.b16 %v705
    %v1485 = vunpack.c.l.b16 %v706
    %v1486 = vunpack.c.h.b16 %v706
    %v1487 = vunpack.c.l.b16 %v707
    %v1488 = vunpack.c.h.b16 %v707
    %v1489 = vunpack.c.l.b16 %v708
    %v1490 = vunpack.c.h.b16 %v708
    %v1491 = vunpack.c.l.b16 %v709
    %v1492 = vunpack.c.h.b16 %v709
    %v1493 = vunpack.c.l.b16 %v710
    %v1494 = vunpack.c.h.b16 %v710
    %v1495 = vunpack.c.l.b16 %v711
    %v1496 = vunpack.c.h.b16 %v711
    %v1497 = vunpack.c.l.b16 %v712
    %v1498 = vunpack.c.h.b16 %v712
    %v1499 = vunpack.c.l.b16 %v713
    %v1500 = vunpack.c.h.b16 %v713
    %v1501 = vunpack.c.l.b16 %v714
    %v1502 = vunpack.c.h.b16 %v714
    %v1503 = vunpack.c.l.b16 %v715
    %v1504 = vunpack.c.h.b16 %v715
    %v1505 = vunpack.c.l.b16 %v716
    %v1506 = vunpack.c.h.b16 %v716
    %v1507 = vunpack.c.l.b16 %v717
    %v1508 = vunpack.c.h.b16 %v717
    %v1509 = vunpack.c.l.b16 %v718
    %v1510 = vunpack.c.h.b16 %v718
    %v1511 = vunpack.c.l.b16 %v719
    %v1512 = vunpack.c.h.b16 %v719
    %v1513 = vunpack.c.l.b16 %v720
    %v1514 = vunpack.c.h.b16 %v720
    %v1515 = vunpack.c.l.b16 %v721
    %v1516 = vunpack.c.h.b16 %v721
    %v1517 = vunpack.c.l.b16 %v722
    %v1518 = vunpack.c.h.b16 %v722
    %v1519 = vunpack.c.l.b16 %v723
    %v1520 = vunpack.c.h.b16 %v723
    %v1521 = vunpack.c.l.b16 %v724
    %v1522 = vunpack.c.h.b16 %v724
    %v1523 = vunpack.c.l.b16 %v725
    %v1524 = vunpack.c.h.b16 %v725
    %v1525 = vunpack.c.l.b16 %v726
    %v1526 = vunpack.c.h.b16 %v726
    %v1527 = vunpack.c.l.b16 %v727
    %v1528 = vunpack.c.h.b16 %v727
    %v1529 = vunpack.c.l.b16 %v728
    %v1530 = vunpack.c.h.b16 %v728
    %v1531 = vunpack.c.l.b16 %v729
    %v1532 = vunpack.c.h.b16 %v729
    %v1533 = vunpack.c.l.b16 %v730
    %v1534 = vunpack.c.h.b16 %v730
    %v1535 = vunpack.c.l.b16 %v731
    %v1536 = vunpack.c.h.b16 %v731
    %v1537 = vunpack.c.l.b16 %v732
    %v1538 = vunpack.c.h.b16 %v732
    %v1539 = vunpack.c.l.b16 %v733
    %v1540 = vunpack.c.h.b16 %v733
    %v1541 = vunpack.c.l.b16 %v734
    %v1542 = vunpack.c.h.b16 %v734
    %v1543 = vunpack.c.l.b16 %v735
    %v1544 = vunpack.c.h.b16 %v735
    %v1545 = vunpack.c.l.b16 %v736
    %v1546 = vunpack.c.h.b16 %v736
    %v1547 = vunpack.c.l.b16 %v737
    %v1548 = vunpack.c.h.b16 %v737
    %v1549 = vunpack.c.l.b16 %v738
    %v1550 = vunpack.c.h.b16 %v738
    %v1551 = vunpack.c.l.b16 %v739
    %v1552 = vunpack.c.h.b16 %v739
    %v1553 = vunpack.c.l.b16 %v740
    %v1554 = vunpack.c.h.b16 %v740
    %v1555 = vunpack.c.l.b16 %v741
    %v1556 = vunpack.c.h.b16 %v741
    %v1557 = vunpack.c.l.b16 %v742
    %v1558 = vunpack.c.h.b16 %v742
    %v1559 = vunpack.c.l.b16 %v743
    %v1560 = vunpack.c.h.b16 %v743
    %v1561 = vunpack.c.l.b16 %v744
    %v1562 = vunpack.c.h.b16 %v744
    %v1563 = vunpack.c.l.b16 %v745
    %v1564 = vunpack.c.h.b16 %v745
    %v1565 = vunpack.c.l.b16 %v746
    %v1566 = vunpack.c.h.b16 %v746
    %v1567 = vunpack.c.l.b16 %v747
    %v1568 = vunpack.c.h.b16 %v747
    %v1569 = vunpack.c.l.b16 %v748
    %v1570 = vunpack.c.h.b16 %v748
    %v1571 = vunpack.c.l.b16 %v749
    %v1572 = vunpack.c.h.b16 %v749
    %v1573 = vunpack.c.l.b16 %v750
    %v1574 = vunpack.c.h.b16 %v750
    %v1575 = vunpack.c.l.b16 %v751
    %v1576 = vunpack.c.h.b16 %v751
    %v1577 = vunpack.c.l.b16 %v752
    %v1578 = vunpack.c.h.b16 %v752
    %v1579 = vunpack.c.l.b16 %v753
    %v1580 = vunpack.c.h.b16 %v753
    %v1581 = vunpack.c.l.b16 %v754
    %v1582 = vunpack.c.h.b16 %v754
    %v1583 = vunpack.c.l.b16 %v755
    %v1584 = vunpack.c.h.b16 %v755
    %v1585 = vunpack.c.l.b16 %v756
    %v1586 = vunpack.c.h.b16 %v756
    %v1587 = vunpack.c.l.b16 %v757
    %v1588 = vunpack.c.h.b16 %v757
    %v1589 = vunpack.c.l.b16 %v758
    %v1590 = vunpack.c.h.b16 %v758
    %v1591 = vunpack.c.l.b16 %v759
    %v1592 = vunpack.c.h.b16 %v759
    %v1593 = vunpack.c.l.b16 %v760
    %v1594 = vunpack.c.h.b16 %v760
    %v1595 = vunpack.c.l.b16 %v761
    %v1596 = vunpack.c.h.b16 %v761
    %v1597 = vunpack.c.l.b16 %v762
    %v1598 = vunpack.c.h.b16 %v762
    %v1599 = vunpack.c.l.b16 %v763
    %v1600 = vunpack.c.h.b16 %v763
    %v1601 = vunpack.c.l.b16 %v764
    %v1602 = vunpack.c.h.b16 %v764
    %v1603 = vunpack.c.l.b16 %v765
    %v1604 = vunpack.c.h.b16 %v765
    %v1605 = vunpack.c.l.b16 %v766
    %v1606 = vunpack.c.h.b16 %v766
    %v1607 = vunpack.c.l.b16 %v767
    %v1608 = vunpack.c.h.b16 %v767
    %v1609 = vunpack.c.l.b16 %v768
    %v1610 = vunpack.c.h.b16 %v768
    %v1611 = vunpack.c.l.b16 %v769
    %v1612 = vunpack.c.h.b16 %v769
    %v1613 = vunpack.c.l.b16 %v770
    %v1614 = vunpack.c.h.b16 %v770
    %v1615 = vunpack.c.l.b16 %v771
    %v1616 = vunpack.c.h.b16 %v771
    %v1617 = vunpack.c.l.b16 %v772
    %v1618 = vunpack.c.h.b16 %v772
    %v1619 = vunpack.c.l.b16 %v773
    %v1620 = vunpack.c.h.b16 %v773
    %v1621 = vunpack.c.l.b16 %v774
    %v1622 = vunpack.c.h.b16 %v774
    %v1623 = vunpack.c.l.b16 %v775
    %v1624 = vunpack.c.h.b16 %v775
    %v1625 = vunpack.c.l.b16 %v776
    %v1626 = vunpack.c.h.b16 %v776
    %v1627 = vunpack.c.l.b16 %v777
    %v1628 = vunpack.c.h.b16 %v777
    %v1629 = vunpack.c.l.b16 %v778
    %v1630 = vunpack.c.h.b16 %v778
    %v1631 = vunpack.c.l.b16 %v779
    %v1632 = vunpack.c.h.b16 %v779
    %v1633 = vunpack.c.l.b16 %v780
    %v1634 = vunpack.c.h.b16 %v780
    %v1635 = vunpack.c.l.b16 %v781
    %v1636 = vunpack.c.h.b16 %v781
    %v1637 = vunpack.c.l.b16 %v782
    %v1638 = vunpack.c.h.b16 %v782
    %v1639 = vunpack.c.l.b16 %v783
    %v1640 = vunpack.c.h.b16 %v783
    %v1641 = vunpack.c.l.b16 %v784
    %v1642 = vunpack.c.h.b16 %v784
    %v1643 = vunpack.c.l.b16 %v785
    %v1644 = vunpack.c.h.b16 %v785
    %v1645 = vunpack.c.l.b16 %v786
    %v1646 = vunpack.c.h.b16 %v786
    %v1647 = vunpack.c.l.b16 %v787
    %v1648 = vunpack.c.h.b16 %v787
    %v1649 = vunpack.c.l.b16 %v788
    %v1650 = vunpack.c.h.b16 %v788
    %v1651 = vunpack.c.l.b16 %v789
    %v1652 = vunpack.c.h.b16 %v789
    %v1653 = vunpack.c.l.b16 %v790
    %v1654 = vunpack.c.h.b16 %v790
    %v1655 = vunpack.c.l.b16 %v791
    %v1656 = vunpack.c.h.b16 %v791
    %v1657 = vunpack.c.l.b16 %v792
    %v1658 = vunpack.c.h.b16 %v792
    %v1659 = vunpack.c.l.b16 %v793
    %v1660 = vunpack.c.h.b16 %v793
    %v1661 = vunpack.c.l.b16 %v794
    %v1662 = vunpack.c.h.b16 %v794
    %v1663 = vunpack.c.l.b16 %v795
    %v1664 = vunpack.c.h.b16 %v795
    %v1665 = vunpack.c.l.b16 %v796
    %v1666 = vunpack.c.h.b16 %v796
    %v1667 = vunpack.c.l.b16 %v797
    %v1668 = vunpack.c.h.b16 %v797
    %v1669 = vunpack.c.l.b16 %v798
    %v1670 = vunpack.c.h.b16 %v798
    %v1671 = vunpack.c.l.b16 %v799
    %v1672 = vunpack.c.h.b16 %v799
    %v1673 = vunpack.c.l.b16 %v800
    %v1674 = vunpack.c.h.b16 %v800
    %v1675 = vunpack.c.l.b16 %v801
    %v1676 = vunpack.c.h.b16 %v801
    %v1677 = vunpack.c.l.b16 %v802
    %v1678 = vunpack.c.h.b16 %v802
    %v1679 = vunpack.c.l.b16 %v803
    %v1680 = vunpack.c.h.b16 %v803
    %v1681 = vunpack.c.l.b16 %v804
    %v1682 = vunpack.c.h.b16 %v804
    %v1683 = vunpack.c.l.b16 %v805
    %v1684 = vunpack.c.h.b16 %v805
    %v1685 = vunpack.c.l.b16 %v806
    %v1686 = vunpack.c.h.b16 %v806
    %v1687 = vunpack.c.l.b16 %v807
    %v1688 = vunpack.c.h.b16 %v807
    %v1689 = vunpack.c.l.b16 %v808
    %v1690 = vunpack.c.h.b16 %v808
    %v1691 = vunpack.c.l.b16 %v809
    %v1692 = vunpack.c.h.b16 %v809
    %v1693 = vunpack.c.l.b16 %v810
    %v1694 = vunpack.c.h.b16 %v810
    %v1695 = vunpack.c.l.b16 %v811
    %v1696 = vunpack.c.h.b16 %v811
    %v1697 = vunpack.c.l.b16 %v812
    %v1698 = vunpack.c.h.b16 %v812
    %v1699 = vunpack.c.l.b16 %v813
    %v1700 = vunpack.c.h.b16 %v813
    %v1701 = vunpack.c.l.b16 %v814
    %v1702 = vunpack.c.h.b16 %v814
    %v1703 = vunpack.c.l.b16 %v815
    %v1704 = vunpack.c.h.b16 %v815
    %v1705 = vunpack.c.l.b16 %v816
    %v1706 = vunpack.c.h.b16 %v816
    %v1707 = vunpack.c.l.b16 %v817
    %v1708 = vunpack.c.h.b16 %v817
    %v1709 = vunpack.c.l.b16 %v818
    %v1710 = vunpack.c.h.b16 %v818
    %v1711 = vunpack.c.l.b16 %v819
    %v1712 = vunpack.c.h.b16 %v819
    %v1713 = vunpack.c.l.b16 %v820
    %v1714 = vunpack.c.h.b16 %v820
    %v1715 = vunpack.c.l.b16 %v821
    %v1716 = vunpack.c.h.b16 %v821
    %v1717 = vunpack.c.l.b16 %v822
    %v1718 = vunpack.c.h.b16 %v822
    %v1719 = vunpack.c.l.b16 %v823
    %v1720 = vunpack.c.h.b16 %v823
    %v1721 = vunpack.c.l.b16 %v824
    %v1722 = vunpack.c.h.b16 %v824
    %v1723 = vunpack.c.l.b16 %v825
    %v1724 = vunpack.c.h.b16 %v825
    %v1725 = vunpack.c.l.b16 %v826
    %v1726 = vunpack.c.h.b16 %v826
    %v1727 = vunpack.c.l.b16 %v827
    %v1728 = vunpack.c.h.b16 %v827
    %v1729 = vunpack.c.l.b16 %v828
    %v1730 = vunpack.c.h.b16 %v828
    %v1731 = vunpack.c.l.b16 %v829
    %v1732 = vunpack.c.h.b16 %v829
    %v1733 = vunpack.c.l.b16 %v830
    %v1734 = vunpack.c.h.b16 %v830
    %v1735 = vunpack.c.l.b16 %v831
    %v1736 = vunpack.c.h.b16 %v831
    %v1737 = vunpack.c.l.b16 %v832
    %v1738 = vunpack.c.h.b16 %v832
    %v1739 = vunpack.c.l.b16 %v833
    %v1740 = vunpack.c.h.b16 %v833
    %v1741 = vunpack.c.l.b16 %v834
    %v1742 = vunpack.c.h.b16 %v834
    %v1743 = vunpack.c.l.b16 %v835
    %v1744 = vunpack.c.h.b16 %v835
    %v1745 = vunpack.c.l.b16 %v836
    %v1746 = vunpack.c.h.b16 %v836
    %v1747 = vunpack.c.l.b16 %v837
    %v1748 = vunpack.c.h.b16 %v837
    %v1749 = vunpack.c.l.b16 %v838
    %v1750 = vunpack.c.h.b16 %v838
    %v1751 = vunpack.c.l.b16 %v839
    %v1752 = vunpack.c.h.b16 %v839
    %v1753 = vunpack.c.l.b16 %v840
    %v1754 = vunpack.c.h.b16 %v840
    %v1755 = vunpack.c.l.b16 %v841
    %v1756 = vunpack.c.h.b16 %v841
    %v1757 = vunpack.c.l.b16 %v842
    %v1758 = vunpack.c.h.b16 %v842
    %v1759 = vunpack.c.l.b16 %v843
    %v1760 = vunpack.c.h.b16 %v843
    %v1761 = vunpack.c.l.b16 %v844
    %v1762 = vunpack.c.h.b16 %v844
    %v1763 = vunpack.c.l.b16 %v845
    %v1764 = vunpack.c.h.b16 %v845
    %v1765 = vunpack.c.l.b16 %v846
    %v1766 = vunpack.c.h.b16 %v846
    %v1767 = vunpack.c.l.b16 %v847
    %v1768 = vunpack.c.h.b16 %v847
    %v1769 = vunpack.c.l.b16 %v848
    %v1770 = vunpack.c.h.b16 %v848
    %v1771 = vunpack.c.l.b16 %v849
    %v1772 = vunpack.c.h.b16 %v849
    %v1773 = vunpack.c.l.b16 %v850
    %v1774 = vunpack.c.h.b16 %v850
    %v1775 = vunpack.c.l.b16 %v851
    %v1776 = vunpack.c.h.b16 %v851
    %v1777 = vunpack.c.l.b16 %v852
    %v1778 = vunpack.c.h.b16 %v852
    %v1779 = vunpack.c.l.b16 %v853
    %v1780 = vunpack.c.h.b16 %v853
    %v1781 = vunpack.c.l.b16 %v854
    %v1782 = vunpack.c.h.b16 %v854
    %v1783 = vunpack.c.l.b16 %v855
    %v1784 = vunpack.c.h.b16 %v855
    %v1785 = vunpack.c.l.b16 %v856
    %v1786 = vunpack.c.h.b16 %v856
    %v1787 = vunpack.c.l.b16 %v857
    %v1788 = vunpack.c.h.b16 %v857
    %v1789 = vunpack.c.l.b16 %v858
    %v1790 = vunpack.c.h.b16 %v858
    %v1791 = vunpack.c.l.b16 %v859
    %v1792 = vunpack.c.h.b16 %v859
    %v1793 = vunpack.c.l.b16 %v860
    %v1794 = vunpack.c.h.b16 %v860
    %v1795 = vunpack.c.l.b16 %v861
    %v1796 = vunpack.c.h.b16 %v861
    %v1797 = vunpack.c.l.b16 %v862
    %v1798 = vunpack.c.h.b16 %v862
    %v1799 = vunpack.c.l.b16 %v863
    %v1800 = vunpack.c.h.b16 %v863
    %v1801 = vunpack.c.l.b16 %v864
    %v1802 = vunpack.c.h.b16 %v864
    %v1803 = vunpack.c.l.b16 %v865
    %v1804 = vunpack.c.h.b16 %v865
    %v1805 = vunpack.c.l.b16 %v866
    %v1806 = vunpack.c.h.b16 %v866
    %v1807 = vunpack.c.l.b16 %v867
    %v1808 = vunpack.c.h.b16 %v867
    %v1809 = vunpack.c.l.b16 %v868
    %v1810 = vunpack.c.h.b16 %v868
    %v1811 = vunpack.c.l.b16 %v869
    %v1812 = vunpack.c.h.b16 %v869
    %v1813 = vunpack.c.l.b16 %v870
    %v1814 = vunpack.c.h.b16 %v870
    %v1815 = vunpack.c.l.b16 %v871
    %v1816 = vunpack.c.h.b16 %v871
    %v1817 = vunpack.c.l.b16 %v872
    %v1818 = vunpack.c.h.b16 %v872
    %v1819 = vunpack.c.l.b16 %v873
    %v1820 = vunpack.c.h.b16 %v873
    %v1821 = vunpack.c.l.b16 %v874
    %v1822 = vunpack.c.h.b16 %v874
    %v1823 = vunpack.c.l.b16 %v875
    %v1824 = vunpack.c.h.b16 %v875
    %v1825 = vunpack.c.l.b16 %v876
    %v1826 = vunpack.c.h.b16 %v876
    %v1827 = vunpack.c.l.b16 %v877
    %v1828 = vunpack.c.h.b16 %v877
    %v1829 = vunpack.c.l.b16 %v878
    %v1830 = vunpack.c.h.b16 %v878
    %v1831 = vunpack.c.l.b16 %v879
    %v1832 = vunpack.c.h.b16 %v879
    %v1833 = vunpack.c.l.b16 %v880
    %v1834 = vunpack.c.h.b16 %v880
    %v1835 = vunpack.c.l.b16 %v881
    %v1836 = vunpack.c.h.b16 %v881
    %v1837 = vunpack.c.l.b16 %v882
    %v1838 = vunpack.c.h.b16 %v882
    %v1839 = vunpack.c.l.b16 %v883
    %v1840 = vunpack.c.h.b16 %v883
    %v1841 = vunpack.c.l.b16 %v884
    %v1842 = vunpack.c.h.b16 %v884
    %v1843 = vunpack.c.l.b16 %v885
    %v1844 = vunpack.c.h.b16 %v885
    %v1845 = vunpack.c.l.b16 %v886
    %v1846 = vunpack.c.h.b16 %v886
    %v1847 = vunpack.c.l.b16 %v887
    %v1848 = vunpack.c.h.b16 %v887
    %v1849 = vunpack.c.l.b16 %v888
    %v1850 = vunpack.c.h.b16 %v888
    %v1851 = vunpack.c.l.b16 %v889
    %v1852 = vunpack.c.h.b16 %v889
    %v1853 = vunpack.c.l.b16 %v890
    %v1854 = vunpack.c.h.b16 %v890
    %v1855 = vunpack.c.l.b16 %v891
    %v1856 = vunpack.c.h.b16 %v891
    %v1857 = vunpack.c.l.b16 %v892
    %v1858 = vunpack.c.h.b16 %v892
    %v1859 = vunpack.c.l.b16 %v893
    %v1860 = vunpack.c.h.b16 %v893
    %v1861 = vunpack.c.l.b16 %v894
    %v1862 = vunpack.c.h.b16 %v894
    %v1863 = vunpack.c.l.b16 %v895
    %v1864 = vunpack.c.h.b16 %v895
    %v1865 = vunpack.c.l.b16 %v896
    %v1866 = vunpack.c.h.b16 %v896
    %v1867 = vunpack.c.l.b16 %v897
    %v1868 = vunpack.c.h.b16 %v897
    %v1869 = vunpack.c.l.b16 %v898
    %v1870 = vunpack.c.h.b16 %v898
    %v1871 = vunpack.c.l.b16 %v899
    %v1872 = vunpack.c.h.b16 %v899
    %v1873 = vunpack.c.l.b16 %v900
    %v1874 = vunpack.c.h.b16 %v900
    %v1875 = vunpack.c.l.b16 %v901
    %v1876 = vunpack.c.h.b16 %v901
    %v1877 = vunpack.c.l.b16 %v902
    %v1878 = vunpack.c.h.b16 %v902
    %v1879 = vunpack.c.l.b16 %v903
    %v1880 = vunpack.c.h.b16 %v903
    %v1881 = vunpack.c.l.b16 %v904
    %v1882 = vunpack.c.h.b16 %v904
    %v1883 = vunpack.c.l.b16 %v905
    %v1884 = vunpack.c.h.b16 %v905
    %v1885 = vunpack.c.l.b16 %v906
    %v1886 = vunpack.c.h.b16 %v906
    %v1887 = vunpack.c.l.b16 %v907
    %v1888 = vunpack.c.h.b16 %v907
    %v1889 = vunpack.c.l.b16 %v908
    %v1890 = vunpack.c.h.b16 %v908
    %v1891 = vunpack.c.l.b16 %v909
    %v1892 = vunpack.c.h.b16 %v909
    %v1893 = vunpack.c.l.b16 %v910
    %v1894 = vunpack.c.h.b16 %v910
    %v1895 = vunpack.c.l.b16 %v911
    %v1896 = vunpack.c.h.b16 %v911
    %v1897 = vunpack.c.l.b16 %v912
    %v1898 = vunpack.c.h.b16 %v912
    %v1899 = vunpack.c.l.b16 %v913
    %v1900 = vunpack.c.h.b16 %v913
    %v1901 = vunpack.c.l.b16 %v914
    %v1902 = vunpack.c.h.b16 %v914
    %v1903 = vunpack.c.l.b16 %v915
    %v1904 = vunpack.c.h.b16 %v915
    %v1905 = vunpack.c.l.b16 %v916
    %v1906 = vunpack.c.h.b16 %v916
    %v1907 = vunpack.c.l.b16 %v917
    %v1908 = vunpack.c.h.b16 %v917
    %v1909 = vunpack.c.l.b16 %v918
    %v1910 = vunpack.c.h.b16 %v918
    %v1911 = vunpack.c.l.b16 %v919
    %v1912 = vunpack.c.h.b16 %v919
    %v1913 = vunpack.c.l.b16 %v920
    %v1914 = vunpack.c.h.b16 %v920
    %v1915 = vunpack.c.l.b16 %v921
    %v1916 = vunpack.c.h.b16 %v921
    %v1917 = vunpack.c.l.b16 %v922
    %v1918 = vunpack.c.h.b16 %v922
    %v1919 = vunpack.c.l.b16 %v923
    %v1920 = vunpack.c.h.b16 %v923
    %v1921 = vunpack.c.l.b16 %v924
    %v1922 = vunpack.c.h.b16 %v924
    %v1923 = vunpack.c.l.b16 %v925
    %v1924 = vunpack.c.h.b16 %v925
    %v1925 = vunpack.c.l.b16 %v926
    %v1926 = vunpack.c.h.b16 %v926
    %v1927 = vunpack.c.l.b16 %v927
    %v1928 = vunpack.c.h.b16 %v927
    %v1929 = vunpack.c.l.b16 %v928
    %v1930 = vunpack.c.h.b16 %v928
    %v1931 = vunpack.c.l.b16 %v929
    %v1932 = vunpack.c.h.b16 %v929
    %v1933 = vunpack.c.l.b16 %v930
    %v1934 = vunpack.c.h.b16 %v930
    %v1935 = vunpack.c.l.b16 %v931
    %v1936 = vunpack.c.h.b16 %v931
    %v1937 = vunpack.c.l.b16 %v932
    %v1938 = vunpack.c.h.b16 %v932
    %v1939 = vunpack.c.l.b16 %v933
    %v1940 = vunpack.c.h.b16 %v933
    %v1941 = vunpack.c.l.b16 %v934
    %v1942 = vunpack.c.h.b16 %v934
    %v1943 = vunpack.c.l.b16 %v935
    %v1944 = vunpack.c.h.b16 %v935
    %v1945 = vunpack.c.l.b16 %v936
    %v1946 = vunpack.c.h.b16 %v936
    %v1947 = vunpack.c.l.b16 %v937
    %v1948 = vunpack.c.h.b16 %v937
    %v1949 = vunpack.c.l.b16 %v938
    %v1950 = vunpack.c.h.b16 %v938
    %v1951 = vunpack.c.l.b16 %v939
    %v1952 = vunpack.c.h.b16 %v939
    %v1953 = vunpack.c.l.b16 %v940
    %v1954 = vunpack.c.h.b16 %v940
    %v1955 = vunpack.c.l.b16 %v941
    %v1956 = vunpack.c.h.b16 %v941
    %v1957 = vunpack.c.l.b16 %v942
    %v1958 = vunpack.c.h.b16 %v942
    %v1959 = vunpack.c.l.b16 %v943
    %v1960 = vunpack.c.h.b16 %v943
    %v1961 = vunpack.c.l.b16 %v944
    %v1962 = vunpack.c.h.b16 %v944
    %v1963 = vunpack.c.l.b16 %v945
    %v1964 = vunpack.c.h.b16 %v945
    %v1965 = vunpack.c.l.b16 %v946
    %v1966 = vunpack.c.h.b16 %v946
    %v1967 = vunpack.c.l.b16 %v947
    %v1968 = vunpack.c.h.b16 %v947
    %v1969 = vunpack.c.l.b16 %v948
    %v1970 = vunpack.c.h.b16 %v948
    %v1971 = vunpack.c.l.b16 %v949
    %v1972 = vunpack.c.h.b16 %v949
    %v1973 = vunpack.c.l.b16 %v950
    %v1974 = vunpack.c.h.b16 %v950
    %v1975 = vunpack.c.l.b16 %v951
    %v1976 = vunpack.c.h.b16 %v951
    %v1977 = vunpack.c.l.b16 %v952
    %v1978 = vunpack.c.h.b16 %v952
    %v1979 = vunpack.c.l.b16 %v953
    %v1980 = vunpack.c.h.b16 %v953
    %v1981 = vunpack.c.l.b16 %v954
    %v1982 = vunpack.c.h.b16 %v954
    %v1983 = vunpack.c.l.b16 %v955
    %v1984 = vunpack.c.h.b16 %v955
    %v1985 = vunpack.c.l.b16 %v956
    %v1986 = vunpack.c.h.b16 %v956
    %v1987 = vunpack.c.l.b16 %v957
    %v1988 = vunpack.c.h.b16 %v957
    %v1989 = vunpack.c.l.b16 %v958
    %v1990 = vunpack.c.h.b16 %v958
    %v1991 = vunpack.c.l.b16 %v959
    %v1992 = vunpack.c.h.b16 %v959
    %v1993 = vunpack.c.l.b16 %v960
    %v1994 = vunpack.c.h.b16 %v960
    %v1995 = vunpack.c.l.b16 %v961
    %v1996 = vunpack.c.h.b16 %v961
    %v1997 = vunpack.c.l.b16 %v962
    %v1998 = vunpack.c.h.b16 %v962
    %v1999 = vunpack.c.l.b16 %v963
    %v2000 = vunpack.c.h.b16 %v963
    %v2001 = vunpack.c.l.b16 %v964
    %v2002 = vunpack.c.h.b16 %v964
    %v2003 = vunpack.c.l.b16 %v965
    %v2004 = vunpack.c.h.b16 %v965
    %v2005 = vunpack.c.l.b16 %v966
    %v2006 = vunpack.c.h.b16 %v966
    %v2007 = vunpack.c.l.b16 %v967
    %v2008 = vunpack.c.h.b16 %v967
    %v2009 = vunpack.c.l.b16 %v968
    %v2010 = vunpack.c.h.b16 %v968
    %v2011 = vunpack.c.l.b16 %v969
    %v2012 = vunpack.c.h.b16 %v969
    %v2013 = vunpack.c.l.b16 %v970
    %v2014 = vunpack.c.h.b16 %v970
    %v2015 = vunpack.c.l.b16 %v971
    %v2016 = vunpack.c.h.b16 %v971
    %v2017 = vunpack.c.l.b16 %v972
    %v2018 = vunpack.c.h.b16 %v972
    %v2019 = vunpack.c.l.b16 %v973
    %v2020 = vunpack.c.h.b16 %v973
    %v2021 = vunpack.c.l.b16 %v974
    %v2022 = vunpack.c.h.b16 %v974
    %v2023 = vunpack.c.l.b16 %v975
    %v2024 = vunpack.c.h.b16 %v975
    %v2025 = vunpack.c.l.b16 %v976
    %v2026 = vunpack.c.h.b16 %v976
    %v2027 = vunpack.c.l.b16 %v977
    %v2028 = vunpack.c.h.b16 %v977
    %v2029 = vunpack.c.l.b16 %v978
    %v2030 = vunpack.c.h.b16 %v978
    %v2031 = vunpack.c.l.b16 %v979
    %v2032 = vunpack.c.h.b16 %v979
    %v2033 = vpack.c.b16 %v1463, %v1457
    %v2034 = vpack.c.b16 %v1464, %v1458
    %v2035 = vpack.c.b16 %v1465, %v1459
    %v2036 = vpack.c.b16 %v1466, %v1460
    %v2037 = vpack.c.b16 %v1467, %v1461
    %v2038 = vpack.c.b16 %v1468, %v1462
    %v2039 = vpack.c.b16 %v1475, %v1469
    %v2040 = vpack.c.b16 %v1476, %v1470
    %v2041 = vpack.c.b16 %v1477, %v1471
    %v2042 = vpack.c.b16 %v1478, %v1472
    %v2043 = vpack.c.b16 %v1479, %v1473
    %v2044 = vpack.c.b16 %v1480, %v1474
    %v2045 = vpack.c.b16 %v1487, %v1481
    %v2046 = vpack.c.b16 %v1488, %v1482
    %v2047 = vpack.c.b16 %v1489, %v1483
    %v2048 = vpack.c.b16 %v1490, %v1484
    %v2049 = vpack.c.b16 %v1491, %v1485
    %v2050 = vpack.c.b16 %v1492, %v1486
    %v2051 = vpack.c.b16 %v1499, %v1493
    %v2052 = vpack.c.b16 %v1500, %v1494
    %v2053 = vpack.c.b16 %v1501, %v1495
    %v2054 = vpack.c.b16 %v1502, %v1496
    %v2055 = vpack.c.b16 %v1503, %v1497
    %v2056 = vpack.c.b16 %v1504, %v1498
    %v2057 = vpack.c.b16 %v1511, %v1505
    %v2058 = vpack.c.b16 %v1512, %v1506
    %v2059 = vpack.c.b16 %v1513, %v1507
    %v2060 = vpack.c.b16 %v1514, %v1508
    %v2061 = vpack.c.b16 %v1515, %v1509
    %v2062 = vpack.c.b16 %v1516, %v1510
    %v2063 = vpack.c.b16 %v1523, %v1517
    %v2064 = vpack.c.b16 %v1524, %v1518
    %v2065 = vpack.c.b16 %v1525, %v1519
    %v2066 = vpack.c.b16 %v1526, %v1520
    %v2067 = vpack.c.b16 %v1527, %v1521
    %v2068 = vpack.c.b16 %v1528, %v1522
    %v2069 = vpack.c.b16 %v1535, %v1529
    %v2070 = vpack.c.b16 %v1536, %v1530
    %v2071 = vpack.c.b16 %v1537, %v1531
    %v2072 = vpack.c.b16 %v1538, %v1532
    %v2073 = vpack.c.b16 %v1539, %v1533
    %v2074 = vpack.c.b16 %v1540, %v1534
    %v2075 = vpack.c.b16 %v1547, %v1541
    %v2076 = vpack.c.b16 %v1548, %v1542
    %v2077 = vpack.c.b16 %v1549, %v1543
    %v2078 = vpack.c.b16 %v1550, %v1544
    %v2079 = vpack.c.b16 %v1551, %v1545
    %v2080 = vpack.c.b16 %v1552, %v1546
    %v2081 = vpack.c.b16 %v1559, %v1553
    %v2082 = vpack.c.b16 %v1560, %v1554
    %v2083 = vpack.c.b16 %v1561, %v1555
    %v2084 = vpack.c.b16 %v1562, %v1556
    %v2085 = vpack.c.b16 %v1563, %v1557
    %v2086 = vpack.c.b16 %v1564, %v1558
    %v2087 = vpack.c.b16 %v1571, %v1565
    %v2088 = vpack.c.b16 %v1572, %v1566
    %v2089 = vpack.c.b16 %v1573, %v1567
    %v2090 = vpack.c.b16 %v1574, %v1568
    %v2091 = vpack.c.b16 %v1575, %v1569
    %v2092 = vpack.c.b16 %v1576, %v1570
    %v2093 = vpack.c.b16 %v1583, %v1577
    %v2094 = vpack.c.b16 %v1584, %v1578
    %v2095 = vpack.c.b16 %v1585, %v1579
    %v2096 = vpack.c.b16 %v1586, %v1580
    %v2097 = vpack.c.b16 %v1587, %v1581
    %v2098 = vpack.c.b16 %v1588, %v1582
    %v2099 = vpack.c.b16 %v1595, %v1589
    %v2100 = vpack.c.b16 %v1596, %v1590
    %v2101 = vpack.c.b16 %v1597, %v1591
    %v2102 = vpack.c.b16 %v1598, %v1592
    %v2103 = vpack.c.b16 %v1599, %v1593
    %v2104 = vpack.c.b16 %v1600, %v1594
    %v2105 = vpack.c.b16 %v1607, %v1601
    %v2106 = vpack.c.b16 %v1608, %v1602
    %v2107 = vpack.c.b16 %v1609, %v1603
    %v2108 = vpack.c.b16 %v1610, %v1604
    %v2109 = vpack.c.b16 %v1611, %v1605
    %v2110 = vpack.c.b16 %v1612, %v1606
    %v2111 = vpack.c.b16 %v1619, %v1613
    %v2112 = vpack.c.b16 %v1620, %v1614
    %v2113 = vpack.c.b16 %v1621, %v1615
    %v2114 = vpack.c.b16 %v1622, %v1616
    %v2115 = vpack.c.b16 %v1623, %v1617
    %v2116 = vpack.c.b16 %v1624, %v1618
    %v2117 = vpack.c.b16 %v1631, %v1625
    %v2118 = vpack.c.b16 %v1632, %v1626
    %v2119 = vpack.c.b16 %v1633, %v1627
    %v2120 = vpack.c.b16 %v1634, %v1628
    %v2121 = vpack.c.b16 %v1635, %v1629
    %v2122 = vpack.c.b16 %v1636, %v1630
    %v2123 = vpack.c.b16 %v1643, %v1637
    %v2124 = vpack.c.b16 %v1644, %v1638
    %v2125 = vpack.c.b16 %v1645, %v1639
    %v2126 = vpack.c.b16 %v1646, %v1640
    %v2127 = vpack.c.b16 %v1647, %v1641
    %v2128 = vpack.c.b16 %v1648, %v1642
    %v2129 = vpack.c.b16 %v1655, %v1649
    %v2130 = vpack.c.b16 %v1656, %v1650
    %v2131 = vpack.c.b16 %v1657, %v1651
    %v2132 = vpack.c.b16 %v1658, %v1652
    %v2133 = vpack.c.b16 %v1659, %v1653
    %v2134 = vpack.c.b16 %v1660, %v1654
    %v2135 = vpack.c.b16 %v1667, %v1661
    %v2136 = vpack.c.b16 %v1668, %v1662
    %v2137 = vpack.c.b16 %v1669, %v1663
    %v2138 = vpack.c.b16 %v1670, %v1664
    %v2139 = vpack.c.b16 %v1671, %v1665
    %v2140 = vpack.c.b16 %v1672, %v1666
    %v2141 = vpack.c.b16 %v1679, %v1673
    %v2142 = vpack.c.b16 %v1680, %v1674
    %v2143 = vpack.c.b16 %v1681, %v1675
    %v2144 = vpack.c.b16 %v1682, %v1676
    %v2145 = vpack.c.b16 %v1683, %v1677
    %v2146 = vpack.c.b16 %v1684, %v1678
    %v2147 = vpack.c.b16 %v1691, %v1685
    %v2148 = vpack.c.b16 %v1692, %v1686
    %v2149 = vpack.c.b16 %v1693, %v1687
    %v2150 = vpack.c.b16 %v1694, %v1688
    %v2151 = vpack.c.b16 %v1695, %v1689
    %v2152 = vpack.c.b16 %v1696, %v1690
    %v2153 = vpack.c.b16 %v1703, %v1697
    %v2154 = vpack.c.b16 %v1704, %v1698
    %v2155 = vpack.c.b16 %v1705, %v1699
    %v2156 = vpack.c.b16 %v1706, %v1700
    %v2157 = vpack.c.b16 %v1707, %v1701
    %v2158 = vpack.c.b16 %v1708, %v1702
    %v2159 = vpack.c.b16 %v1715, %v1709
    %v2160 = vpack.c.b16 %v1716, %v1710
    %v2161 = vpack.c.b16 %v1717, %v1711
    %v2162 = vpack.c.b16 %v1718, %v1712
    %v2163 = vpack.c.b16 %v1719, %v1713
    %v2164 = vpack.c.b16 %v1720, %v1714
    %v2165 = vpack.c.b16 %v1727, %v1721
    %v2166 = vpack.c.b16 %v1728, %v1722
    %v2167 = vpack.c.b16 %v1729, %v1723
    %v2168 = vpack.c.b16 %v1730, %v1724
    %v2169 = vpack.c.b16 %v1731, %v1725
    %v2170 = vpack.c.b16 %v1732, %v1726
    %v2171 = vpack.c.b16 %v1739, %v1733
    %v2172 = vpack.c.b16 %v1740, %v1734
    %v2173 = vpack.c.b16 %v1741, %v1735
    %v2174 = vpack.c.b16 %v1742, %v1736
    %v2175 = vpack.c.b16 %v1743, %v1737
    %v2176 = vpack.c.b16 %v1744, %v1738
    %v2177 = vpack.c.b16 %v1751, %v1745
    %v2178 = vpack.c.b16 %v1752, %v1746
    %v2179 = vpack.c.b16 %v1753, %v1747
    %v2180 = vpack.c.b16 %v1754, %v1748
    %v2181 = vpack.c.b16 %v1755, %v1749
    %v2182 = vpack.c.b16 %v1756, %v1750
    %v2183 = vpack.c.b16 %v1763, %v1757
    %v2184 = vpack.c.b16 %v1764, %v1758
    %v2185 = vpack.c.b16 %v1765, %v1759
    %v2186 = vpack.c.b16 %v1766, %v1760
    %v2187 = vpack.c.b16 %v1767, %v1761
    %v2188 = vpack.c.b16 %v1768, %v1762
    %v2189 = vpack.c.b16 %v1775, %v1769
    %v2190 = vpack.c.b16 %v1776, %v1770
    %v2191 = vpack.c.b16 %v1777, %v1771
    %v2192 = vpack.c.b16 %v1778, %v1772
    %v2193 = vpack.c.b16 %v1779, %v1773
    %v2194 = vpack.c.b16 %v1780, %v1774
    %v2195 = vpack.c.b16 %v1787, %v1781
    %v2196 = vpack.c.b16 %v1788, %v1782
    %v2197 = vpack.c.b16 %v1789, %v1783
    %v2198 = vpack.c.b16 %v1790, %v1784
    %v2199 = vpack.c.b16 %v1791, %v1785
    %v2200 = vpack.c.b16 %v1792, %v1786
    %v2201 = vpack.c.b16 %v1799, %v1793
    %v2202 = vpack.c.b16 %v1800, %v1794
    %v2203 = vpack.c.b16 %v1801, %v1795
    %v2204 = vpack.c.b16 %v1802, %v1796
    %v2205 = vpack.c.b16 %v1803, %v1797
    %v2206 = vpack.c.b16 %v1804, %v1798
    %v2207 = vpack.c.b16 %v1811, %v1805
    %v2208 = vpack.c.b16 %v1812, %v1806
    %v2209 = vpack.c.b16 %v1813, %v1807
    %v2210 = vpack.c.b16 %v1814, %v1808
    %v2211 = vpack.c.b16 %v1815, %v1809
    %v2212 = vpack.c.b16 %v1816, %v1810
    %v2213 = vpack.c.b16 %v1823, %v1817
    %v2214 = vpack.c.b16 %v1824, %v1818
    %v2215 = vpack.c.b16 %v1825, %v1819
    %v2216 = vpack.c.b16 %v1826, %v1820
    %v2217 = vpack.c.b16 %v1827, %v1821
    %v2218 = vpack.c.b16 %v1828, %v1822
    %v2219 = vpack.c.b16 %v1835, %v1829
    %v2220 = vpack.c.b16 %v1836, %v1830
    %v2221 = vpack.c.b16 %v1837, %v1831
    %v2222 = vpack.c.b16 %v1838, %v1832
    %v2223 = vpack.c.b16 %v1839, %v1833
    %v2224 = vpack.c.b16 %v1840, %v1834
    %v2225 = vpack.c.b16 %v1847, %v1841
    %v2226 = vpack.c.b16 %v1848, %v1842
    %v2227 = vpack.c.b16 %v1849, %v1843
    %v2228 = vpack.c.b16 %v1850, %v1844
    %v2229 = vpack.c.b16 %v1851, %v1845
    %v2230 = vpack.c.b16 %v1852, %v1846
    %v2231 = vpack.c.b16 %v1859, %v1853
    %v2232 = vpack.c.b16 %v1860, %v1854
    %v2233 = vpack.c.b16 %v1861, %v1855
    %v2234 = vpack.c.b16 %v1862, %v1856
    %v2235 = vpack.c.b16 %v1863, %v1857
    %v2236 = vpack.c.b16 %v1864, %v1858
    %v2237 = vpack.c.b16 %v1871, %v1865
    %v2238 = vpack.c.b16 %v1872, %v1866
    %v2239 = vpack.c.b16 %v1873, %v1867
    %v2240 = vpack.c.b16 %v1874, %v1868
    %v2241 = vpack.c.b16 %v1875, %v1869
    %v2242 = vpack.c.b16 %v1876, %v1870
    %v2243 = vpack.c.b16 %v1883, %v1877
    %v2244 = vpack.c.b16 %v1884, %v1878
    %v2245 = vpack.c.b16 %v1885, %v1879
    %v2246 = vpack.c.b16 %v1886, %v1880
    %v2247 = vpack.c.b16 %v1887, %v1881
    %v2248 = vpack.c.b16 %v1888, %v1882
    %v2249 = vpack.c.b16 %v1895, %v1889
    %v2250 = vpack.c.b16 %v1896, %v1890
    %v2251 = vpack.c.b16 %v1897, %v1891
    %v2252 = vpack.c.b16 %v1898, %v1892
    %v2253 = vpack.c.b16 %v1899, %v1893
    %v2254 = vpack.c.b16 %v1900, %v1894
    %v2255 = vpack.c.b16 %v1907, %v1901
    %v2256 = vpack.c.b16 %v1908, %v1902
    %v2257 = vpack.c.b16 %v1909, %v1903
    %v2258 = vpack.c.b16 %v1910, %v1904
    %v2259 = vpack.c.b16 %v1911, %v1905
    %v2260 = vpack.c.b16 %v1912, %v1906
    %v2261 = vpack.c.b16 %v1919, %v1913
    %v2262 = vpack.c.b16 %v1920, %v1914
    %v2263 = vpack.c.b16 %v1921, %v1915
    %v2264 = vpack.c.b16 %v1922, %v1916
    %v2265 = vpack.c.b16 %v1923, %v1917
    %v2266 = vpack.c.b16 %v1924, %v1918
    %v2267 = vpack.c.b16 %v1931, %v1925
    %v2268 = vpack.c.b16 %v1932, %v1926
    %v2269 = vpack.c.b16 %v1933, %v1927
    %v2270 = vpack.c.b16 %v1934, %v1928
    %v2271 = vpack.c.b16 %v1935, %v1929
    %v2272 = vpack.c.b16 %v1936, %v1930
    %v2273 = vpack.c.b16 %v1943, %v1937
    %v2274 = vpack.c.b16 %v1944, %v1938
    %v2275 = vpack.c.b16 %v1945, %v1939
    %v2276 = vpack.c.b16 %v1946, %v1940
    %v2277 = vpack.c.b16 %v1947, %v1941
    %v2278 = vpack.c.b16 %v1948, %v1942
    %v2279 = vpack.c.b16 %v1955, %v1949
    %v2280 = vpack.c.b16 %v1956, %v1950
    %v2281 = vpack.c.b16 %v1957, %v1951
    %v2282 = vpack.c.b16 %v1958, %v1952
    %v2283 = vpack.c.b16 %v1959, %v1953
    %v2284 = vpack.c.b16 %v1960, %v1954
    %v2285 = vpack.c.b16 %v1967, %v1961
    %v2286 = vpack.c.b16 %v1968, %v1962
    %v2287 = vpack.c.b16 %v1969, %v1963
    %v2288 = vpack.c.b16 %v1970, %v1964
    %v2289 = vpack.c.b16 %v1971, %v1965
    %v2290 = vpack.c.b16 %v1972, %v1966
    %v2291 = vpack.c.b16 %v1979, %v1973
    %v2292 = vpack.c.b16 %v1980, %v1974
    %v2293 = vpack.c.b16 %v1981, %v1975
    %v2294 = vpack.c.b16 %v1982, %v1976
    %v2295 = vpack.c.b16 %v1983, %v1977
    %v2296 = vpack.c.b16 %v1984, %v1978
    %v2297 = vpack.c.b16 %v1991, %v1985
    %v2298 = vpack.c.b16 %v1992, %v1986
    %v2299 = vpack.c.b16 %v1993, %v1987
    %v2300 = vpack.c.b16 %v1994, %v1988
    %v2301 = vpack.c.b16 %v1995, %v1989
    %v2302 = vpack.c.b16 %v1996, %v1990
    %v2303 = vpack.c.b16 %v2003, %v1997
    %v2304 = vpack.c.b16 %v2004, %v1998
    %v2305 = vpack.c.b16 %v2005, %v1999
    %v2306 = vpack.c.b16 %v2006, %v2000
    %v2307 = vpack.c.b16 %v2007, %v2001
    %v2308 = vpack.c.b16 %v2008, %v2002
    %v2309 = vpack.c.b16 %v2015, %v2009
    %v2310 = vpack.c.b16 %v2016, %v2010
    %v2311 = vpack.c.b16 %v2017, %v2011
    %v2312 = vpack.c.b16 %v2018, %v2012
    %v2313 = vpack.c.b16 %v2019, %v2013
    %v2314 = vpack.c.b16 %v2020, %v2014
    %v2315 = vpack.c.b16 %v2027, %v2021
    %v2316 = vpack.c.b16 %v2028, %v2022
    %v2317 = vpack.c.b16 %v2029, %v2023
    %v2318 = vpack.c.b16 %v2030, %v2024
    %v2319 = vpack.c.b16 %v2031, %v2025
    %v2320 = vpack.c.b16 %v2032, %v2026
    %2609 = vmatprep.subr.bf16.mxu0 %v2034
    %2610 = vmatpush1.bf16.msra.mxu0 %v2033
    %2611 = vmatprep.subr.bf16.mxu0 %v2040
    %2612 = vmatpush1.bf16.msra.mxu0 %v2039
    %2613 = vmatprep.subr.bf16.mxu0 %v2046
    %2614 = vmatpush1.bf16.msra.mxu0 %v2045
    %2615 = vmatprep.subr.bf16.mxu0 %v2052
    %2616 = vmatpush1.bf16.msra.mxu0 %v2051
    %2617 = vmatprep.subr.bf16.mxu0 %v2058
    %2618 = vmatpush1.bf16.msra.mxu0 %v2057
    %2619 = vmatprep.subr.bf16.mxu0 %v2064
    %2620 = vmatpush1.bf16.msra.mxu0 %v2063
    %2621 = vmatprep.subr.bf16.mxu0 %v2070
    %2622 = vmatpush1.bf16.msra.mxu0 %v2069
    %2623 = vmatprep.subr.bf16.mxu0 %v2076
    %2624 = vmatpush1.bf16.msra.mxu0 %v2075
    %2625 = vmatprep.subr.bf16.mxu0 %v2082
    %2626 = vmatpush1.bf16.msra.mxu0 %v2081
    %2627 = vmatprep.subr.bf16.mxu0 %v2088
    %2628 = vmatpush1.bf16.msra.mxu0 %v2087
    %2629 = vmatprep.subr.bf16.mxu0 %v2094
    %2630 = vmatpush1.bf16.msra.mxu0 %v2093
    %2631 = vmatprep.subr.bf16.mxu0 %v2100
    %2632 = vmatpush1.bf16.msra.mxu0 %v2099
    %2633 = vmatprep.subr.bf16.mxu0 %v2106
    %2634 = vmatpush1.bf16.msra.mxu0 %v2105
    %2635 = vmatprep.subr.bf16.mxu0 %v2112
    %2636 = vmatpush1.bf16.msra.mxu0 %v2111
    %2637 = vmatprep.subr.bf16.mxu0 %v2118
    %2638 = vmatpush1.bf16.msra.mxu0 %v2117
    %2639 = vmatprep.subr.bf16.mxu0 %v2124
    %2640 = vmatpush1.bf16.msra.mxu0 %v2123
    %2641 = vmatprep.mubr.bf16.mxu0 %v1158
    %2642 = vmatmul.mubr.bf16.gmra.mrb[0].mxu0 %v1157
    %v2643 = vpop.f32.mrb[0].mxu0
    %v2644 = vadd.f32 %v985, %v2643
    %v2645 = vpop.f32.mrb[0].mxu0
    %v2646 = vadd.f32 %v989, %v2645
    %v2647 = vpop.f32.mrb[0].mxu0
    %v2648 = vpop.f32.mrb[0].mxu0
    %2649 = vdwg.mxu0
    %2650 = vmatprep.subr.bf16.mxu0 %v2130
    %2651 = vmatpush1.bf16.msra.mxu0 %v2129
    %2652 = vmatprep.subr.bf16.mxu0 %v2136
    %2653 = vmatpush1.bf16.msra.mxu0 %v2135
    %2654 = vmatprep.subr.bf16.mxu0 %v2142
    %2655 = vmatpush1.bf16.msra.mxu0 %v2141
    %2656 = vmatprep.subr.bf16.mxu0 %v2148
    %2657 = vmatpush1.bf16.msra.mxu0 %v2147
    %2658 = vmatprep.subr.bf16.mxu0 %v2154
    %2659 = vmatpush1.bf16.msra.mxu0 %v2153
    %2660 = vmatprep.subr.bf16.mxu0 %v2160
    %2661 = vmatpush1.bf16.msra.mxu0 %v2159
    %2662 = vmatprep.subr.bf16.mxu0 %v2166
    %2663 = vmatpush1.bf16.msra.mxu0 %v2165
    %2664 = vmatprep.subr.bf16.mxu0 %v2172
    %2665 = vmatpush1.bf16.msra.mxu0 %v2171
    %2666 = vmatprep.subr.bf16.mxu0 %v2178
    %2667 = vmatpush1.bf16.msra.mxu0 %v2177
    %2668 = vmatprep.subr.bf16.mxu0 %v2184
    %2669 = vmatpush1.bf16.msra.mxu0 %v2183
    %2670 = vmatprep.subr.bf16.mxu0 %v2190
    %2671 = vmatpush1.bf16.msra.mxu0 %v2189
    %2672 = vmatprep.subr.bf16.mxu0 %v2196
    %2673 = vmatpush1.bf16.msra.mxu0 %v2195
    %2674 = vmatprep.subr.bf16.mxu0 %v2202
    %2675 = vmatpush1.bf16.msra.mxu0 %v2201
    %2676 = vmatprep.subr.bf16.mxu0 %v2208
    %2677 = vmatpush1.bf16.msra.mxu0 %v2207
    %2678 = vmatprep.subr.bf16.mxu0 %v2214
    %2679 = vmatpush1.bf16.msra.mxu0 %v2213
    %2680 = vmatprep.subr.bf16.mxu0 %v2220
    %2681 = vmatpush1.bf16.msra.mxu0 %v2219
    %2682 = vmatprep.mubr.bf16.mxu0 %v1160
    %2683 = vmatmul.mubr.bf16.gmra.mrb[0].mxu0 %v1159
    %v2684 = vpop.f32.mrb[0].mxu0
    %v2685 = vadd.f32 %v2644, %v2684
    %v2686 = vpop.f32.mrb[0].mxu0
    %v2687 = vadd.f32 %v2646, %v2686
    %v2688 = vpop.f32.mrb[0].mxu0
    %v2689 = vpop.f32.mrb[0].mxu0
    %2690 = vdwg.mxu0
    %2691 = vmatprep.subr.bf16.mxu0 %v2226
    %2692 = vmatpush1.bf16.msra.mxu0 %v2225
    %2693 = vmatprep.subr.bf16.mxu0 %v2232
    %2694 = vmatpush1.bf16.msra.mxu0 %v2231
    %2695 = vmatprep.subr.bf16.mxu0 %v2238
    %2696 = vmatpush1.bf16.msra.mxu0 %v2237
    %2697 = vmatprep.subr.bf16.mxu0 %v2244
    %2698 = vmatpush1.bf16.msra.mxu0 %v2243
    %2699 = vmatprep.subr.bf16.mxu0 %v2250
    %2700 = vmatpush1.bf16.msra.mxu0 %v2249
    %2701 = vmatprep.subr.bf16.mxu0 %v2256
    %2702 = vmatpush1.bf16.msra.mxu0 %v2255
    %2703 = vmatprep.subr.bf16.mxu0 %v2262
    %2704 = vmatpush1.bf16.msra.mxu0 %v2261
    %2705 = vmatprep.subr.bf16.mxu0 %v2268
    %2706 = vmatpush1.bf16.msra.mxu0 %v2267
    %2707 = vmatprep.subr.bf16.mxu0 %v2274
    %2708 = vmatpush1.bf16.msra.mxu0 %v2273
    %2709 = vmatprep.subr.bf16.mxu0 %v2280
    %2710 = vmatpush1.bf16.msra.mxu0 %v2279
    %2711 = vmatprep.subr.bf16.mxu0 %v2286
    %2712 = vmatpush1.bf16.msra.mxu0 %v2285
    %2713 = vmatprep.subr.bf16.mxu0 %v2292
    %2714 = vmatpush1.bf16.msra.mxu0 %v2291
    %2715 = vmatprep.subr.bf16.mxu0 %v2298
    %2716 = vmatpush1.bf16.msra.mxu0 %v2297
    %2717 = vmatprep.subr.bf16.mxu0 %v2304
    %2718 = vmatpush1.bf16.msra.mxu0 %v2303
    %2719 = vmatprep.subr.bf16.mxu0 %v2310
    %2720 = vmatpush1.bf16.msra.mxu0 %v2309
    %2721 = vmatprep.subr.bf16.mxu0 %v2316
    %2722 = vmatpush1.bf16.msra.mxu0 %v2315
    %2723 = vmatprep.mubr.bf16.mxu0 %v1162
    %2724 = vmatmul.mubr.bf16.gmra.mrb[0].mxu0 %v1161
    %v2725 = vpop.f32.mrb[0].mxu0
    %v2726 = vadd.f32 %v2685, %v2725
    %v2727 = vpop.f32.mrb[0].mxu0
    %v2728 = vadd.f32 %v2687, %v2727
    %v2729 = vpop.f32.mrb[0].mxu0
    %v2730 = vpop.f32.mrb[0].mxu0
    %2731 = vdwg.mxu0
    %2732 = vmatprep.subr.bf16.mxu0 %v2036
    %2733 = vmatpush1.bf16.msra.mxu0 %v2035
    %2734 = vmatprep.subr.bf16.mxu0 %v2042
    %2735 = vmatpush1.bf16.msra.mxu0 %v2041
    %2736 = vmatprep.subr.bf16.mxu0 %v2048
    %2737 = vmatpush1.bf16.msra.mxu0 %v2047
    %2738 = vmatprep.subr.bf16.mxu0 %v2054
    %2739 = vmatpush1.bf16.msra.mxu0 %v2053
    %2740 = vmatprep.subr.bf16.mxu0 %v2060
    %2741 = vmatpush1.bf16.msra.mxu0 %v2059
    %2742 = vmatprep.subr.bf16.mxu0 %v2066
    %2743 = vmatpush1.bf16.msra.mxu0 %v2065
    %2744 = vmatprep.subr.bf16.mxu0 %v2072
    %2745 = vmatpush1.bf16.msra.mxu0 %v2071
    %2746 = vmatprep.subr.bf16.mxu0 %v2078
    %2747 = vmatpush1.bf16.msra.mxu0 %v2077
    %2748 = vmatprep.subr.bf16.mxu0 %v2084
    %2749 = vmatpush1.bf16.msra.mxu0 %v2083
    %2750 = vmatprep.subr.bf16.mxu0 %v2090
    %2751 = vmatpush1.bf16.msra.mxu0 %v2089
    %2752 = vmatprep.subr.bf16.mxu0 %v2096
    %2753 = vmatpush1.bf16.msra.mxu0 %v2095
    %2754 = vmatprep.subr.bf16.mxu0 %v2102
    %2755 = vmatpush1.bf16.msra.mxu0 %v2101
    %2756 = vmatprep.subr.bf16.mxu0 %v2108
    %2757 = vmatpush1.bf16.msra.mxu0 %v2107
    %2758 = vmatprep.subr.bf16.mxu0 %v2114
    %2759 = vmatpush1.bf16.msra.mxu0 %v2113
    %2760 = vmatprep.subr.bf16.mxu0 %v2120
    %2761 = vmatpush1.bf16.msra.mxu0 %v2119
    %2762 = vmatprep.subr.bf16.mxu0 %v2126
    %2763 = vmatpush1.bf16.msra.mxu0 %v2125
    %2764 = vmatprep.mubr.bf16.mxu0 %v1158
    %2765 = vmatmul.mubr.bf16.gmra.mrb[0].mxu0 %v1157
    %v2766 = vpop.f32.mrb[0].mxu0
    %v2767 = vadd.f32 %v993, %v2766
    %v2768 = vpop.f32.mrb[0].mxu0
    %v2769 = vadd.f32 %v997, %v2768
    %v2770 = vpop.f32.mrb[0].mxu0
    %v2771 = vpop.f32.mrb[0].mxu0
    %2772 = vdwg.mxu0
    %2773 = vmatprep.subr.bf16.mxu0 %v2132
    %2774 = vmatpush1.bf16.msra.mxu0 %v2131
    %2775 = vmatprep.subr.bf16.mxu0 %v2138
    %2776 = vmatpush1.bf16.msra.mxu0 %v2137
    %2777 = vmatprep.subr.bf16.mxu0 %v2144
    %2778 = vmatpush1.bf16.msra.mxu0 %v2143
    %2779 = vmatprep.subr.bf16.mxu0 %v2150
    %2780 = vmatpush1.bf16.msra.mxu0 %v2149
    %2781 = vmatprep.subr.bf16.mxu0 %v2156
    %2782 = vmatpush1.bf16.msra.mxu0 %v2155
    %2783 = vmatprep.subr.bf16.mxu0 %v2162
    %2784 = vmatpush1.bf16.msra.mxu0 %v2161
    %2785 = vmatprep.subr.bf16.mxu0 %v2168
    %2786 = vmatpush1.bf16.msra.mxu0 %v2167
    %2787 = vmatprep.subr.bf16.mxu0 %v2174
    %2788 = vmatpush1.bf16.msra.mxu0 %v2173
    %2789 = vmatprep.subr.bf16.mxu0 %v2180
    %2790 = vmatpush1.bf16.msra.mxu0 %v2179
    %2791 = vmatprep.subr.bf16.mxu0 %v2186
    %2792 = vmatpush1.bf16.msra.mxu0 %v2185
    %2793 = vmatprep.subr.bf16.mxu0 %v2192
    %2794 = vmatpush1.bf16.msra.mxu0 %v2191
    %2795 = vmatprep.subr.bf16.mxu0 %v2198
    %2796 = vmatpush1.bf16.msra.mxu0 %v2197
    %2797 = vmatprep.subr.bf16.mxu0 %v2204
    %2798 = vmatpush1.bf16.msra.mxu0 %v2203
    %2799 = vmatprep.subr.bf16.mxu0 %v2210
    %2800 = vmatpush1.bf16.msra.mxu0 %v2209
    %2801 = vmatprep.subr.bf16.mxu0 %v2216
    %2802 = vmatpush1.bf16.msra.mxu0 %v2215
    %2803 = vmatprep.subr.bf16.mxu0 %v2222
    %2804 = vmatpush1.bf16.msra.mxu0 %v2221
    %2805 = vmatprep.mubr.bf16.mxu0 %v1160
    %2806 = vmatmul.mubr.bf16.gmra.mrb[0].mxu0 %v1159
    %v2807 = vpop.f32.mrb[0].mxu0
    %v2808 = vadd.f32 %v2767, %v2807
    %v2809 = vpop.f32.mrb[0].mxu0
    %v2810 = vadd.f32 %v2769, %v2809
    %v2811 = vpop.f32.mrb[0].mxu0
    %v2812 = vpop.f32.mrb[0].mxu0
    %2813 = vdwg.mxu0
    %2814 = vmatprep.subr.bf16.mxu0 %v2228
    %2815 = vmatpush1.bf16.msra.mxu0 %v2227
    %2816 = vmatprep.subr.bf16.mxu0 %v2234
    %2817 = vmatpush1.bf16.msra.mxu0 %v2233
    %2818 = vmatprep.subr.bf16.mxu0 %v2240
    %2819 = vmatpush1.bf16.msra.mxu0 %v2239
    %2820 = vmatprep.subr.bf16.mxu0 %v2246
    %2821 = vmatpush1.bf16.msra.mxu0 %v2245
    %2822 = vmatprep.subr.bf16.mxu0 %v2252
    %2823 = vmatpush1.bf16.msra.mxu0 %v2251
    %2824 = vmatprep.subr.bf16.mxu0 %v2258
    %2825 = vmatpush1.bf16.msra.mxu0 %v2257
    %2826 = vmatprep.subr.bf16.mxu0 %v2264
    %2827 = vmatpush1.bf16.msra.mxu0 %v2263
    %2828 = vmatprep.subr.bf16.mxu0 %v2270
    %2829 = vmatpush1.bf16.msra.mxu0 %v2269
    %2830 = vmatprep.subr.bf16.mxu0 %v2276
    %2831 = vmatpush1.bf16.msra.mxu0 %v2275
    %2832 = vmatprep.subr.bf16.mxu0 %v2282
    %2833 = vmatpush1.bf16.msra.mxu0 %v2281
    %2834 = vmatprep.subr.bf16.mxu0 %v2288
    %2835 = vmatpush1.bf16.msra.mxu0 %v2287
    %2836 = vmatprep.subr.bf16.mxu0 %v2294
    %2837 = vmatpush1.bf16.msra.mxu0 %v2293
    %2838 = vmatprep.subr.bf16.mxu0 %v2300
    %2839 = vmatpush1.bf16.msra.mxu0 %v2299
    %2840 = vmatprep.subr.bf16.mxu0 %v2306
    %2841 = vmatpush1.bf16.msra.mxu0 %v2305
    %2842 = vmatprep.subr.bf16.mxu0 %v2312
    %2843 = vmatpush1.bf16.msra.mxu0 %v2311
    %2844 = vmatprep.subr.bf16.mxu0 %v2318
    %2845 = vmatpush1.bf16.msra.mxu0 %v2317
    %2846 = vmatprep.mubr.bf16.mxu0 %v1162
    %2847 = vmatmul.mubr.bf16.gmra.mrb[0].mxu0 %v1161
    %v2848 = vpop.f32.mrb[0].mxu0
    %v2849 = vadd.f32 %v2808, %v2848
    %v2850 = vpop.f32.mrb[0].mxu0
    %v2851 = vadd.f32 %v2810, %v2850
    %v2852 = vpop.f32.mrb[0].mxu0
    %v2853 = vpop.f32.mrb[0].mxu0
    %2854 = vdwg.mxu0
    %2855 = vmatprep.subr.bf16.mxu0 %v2038
    %2856 = vmatpush1.bf16.msra.mxu0 %v2037
    %2857 = vmatprep.subr.bf16.mxu0 %v2044
    %2858 = vmatpush1.bf16.msra.mxu0 %v2043
    %2859 = vmatprep.subr.bf16.mxu0 %v2050
    %2860 = vmatpush1.bf16.msra.mxu0 %v2049
    %2861 = vmatprep.subr.bf16.mxu0 %v2056
    %2862 = vmatpush1.bf16.msra.mxu0 %v2055
    %2863 = vmatprep.subr.bf16.mxu0 %v2062
    %2864 = vmatpush1.bf16.msra.mxu0 %v2061
    %2865 = vmatprep.subr.bf16.mxu0 %v2068
    %2866 = vmatpush1.bf16.msra.mxu0 %v2067
    %2867 = vmatprep.subr.bf16.mxu0 %v2074
    %2868 = vmatpush1.bf16.msra.mxu0 %v2073
    %2869 = vmatprep.subr.bf16.mxu0 %v2080
    %2870 = vmatpush1.bf16.msra.mxu0 %v2079
    %2871 = vmatprep.subr.bf16.mxu0 %v2086
    %2872 = vmatpush1.bf16.msra.mxu0 %v2085
    %2873 = vmatprep.subr.bf16.mxu0 %v2092
    %2874 = vmatpush1.bf16.msra.mxu0 %v2091
    %2875 = vmatprep.subr.bf16.mxu0 %v2098
    %2876 = vmatpush1.bf16.msra.mxu0 %v2097
    %2877 = vmatprep.subr.bf16.mxu0 %v2104
    %2878 = vmatpush1.bf16.msra.mxu0 %v2103
    %2879 = vmatprep.subr.bf16.mxu0 %v2110
    %2880 = vmatpush1.bf16.msra.mxu0 %v2109
    %2881 = vmatprep.subr.bf16.mxu0 %v2116
    %2882 = vmatpush1.bf16.msra.mxu0 %v2115
    %2883 = vmatprep.subr.bf16.mxu0 %v2122
    %2884 = vmatpush1.bf16.msra.mxu0 %v2121
    %2885 = vmatprep.subr.bf16.mxu0 %v2128
    %2886 = vmatpush1.bf16.msra.mxu0 %v2127
    %2887 = vmatprep.mubr.bf16.mxu0 %v1158
    %2888 = vmatmul.mubr.bf16.gmra.mrb[0].mxu0 %v1157
    %v2889 = vpop.f32.mrb[0].mxu0
    %v2890 = vadd.f32 %v1001, %v2889
    %v2891 = vpop.f32.mrb[0].mxu0
    %v2892 = vadd.f32 %v1005, %v2891
    %v2893 = vpop.f32.mrb[0].mxu0
    %v2894 = vpop.f32.mrb[0].mxu0
    %2895 = vdwg.mxu0
    %2896 = vmatprep.subr.bf16.mxu0 %v2134
    %2897 = vmatpush1.bf16.msra.mxu0 %v2133
    %2898 = vmatprep.subr.bf16.mxu0 %v2140
    %2899 = vmatpush1.bf16.msra.mxu0 %v2139
    %2900 = vmatprep.subr.bf16.mxu0 %v2146
    %2901 = vmatpush1.bf16.msra.mxu0 %v2145
    %2902 = vmatprep.subr.bf16.mxu0 %v2152
    %2903 = vmatpush1.bf16.msra.mxu0 %v2151
    %2904 = vmatprep.subr.bf16.mxu0 %v2158
    %2905 = vmatpush1.bf16.msra.mxu0 %v2157
    %2906 = vmatprep.subr.bf16.mxu0 %v2164
    %2907 = vmatpush1.bf16.msra.mxu0 %v2163
    %2908 = vmatprep.subr.bf16.mxu0 %v2170
    %2909 = vmatpush1.bf16.msra.mxu0 %v2169
    %2910 = vmatprep.subr.bf16.mxu0 %v2176
    %2911 = vmatpush1.bf16.msra.mxu0 %v2175
    %2912 = vmatprep.subr.bf16.mxu0 %v2182
    %2913 = vmatpush1.bf16.msra.mxu0 %v2181
    %2914 = vmatprep.subr.bf16.mxu0 %v2188
    %2915 = vmatpush1.bf16.msra.mxu0 %v2187
    %2916 = vmatprep.subr.bf16.mxu0 %v2194
    %2917 = vmatpush1.bf16.msra.mxu0 %v2193
    %2918 = vmatprep.subr.bf16.mxu0 %v2200
    %2919 = vmatpush1.bf16.msra.mxu0 %v2199
    %2920 = vmatprep.subr.bf16.mxu0 %v2206
    %2921 = vmatpush1.bf16.msra.mxu0 %v2205
    %2922 = vmatprep.subr.bf16.mxu0 %v2212
    %2923 = vmatpush1.bf16.msra.mxu0 %v2211
    %2924 = vmatprep.subr.bf16.mxu0 %v2218
    %2925 = vmatpush1.bf16.msra.mxu0 %v2217
    %2926 = vmatprep.subr.bf16.mxu0 %v2224
    %2927 = vmatpush1.bf16.msra.mxu0 %v2223
    %2928 = vmatprep.mubr.bf16.mxu0 %v1160
    %2929 = vmatmul.mubr.bf16.gmra.mrb[0].mxu0 %v1159
    %v2930 = vpop.f32.mrb[0].mxu0
    %v2931 = vadd.f32 %v2890, %v2930
    %v2932 = vpop.f32.mrb[0].mxu0
    %v2933 = vadd.f32 %v2892, %v2932
    %v2934 = vpop.f32.mrb[0].mxu0
    %v2935 = vpop.f32.mrb[0].mxu0
    %2936 = vdwg.mxu0
    %2937 = vmatprep.subr.bf16.mxu0 %v2230
    %2938 = vmatpush1.bf16.msra.mxu0 %v2229
    %2939 = vmatprep.subr.bf16.mxu0 %v2236
    %2940 = vmatpush1.bf16.msra.mxu0 %v2235
    %2941 = vmatprep.subr.bf16.mxu0 %v2242
    %2942 = vmatpush1.bf16.msra.mxu0 %v2241
    %2943 = vmatprep.subr.bf16.mxu0 %v2248
    %2944 = vmatpush1.bf16.msra.mxu0 %v2247
    %2945 = vmatprep.subr.bf16.mxu0 %v2254
    %2946 = vmatpush1.bf16.msra.mxu0 %v2253
    %2947 = vmatprep.subr.bf16.mxu0 %v2260
    %2948 = vmatpush1.bf16.msra.mxu0 %v2259
    %2949 = vmatprep.subr.bf16.mxu0 %v2266
    %2950 = vmatpush1.bf16.msra.mxu0 %v2265
    %2951 = vmatprep.subr.bf16.mxu0 %v2272
    %2952 = vmatpush1.bf16.msra.mxu0 %v2271
    %2953 = vmatprep.subr.bf16.mxu0 %v2278
    %2954 = vmatpush1.bf16.msra.mxu0 %v2277
    %2955 = vmatprep.subr.bf16.mxu0 %v2284
    %2956 = vmatpush1.bf16.msra.mxu0 %v2283
    %2957 = vmatprep.subr.bf16.mxu0 %v2290
    %2958 = vmatpush1.bf16.msra.mxu0 %v2289
    %2959 = vmatprep.subr.bf16.mxu0 %v2296
    %2960 = vmatpush1.bf16.msra.mxu0 %v2295
    %2961 = vmatprep.subr.bf16.mxu0 %v2302
    %2962 = vmatpush1.bf16.msra.mxu0 %v2301
    %2963 = vmatprep.subr.bf16.mxu0 %v2308
    %2964 = vmatpush1.bf16.msra.mxu0 %v2307
    %2965 = vmatprep.subr.bf16.mxu0 %v2314
    %2966 = vmatpush1.bf16.msra.mxu0 %v2313
    %2967 = vmatprep.subr.bf16.mxu0 %v2320
    %2968 = vmatpush1.bf16.msra.mxu0 %v2319
    %2969 = vmatprep.mubr.bf16.mxu0 %v1162
    %2970 = vmatmul.mubr.bf16.gmra.mrb[0].mxu0 %v1161
    %v2971 = vpop.f32.mrb[0].mxu0
    %v2972 = vadd.f32 %v2931, %v2971
    %v2973 = vpop.f32.mrb[0].mxu0
    %v2974 = vadd.f32 %v2933, %v2973
    %v2975 = vpop.f32.mrb[0].mxu0
    %v2976 = vpop.f32.mrb[0].mxu0
    %2977 = vdwg.mxu0
    %v2978 = vpack.c.bf16 %v2726, %v2726
    %v2979 = vpack.c.bf16 %v2728, %v2728
    %v2980 = vpack.c.bf16 %v2849, %v2849
    %v2981 = vpack.c.bf16 %v2851, %v2851
    %v2982 = vpack.c.bf16 %v2972, %v2972
    %v2983 = vpack.c.bf16 %v2974, %v2974
    %v2984 = vld [vmem:[#allocation8] sm:$0xff]
    %v2985 = vld [vmem:[#allocation8 + $0x8] sm:$0xff]
    %v2986 = vld [vmem:[#allocation8 + $0x10] sm:$0xff]
    %v2987 = vld [vmem:[#allocation8 + $0x18] sm:$0xff]
    %v2988 = vld [vmem:[#allocation8 + $0x20] sm:$0xff]
    %v2989 = vld [vmem:[#allocation8 + $0x28] sm:$0xff]
    %v2990 = vld [vmem:[#allocation8 + $0x30] sm:$0xff]
    %v2991 = vld [vmem:[#allocation8 + $0x38] sm:$0xff]
    %v2992 = vld [vmem:[#allocation8 + $0x40] sm:$0xff]
    %v2993 = vld [vmem:[#allocation8 + $0x48] sm:$0xff]
    %v2994 = vld [vmem:[#allocation8 + $0x50] sm:$0xff]
    %v2995 = vld [vmem:[#allocation8 + $0x58] sm:$0xff]
    %v2996 = vld [vmem:[#allocation8 + $0x60] sm:$0xff]
    %v2997 = vld [vmem:[#allocation8 + $0x68] sm:$0xff]
    %v2998 = vld [vmem:[#allocation8 + $0x70] sm:$0xff]
    %v2999 = vld [vmem:[#allocation8 + $0x78] sm:$0xff]
    %v3000 = vld [vmem:[#allocation8 + $0x80] sm:$0xff]
    %v3001 = vld [vmem:[#allocation8 + $0x88] sm:$0xff]
    %v3002 = vld [vmem:[#allocation8 + $0x90] sm:$0xff]
    %v3003 = vld [vmem:[#allocation8 + $0x98] sm:$0xff]
    %v3004 = vld [vmem:[#allocation8 + $0xa0] sm:$0xff]
    %v3005 = vld [vmem:[#allocation8 + $0xa8] sm:$0xff]
    %v3006 = vld [vmem:[#allocation8 + $0xb0] sm:$0xff]
    %v3007 = vld [vmem:[#allocation8 + $0xb8] sm:$0xff]
    %v3008 = vld [vmem:[#allocation8 + $0xc0] sm:$0xff]
    %v3009 = vld [vmem:[#allocation8 + $0xc8] sm:$0xff]
    %v3010 = vld [vmem:[#allocation8 + $0xd0] sm:$0xff]
    %v3011 = vld [vmem:[#allocation8 + $0xd8] sm:$0xff]
    %v3012 = vld [vmem:[#allocation8 + $0xe0] sm:$0xff]
    %v3013 = vld [vmem:[#allocation8 + $0xe8] sm:$0xff]
    %v3014 = vld [vmem:[#allocation8 + $0xf0] sm:$0xff]
    %v3015 = vld [vmem:[#allocation8 + $0xf8] sm:$0xff]
    %v3016 = vld [vmem:[#allocation8 + $0x100] sm:$0xff]
    %v3017 = vld [vmem:[#allocation8 + $0x108] sm:$0xff]
    %v3018 = vld [vmem:[#allocation8 + $0x110] sm:$0xff]
    %v3019 = vld [vmem:[#allocation8 + $0x118] sm:$0xff]
    %v3020 = vld [vmem:[#allocation8 + $0x120] sm:$0xff]
    %v3021 = vld [vmem:[#allocation8 + $0x128] sm:$0xff]
    %v3022 = vld [vmem:[#allocation8 + $0x130] sm:$0xff]
    %v3023 = vld [vmem:[#allocation8 + $0x138] sm:$0xff]
    %v3024 = vld [vmem:[#allocation8 + $0x140] sm:$0xff]
    %v3025 = vld [vmem:[#allocation8 + $0x148] sm:$0xff]
    %v3026 = vld [vmem:[#allocation8 + $0x150] sm:$0xff]
    %v3027 = vld [vmem:[#allocation8 + $0x158] sm:$0xff]
    %v3028 = vld [vmem:[#allocation8 + $0x160] sm:$0xff]
    %v3029 = vld [vmem:[#allocation8 + $0x168] sm:$0xff]
    %v3030 = vld [vmem:[#allocation8 + $0x170] sm:$0xff]
    %v3031 = vld [vmem:[#allocation8 + $0x178] sm:$0xff]
    %v3032 = vld [vmem:[#allocation8 + $0x180] sm:$0xff]
    %v3033 = vld [vmem:[#allocation8 + $0x188] sm:$0xff]
    %v3034 = vld [vmem:[#allocation8 + $0x190] sm:$0xff]
    %v3035 = vld [vmem:[#allocation8 + $0x198] sm:$0xff]
    %v3036 = vld [vmem:[#allocation8 + $0x1a0] sm:$0xff]
    %v3037 = vld [vmem:[#allocation8 + $0x1a8] sm:$0xff]
    %v3038 = vld [vmem:[#allocation8 + $0x1b0] sm:$0xff]
    %v3039 = vld [vmem:[#allocation8 + $0x1b8] sm:$0xff]
    %v3040 = vld [vmem:[#allocation8 + $0x1c0] sm:$0xff]
    %v3041 = vld [vmem:[#allocation8 + $0x1c8] sm:$0xff]
    %v3042 = vld [vmem:[#allocation8 + $0x1d0] sm:$0xff]
    %v3043 = vld [vmem:[#allocation8 + $0x1d8] sm:$0xff]
    %v3044 = vld [vmem:[#allocation8 + $0x1e0] sm:$0xff]
    %v3045 = vld [vmem:[#allocation8 + $0x1e8] sm:$0xff]
    %v3046 = vld [vmem:[#allocation8 + $0x1f0] sm:$0xff]
    %v3047 = vld [vmem:[#allocation8 + $0x1f8] sm:$0xff]
    %v3048 = vld [vmem:[#allocation8 + $0x200] sm:$0xff]
    %v3049 = vld [vmem:[#allocation8 + $0x208] sm:$0xff]
    %v3050 = vld [vmem:[#allocation8 + $0x210] sm:$0xff]
    %v3051 = vld [vmem:[#allocation8 + $0x218] sm:$0xff]
    %v3052 = vld [vmem:[#allocation8 + $0x220] sm:$0xff]
    %v3053 = vld [vmem:[#allocation8 + $0x228] sm:$0xff]
    %v3054 = vld [vmem:[#allocation8 + $0x230] sm:$0xff]
    %v3055 = vld [vmem:[#allocation8 + $0x238] sm:$0xff]
    %v3056 = vld [vmem:[#allocation8 + $0x240] sm:$0xff]
    %v3057 = vld [vmem:[#allocation8 + $0x248] sm:$0xff]
    %v3058 = vld [vmem:[#allocation8 + $0x250] sm:$0xff]
    %v3059 = vld [vmem:[#allocation8 + $0x258] sm:$0xff]
    %v3060 = vld [vmem:[#allocation8 + $0x260] sm:$0xff]
    %v3061 = vld [vmem:[#allocation8 + $0x268] sm:$0xff]
    %v3062 = vld [vmem:[#allocation8 + $0x270] sm:$0xff]
    %v3063 = vld [vmem:[#allocation8 + $0x278] sm:$0xff]
    %v3064 = vld [vmem:[#allocation8 + $0x280] sm:$0xff]
    %v3065 = vld [vmem:[#allocation8 + $0x288] sm:$0xff]
    %v3066 = vld [vmem:[#allocation8 + $0x290] sm:$0xff]
    %v3067 = vld [vmem:[#allocation8 + $0x298] sm:$0xff]
    %v3068 = vld [vmem:[#allocation8 + $0x2a0] sm:$0xff]
    %v3069 = vld [vmem:[#allocation8 + $0x2a8] sm:$0xff]
    %v3070 = vld [vmem:[#allocation8 + $0x2b0] sm:$0xff]
    %v3071 = vld [vmem:[#allocation8 + $0x2b8] sm:$0xff]
    %v3072 = vld [vmem:[#allocation8 + $0x2c0] sm:$0xff]
    %v3073 = vld [vmem:[#allocation8 + $0x2c8] sm:$0xff]
    %v3074 = vld [vmem:[#allocation8 + $0x2d0] sm:$0xff]
    %v3075 = vld [vmem:[#allocation8 + $0x2d8] sm:$0xff]
    %v3076 = vld [vmem:[#allocation8 + $0x2e0] sm:$0xff]
    %v3077 = vld [vmem:[#allocation8 + $0x2e8] sm:$0xff]
    %v3078 = vld [vmem:[#allocation8 + $0x2f0] sm:$0xff]
    %v3079 = vld [vmem:[#allocation8 + $0x2f8] sm:$0xff]
    %v3080 = vld [vmem:[#allocation8 + $0x300] sm:$0xff]
    %v3081 = vld [vmem:[#allocation8 + $0x308] sm:$0xff]
    %v3082 = vld [vmem:[#allocation8 + $0x310] sm:$0xff]
    %v3083 = vld [vmem:[#allocation8 + $0x318] sm:$0xff]
    %v3084 = vld [vmem:[#allocation8 + $0x320] sm:$0xff]
    %v3085 = vld [vmem:[#allocation8 + $0x328] sm:$0xff]
    %v3086 = vld [vmem:[#allocation8 + $0x330] sm:$0xff]
    %v3087 = vld [vmem:[#allocation8 + $0x338] sm:$0xff]
    %v3088 = vld [vmem:[#allocation8 + $0x340] sm:$0xff]
    %v3089 = vld [vmem:[#allocation8 + $0x348] sm:$0xff]
    %v3090 = vld [vmem:[#allocation8 + $0x350] sm:$0xff]
    %v3091 = vld [vmem:[#allocation8 + $0x358] sm:$0xff]
    %v3092 = vld [vmem:[#allocation8 + $0x360] sm:$0xff]
    %v3093 = vld [vmem:[#allocation8 + $0x368] sm:$0xff]
    %v3094 = vld [vmem:[#allocation8 + $0x370] sm:$0xff]
    %v3095 = vld [vmem:[#allocation8 + $0x378] sm:$0xff]
    %v3096 = vld [vmem:[#allocation8 + $0x380] sm:$0xff]
    %v3097 = vld [vmem:[#allocation8 + $0x388] sm:$0xff]
    %v3098 = vld [vmem:[#allocation8 + $0x390] sm:$0xff]
    %v3099 = vld [vmem:[#allocation8 + $0x398] sm:$0xff]
    %v3100 = vld [vmem:[#allocation8 + $0x3a0] sm:$0xff]
    %v3101 = vld [vmem:[#allocation8 + $0x3a8] sm:$0xff]
    %v3102 = vld [vmem:[#allocation8 + $0x3b0] sm:$0xff]
    %v3103 = vld [vmem:[#allocation8 + $0x3b8] sm:$0xff]
    %v3104 = vld [vmem:[#allocation8 + $0x3c0] sm:$0xff]
    %v3105 = vld [vmem:[#allocation8 + $0x3c8] sm:$0xff]
    %v3106 = vld [vmem:[#allocation8 + $0x3d0] sm:$0xff]
    %v3107 = vld [vmem:[#allocation8 + $0x3d8] sm:$0xff]
    %v3108 = vld [vmem:[#allocation8 + $0x3e0] sm:$0xff]
    %v3109 = vld [vmem:[#allocation8 + $0x3e8] sm:$0xff]
    %v3110 = vld [vmem:[#allocation8 + $0x3f0] sm:$0xff]
    %v3111 = vld [vmem:[#allocation8 + $0x3f8] sm:$0xff]
    %v3112 = vld [vmem:[#allocation8 + $0x400] sm:$0xff]
    %v3113 = vld [vmem:[#allocation8 + $0x408] sm:$0xff]
    %v3114 = vld [vmem:[#allocation8 + $0x410] sm:$0xff]
    %v3115 = vld [vmem:[#allocation8 + $0x418] sm:$0xff]
    %v3116 = vld [vmem:[#allocation8 + $0x420] sm:$0xff]
    %v3117 = vld [vmem:[#allocation8 + $0x428] sm:$0xff]
    %v3118 = vld [vmem:[#allocation8 + $0x430] sm:$0xff]
    %v3119 = vld [vmem:[#allocation8 + $0x438] sm:$0xff]
    %v3120 = vld [vmem:[#allocation8 + $0x440] sm:$0xff]
    %v3121 = vld [vmem:[#allocation8 + $0x448] sm:$0xff]
    %v3122 = vld [vmem:[#allocation8 + $0x450] sm:$0xff]
    %v3123 = vld [vmem:[#allocation8 + $0x458] sm:$0xff]
    %v3124 = vld [vmem:[#allocation8 + $0x460] sm:$0xff]
    %v3125 = vld [vmem:[#allocation8 + $0x468] sm:$0xff]
    %v3126 = vld [vmem:[#allocation8 + $0x470] sm:$0xff]
    %v3127 = vld [vmem:[#allocation8 + $0x478] sm:$0xff]
    %v3128 = vld [vmem:[#allocation8 + $0x480] sm:$0xff]
    %v3129 = vld [vmem:[#allocation8 + $0x488] sm:$0xff]
    %v3130 = vld [vmem:[#allocation8 + $0x490] sm:$0xff]
    %v3131 = vld [vmem:[#allocation8 + $0x498] sm:$0xff]
    %v3132 = vld [vmem:[#allocation8 + $0x4a0] sm:$0xff]
    %v3133 = vld [vmem:[#allocation8 + $0x4a8] sm:$0xff]
    %v3134 = vld [vmem:[#allocation8 + $0x4b0] sm:$0xff]
    %v3135 = vld [vmem:[#allocation8 + $0x4b8] sm:$0xff]
    %v3136 = vld [vmem:[#allocation8 + $0x4c0] sm:$0xff]
    %v3137 = vld [vmem:[#allocation8 + $0x4c8] sm:$0xff]
    %v3138 = vld [vmem:[#allocation8 + $0x4d0] sm:$0xff]
    %v3139 = vld [vmem:[#allocation8 + $0x4d8] sm:$0xff]
    %v3140 = vld [vmem:[#allocation8 + $0x4e0] sm:$0xff]
    %v3141 = vld [vmem:[#allocation8 + $0x4e8] sm:$0xff]
    %v3142 = vld [vmem:[#allocation8 + $0x4f0] sm:$0xff]
    %v3143 = vld [vmem:[#allocation8 + $0x4f8] sm:$0xff]
    %v3144 = vld [vmem:[#allocation8 + $0x500] sm:$0xff]
    %v3145 = vld [vmem:[#allocation8 + $0x508] sm:$0xff]
    %v3146 = vld [vmem:[#allocation8 + $0x510] sm:$0xff]
    %v3147 = vld [vmem:[#allocation8 + $0x518] sm:$0xff]
    %v3148 = vld [vmem:[#allocation8 + $0x520] sm:$0xff]
    %v3149 = vld [vmem:[#allocation8 + $0x528] sm:$0xff]
    %v3150 = vld [vmem:[#allocation8 + $0x530] sm:$0xff]
    %v3151 = vld [vmem:[#allocation8 + $0x538] sm:$0xff]
    %v3152 = vld [vmem:[#allocation8 + $0x540] sm:$0xff]
    %v3153 = vld [vmem:[#allocation8 + $0x548] sm:$0xff]
    %v3154 = vld [vmem:[#allocation8 + $0x550] sm:$0xff]
    %v3155 = vld [vmem:[#allocation8 + $0x558] sm:$0xff]
    %v3156 = vld [vmem:[#allocation8 + $0x560] sm:$0xff]
    %v3157 = vld [vmem:[#allocation8 + $0x568] sm:$0xff]
    %v3158 = vld [vmem:[#allocation8 + $0x570] sm:$0xff]
    %v3159 = vld [vmem:[#allocation8 + $0x578] sm:$0xff]
    %v3160 = vld [vmem:[#allocation8 + $0x580] sm:$0xff]
    %v3161 = vld [vmem:[#allocation8 + $0x588] sm:$0xff]
    %v3162 = vld [vmem:[#allocation8 + $0x590] sm:$0xff]
    %v3163 = vld [vmem:[#allocation8 + $0x598] sm:$0xff]
    %v3164 = vld [vmem:[#allocation8 + $0x5a0] sm:$0xff]
    %v3165 = vld [vmem:[#allocation8 + $0x5a8] sm:$0xff]
    %v3166 = vld [vmem:[#allocation8 + $0x5b0] sm:$0xff]
    %v3167 = vld [vmem:[#allocation8 + $0x5b8] sm:$0xff]
    %v3168 = vld [vmem:[#allocation8 + $0x5c0] sm:$0xff]
    %v3169 = vld [vmem:[#allocation8 + $0x5c8] sm:$0xff]
    %v3170 = vld [vmem:[#allocation8 + $0x5d0] sm:$0xff]
    %v3171 = vld [vmem:[#allocation8 + $0x5d8] sm:$0xff]
    %v3172 = vld [vmem:[#allocation8 + $0x5e0] sm:$0xff]
    %v3173 = vld [vmem:[#allocation8 + $0x5e8] sm:$0xff]
    %v3174 = vld [vmem:[#allocation8 + $0x5f0] sm:$0xff]
    %v3175 = vld [vmem:[#allocation8 + $0x5f8] sm:$0xff]
    %v3176 = vld [vmem:[#allocation10] sm:$0xf]
    %v3178 = vlaneseq
    %v3179 = vshrl.u32 %v3178, 7
    %v3180 = vsub.s32 0, %v3179
    %v3181 = vrot.slane %v3176, %v3180
    %v3182 = vlaneseq
    %v3183 = vshrl.u32 %v3182, 7
    %v3184 = vsub.s32 1, %v3183
    %v3185 = vrot.slane %v3176, %v3184
    %v3186 = vlaneseq
    %v3187 = vshrl.u32 %v3186, 7
    %v3188 = vsub.s32 2, %v3187
    %v3189 = vrot.slane %v3176, %v3188
    %v3190 = vlaneseq
    %v3191 = vshrl.u32 %v3190, 7
    %v3192 = vsub.s32 3, %v3191
    %v3193 = vrot.slane %v3176, %v3192
    %v3390 = vunpack.c.l.b16 %v2984
    %v3391 = vunpack.c.h.b16 %v2984
    %v3392 = vunpack.c.l.b16 %v2985
    %v3393 = vunpack.c.h.b16 %v2985
    %v3394 = vunpack.c.l.b16 %v2986
    %v3395 = vunpack.c.h.b16 %v2986
    %v3396 = vunpack.c.l.b16 %v2987
    %v3397 = vunpack.c.h.b16 %v2987
    %v3398 = vunpack.c.l.b16 %v2988
    %v3399 = vunpack.c.h.b16 %v2988
    %v3400 = vunpack.c.l.b16 %v2989
    %v3401 = vunpack.c.h.b16 %v2989
    %v3402 = vunpack.c.l.b16 %v2990
    %v3403 = vunpack.c.h.b16 %v2990
    %v3404 = vunpack.c.l.b16 %v2991
    %v3405 = vunpack.c.h.b16 %v2991
    %v3406 = vunpack.c.l.b16 %v2992
    %v3407 = vunpack.c.h.b16 %v2992
    %v3408 = vunpack.c.l.b16 %v2993
    %v3409 = vunpack.c.h.b16 %v2993
    %v3410 = vunpack.c.l.b16 %v2994
    %v3411 = vunpack.c.h.b16 %v2994
    %v3412 = vunpack.c.l.b16 %v2995
    %v3413 = vunpack.c.h.b16 %v2995
    %v3414 = vunpack.c.l.b16 %v2996
    %v3415 = vunpack.c.h.b16 %v2996
    %v3416 = vunpack.c.l.b16 %v2997
    %v3417 = vunpack.c.h.b16 %v2997
    %v3418 = vunpack.c.l.b16 %v2998
    %v3419 = vunpack.c.h.b16 %v2998
    %v3420 = vunpack.c.l.b16 %v2999
    %v3421 = vunpack.c.h.b16 %v2999
    %v3422 = vunpack.c.l.b16 %v3000
    %v3423 = vunpack.c.h.b16 %v3000
    %v3424 = vunpack.c.l.b16 %v3001
    %v3425 = vunpack.c.h.b16 %v3001
    %v3426 = vunpack.c.l.b16 %v3002
    %v3427 = vunpack.c.h.b16 %v3002
    %v3428 = vunpack.c.l.b16 %v3003
    %v3429 = vunpack.c.h.b16 %v3003
    %v3430 = vunpack.c.l.b16 %v3004
    %v3431 = vunpack.c.h.b16 %v3004
    %v3432 = vunpack.c.l.b16 %v3005
    %v3433 = vunpack.c.h.b16 %v3005
    %v3434 = vunpack.c.l.b16 %v3006
    %v3435 = vunpack.c.h.b16 %v3006
    %v3436 = vunpack.c.l.b16 %v3007
    %v3437 = vunpack.c.h.b16 %v3007
    %v3438 = vunpack.c.l.b16 %v3008
    %v3439 = vunpack.c.h.b16 %v3008
    %v3440 = vunpack.c.l.b16 %v3009
    %v3441 = vunpack.c.h.b16 %v3009
    %v3442 = vunpack.c.l.b16 %v3010
    %v3443 = vunpack.c.h.b16 %v3010
    %v3444 = vunpack.c.l.b16 %v3011
    %v3445 = vunpack.c.h.b16 %v3011
    %v3446 = vunpack.c.l.b16 %v3012
    %v3447 = vunpack.c.h.b16 %v3012
    %v3448 = vunpack.c.l.b16 %v3013
    %v3449 = vunpack.c.h.b16 %v3013
    %v3450 = vunpack.c.l.b16 %v3014
    %v3451 = vunpack.c.h.b16 %v3014
    %v3452 = vunpack.c.l.b16 %v3015
    %v3453 = vunpack.c.h.b16 %v3015
    %v3454 = vunpack.c.l.b16 %v3016
    %v3455 = vunpack.c.h.b16 %v3016
    %v3456 = vunpack.c.l.b16 %v3017
    %v3457 = vunpack.c.h.b16 %v3017
    %v3458 = vunpack.c.l.b16 %v3018
    %v3459 = vunpack.c.h.b16 %v3018
    %v3460 = vunpack.c.l.b16 %v3019
    %v3461 = vunpack.c.h.b16 %v3019
    %v3462 = vunpack.c.l.b16 %v3020
    %v3463 = vunpack.c.h.b16 %v3020
    %v3464 = vunpack.c.l.b16 %v3021
    %v3465 = vunpack.c.h.b16 %v3021
    %v3466 = vunpack.c.l.b16 %v3022
    %v3467 = vunpack.c.h.b16 %v3022
    %v3468 = vunpack.c.l.b16 %v3023
    %v3469 = vunpack.c.h.b16 %v3023
    %v3470 = vunpack.c.l.b16 %v3024
    %v3471 = vunpack.c.h.b16 %v3024
    %v3472 = vunpack.c.l.b16 %v3025
    %v3473 = vunpack.c.h.b16 %v3025
    %v3474 = vunpack.c.l.b16 %v3026
    %v3475 = vunpack.c.h.b16 %v3026
    %v3476 = vunpack.c.l.b16 %v3027
    %v3477 = vunpack.c.h.b16 %v3027
    %v3478 = vunpack.c.l.b16 %v3028
    %v3479 = vunpack.c.h.b16 %v3028
    %v3480 = vunpack.c.l.b16 %v3029
    %v3481 = vunpack.c.h.b16 %v3029
    %v3482 = vunpack.c.l.b16 %v3030
    %v3483 = vunpack.c.h.b16 %v3030
    %v3484 = vunpack.c.l.b16 %v3031
    %v3485 = vunpack.c.h.b16 %v3031
    %v3486 = vunpack.c.l.b16 %v3032
    %v3487 = vunpack.c.h.b16 %v3032
    %v3488 = vunpack.c.l.b16 %v3033
    %v3489 = vunpack.c.h.b16 %v3033
    %v3490 = vunpack.c.l.b16 %v3034
    %v3491 = vunpack.c.h.b16 %v3034
    %v3492 = vunpack.c.l.b16 %v3035
    %v3493 = vunpack.c.h.b16 %v3035
    %v3494 = vunpack.c.l.b16 %v3036
    %v3495 = vunpack.c.h.b16 %v3036
    %v3496 = vunpack.c.l.b16 %v3037
    %v3497 = vunpack.c.h.b16 %v3037
    %v3498 = vunpack.c.l.b16 %v3038
    %v3499 = vunpack.c.h.b16 %v3038
    %v3500 = vunpack.c.l.b16 %v3039
    %v3501 = vunpack.c.h.b16 %v3039
    %v3502 = vunpack.c.l.b16 %v3040
    %v3503 = vunpack.c.h.b16 %v3040
    %v3504 = vunpack.c.l.b16 %v3041
    %v3505 = vunpack.c.h.b16 %v3041
    %v3506 = vunpack.c.l.b16 %v3042
    %v3507 = vunpack.c.h.b16 %v3042
    %v3508 = vunpack.c.l.b16 %v3043
    %v3509 = vunpack.c.h.b16 %v3043
    %v3510 = vunpack.c.l.b16 %v3044
    %v3511 = vunpack.c.h.b16 %v3044
    %v3512 = vunpack.c.l.b16 %v3045
    %v3513 = vunpack.c.h.b16 %v3045
    %v3514 = vunpack.c.l.b16 %v3046
    %v3515 = vunpack.c.h.b16 %v3046
    %v3516 = vunpack.c.l.b16 %v3047
    %v3517 = vunpack.c.h.b16 %v3047
    %v3518 = vunpack.c.l.b16 %v3048
    %v3519 = vunpack.c.h.b16 %v3048
    %v3520 = vunpack.c.l.b16 %v3049
    %v3521 = vunpack.c.h.b16 %v3049
    %v3522 = vunpack.c.l.b16 %v3050
    %v3523 = vunpack.c.h.b16 %v3050
    %v3524 = vunpack.c.l.b16 %v3051
    %v3525 = vunpack.c.h.b16 %v3051
    %v3526 = vunpack.c.l.b16 %v3052
    %v3527 = vunpack.c.h.b16 %v3052
    %v3528 = vunpack.c.l.b16 %v3053
    %v3529 = vunpack.c.h.b16 %v3053
    %v3530 = vunpack.c.l.b16 %v3054
    %v3531 = vunpack.c.h.b16 %v3054
    %v3532 = vunpack.c.l.b16 %v3055
    %v3533 = vunpack.c.h.b16 %v3055
    %v3534 = vunpack.c.l.b16 %v3056
    %v3535 = vunpack.c.h.b16 %v3056
    %v3536 = vunpack.c.l.b16 %v3057
    %v3537 = vunpack.c.h.b16 %v3057
    %v3538 = vunpack.c.l.b16 %v3058
    %v3539 = vunpack.c.h.b16 %v3058
    %v3540 = vunpack.c.l.b16 %v3059
    %v3541 = vunpack.c.h.b16 %v3059
    %v3542 = vunpack.c.l.b16 %v3060
    %v3543 = vunpack.c.h.b16 %v3060
    %v3544 = vunpack.c.l.b16 %v3061
    %v3545 = vunpack.c.h.b16 %v3061
    %v3546 = vunpack.c.l.b16 %v3062
    %v3547 = vunpack.c.h.b16 %v3062
    %v3548 = vunpack.c.l.b16 %v3063
    %v3549 = vunpack.c.h.b16 %v3063
    %v3550 = vunpack.c.l.b16 %v3064
    %v3551 = vunpack.c.h.b16 %v3064
    %v3552 = vunpack.c.l.b16 %v3065
    %v3553 = vunpack.c.h.b16 %v3065
    %v3554 = vunpack.c.l.b16 %v3066
    %v3555 = vunpack.c.h.b16 %v3066
    %v3556 = vunpack.c.l.b16 %v3067
    %v3557 = vunpack.c.h.b16 %v3067
    %v3558 = vunpack.c.l.b16 %v3068
    %v3559 = vunpack.c.h.b16 %v3068
    %v3560 = vunpack.c.l.b16 %v3069
    %v3561 = vunpack.c.h.b16 %v3069
    %v3562 = vunpack.c.l.b16 %v3070
    %v3563 = vunpack.c.h.b16 %v3070
    %v3564 = vunpack.c.l.b16 %v3071
    %v3565 = vunpack.c.h.b16 %v3071
    %v3566 = vunpack.c.l.b16 %v3072
    %v3567 = vunpack.c.h.b16 %v3072
    %v3568 = vunpack.c.l.b16 %v3073
    %v3569 = vunpack.c.h.b16 %v3073
    %v3570 = vunpack.c.l.b16 %v3074
    %v3571 = vunpack.c.h.b16 %v3074
    %v3572 = vunpack.c.l.b16 %v3075
    %v3573 = vunpack.c.h.b16 %v3075
    %v3574 = vunpack.c.l.b16 %v3076
    %v3575 = vunpack.c.h.b16 %v3076
    %v3576 = vunpack.c.l.b16 %v3077
    %v3577 = vunpack.c.h.b16 %v3077
    %v3578 = vunpack.c.l.b16 %v3078
    %v3579 = vunpack.c.h.b16 %v3078
    %v3580 = vunpack.c.l.b16 %v3079
    %v3581 = vunpack.c.h.b16 %v3079
    %v3582 = vunpack.c.l.b16 %v3080
    %v3583 = vunpack.c.h.b16 %v3080
    %v3584 = vunpack.c.l.b16 %v3081
    %v3585 = vunpack.c.h.b16 %v3081
    %v3586 = vunpack.c.l.b16 %v3082
    %v3587 = vunpack.c.h.b16 %v3082
    %v3588 = vunpack.c.l.b16 %v3083
    %v3589 = vunpack.c.h.b16 %v3083
    %v3590 = vunpack.c.l.b16 %v3084
    %v3591 = vunpack.c.h.b16 %v3084
    %v3592 = vunpack.c.l.b16 %v3085
    %v3593 = vunpack.c.h.b16 %v3085
    %v3594 = vunpack.c.l.b16 %v3086
    %v3595 = vunpack.c.h.b16 %v3086
    %v3596 = vunpack.c.l.b16 %v3087
    %v3597 = vunpack.c.h.b16 %v3087
    %v3598 = vunpack.c.l.b16 %v3088
    %v3599 = vunpack.c.h.b16 %v3088
    %v3600 = vunpack.c.l.b16 %v3089
    %v3601 = vunpack.c.h.b16 %v3089
    %v3602 = vunpack.c.l.b16 %v3090
    %v3603 = vunpack.c.h.b16 %v3090
    %v3604 = vunpack.c.l.b16 %v3091
    %v3605 = vunpack.c.h.b16 %v3091
    %v3606 = vunpack.c.l.b16 %v3092
    %v3607 = vunpack.c.h.b16 %v3092
    %v3608 = vunpack.c.l.b16 %v3093
    %v3609 = vunpack.c.h.b16 %v3093
    %v3610 = vunpack.c.l.b16 %v3094
    %v3611 = vunpack.c.h.b16 %v3094
    %v3612 = vunpack.c.l.b16 %v3095
    %v3613 = vunpack.c.h.b16 %v3095
    %v3614 = vunpack.c.l.b16 %v3096
    %v3615 = vunpack.c.h.b16 %v3096
    %v3616 = vunpack.c.l.b16 %v3097
    %v3617 = vunpack.c.h.b16 %v3097
    %v3618 = vunpack.c.l.b16 %v3098
    %v3619 = vunpack.c.h.b16 %v3098
    %v3620 = vunpack.c.l.b16 %v3099
    %v3621 = vunpack.c.h.b16 %v3099
    %v3622 = vunpack.c.l.b16 %v3100
    %v3623 = vunpack.c.h.b16 %v3100
    %v3624 = vunpack.c.l.b16 %v3101
    %v3625 = vunpack.c.h.b16 %v3101
    %v3626 = vunpack.c.l.b16 %v3102
    %v3627 = vunpack.c.h.b16 %v3102
    %v3628 = vunpack.c.l.b16 %v3103
    %v3629 = vunpack.c.h.b16 %v3103
    %v3630 = vunpack.c.l.b16 %v3104
    %v3631 = vunpack.c.h.b16 %v3104
    %v3632 = vunpack.c.l.b16 %v3105
    %v3633 = vunpack.c.h.b16 %v3105
    %v3634 = vunpack.c.l.b16 %v3106
    %v3635 = vunpack.c.h.b16 %v3106
    %v3636 = vunpack.c.l.b16 %v3107
    %v3637 = vunpack.c.h.b16 %v3107
    %v3638 = vunpack.c.l.b16 %v3108
    %v3639 = vunpack.c.h.b16 %v3108
    %v3640 = vunpack.c.l.b16 %v3109
    %v3641 = vunpack.c.h.b16 %v3109
    %v3642 = vunpack.c.l.b16 %v3110
    %v3643 = vunpack.c.h.b16 %v3110
    %v3644 = vunpack.c.l.b16 %v3111
    %v3645 = vunpack.c.h.b16 %v3111
    %v3646 = vunpack.c.l.b16 %v3112
    %v3647 = vunpack.c.h.b16 %v3112
    %v3648 = vunpack.c.l.b16 %v3113
    %v3649 = vunpack.c.h.b16 %v3113
    %v3650 = vunpack.c.l.b16 %v3114
    %v3651 = vunpack.c.h.b16 %v3114
    %v3652 = vunpack.c.l.b16 %v3115
    %v3653 = vunpack.c.h.b16 %v3115
    %v3654 = vunpack.c.l.b16 %v3116
    %v3655 = vunpack.c.h.b16 %v3116
    %v3656 = vunpack.c.l.b16 %v3117
    %v3657 = vunpack.c.h.b16 %v3117
    %v3658 = vunpack.c.l.b16 %v3118
    %v3659 = vunpack.c.h.b16 %v3118
    %v3660 = vunpack.c.l.b16 %v3119
    %v3661 = vunpack.c.h.b16 %v3119
    %v3662 = vunpack.c.l.b16 %v3120
    %v3663 = vunpack.c.h.b16 %v3120
    %v3664 = vunpack.c.l.b16 %v3121
    %v3665 = vunpack.c.h.b16 %v3121
    %v3666 = vunpack.c.l.b16 %v3122
    %v3667 = vunpack.c.h.b16 %v3122
    %v3668 = vunpack.c.l.b16 %v3123
    %v3669 = vunpack.c.h.b16 %v3123
    %v3670 = vunpack.c.l.b16 %v3124
    %v3671 = vunpack.c.h.b16 %v3124
    %v3672 = vunpack.c.l.b16 %v3125
    %v3673 = vunpack.c.h.b16 %v3125
    %v3674 = vunpack.c.l.b16 %v3126
    %v3675 = vunpack.c.h.b16 %v3126
    %v3676 = vunpack.c.l.b16 %v3127
    %v3677 = vunpack.c.h.b16 %v3127
    %v3678 = vunpack.c.l.b16 %v3128
    %v3679 = vunpack.c.h.b16 %v3128
    %v3680 = vunpack.c.l.b16 %v3129
    %v3681 = vunpack.c.h.b16 %v3129
    %v3682 = vunpack.c.l.b16 %v3130
    %v3683 = vunpack.c.h.b16 %v3130
    %v3684 = vunpack.c.l.b16 %v3131
    %v3685 = vunpack.c.h.b16 %v3131
    %v3686 = vunpack.c.l.b16 %v3132
    %v3687 = vunpack.c.h.b16 %v3132
    %v3688 = vunpack.c.l.b16 %v3133
    %v3689 = vunpack.c.h.b16 %v3133
    %v3690 = vunpack.c.l.b16 %v3134
    %v3691 = vunpack.c.h.b16 %v3134
    %v3692 = vunpack.c.l.b16 %v3135
    %v3693 = vunpack.c.h.b16 %v3135
    %v3694 = vunpack.c.l.b16 %v3136
    %v3695 = vunpack.c.h.b16 %v3136
    %v3696 = vunpack.c.l.b16 %v3137
    %v3697 = vunpack.c.h.b16 %v3137
    %v3698 = vunpack.c.l.b16 %v3138
    %v3699 = vunpack.c.h.b16 %v3138
    %v3700 = vunpack.c.l.b16 %v3139
    %v3701 = vunpack.c.h.b16 %v3139
    %v3702 = vunpack.c.l.b16 %v3140
    %v3703 = vunpack.c.h.b16 %v3140
    %v3704 = vunpack.c.l.b16 %v3141
    %v3705 = vunpack.c.h.b16 %v3141
    %v3706 = vunpack.c.l.b16 %v3142
    %v3707 = vunpack.c.h.b16 %v3142
    %v3708 = vunpack.c.l.b16 %v3143
    %v3709 = vunpack.c.h.b16 %v3143
    %v3710 = vunpack.c.l.b16 %v3144
    %v3711 = vunpack.c.h.b16 %v3144
    %v3712 = vunpack.c.l.b16 %v3145
    %v3713 = vunpack.c.h.b16 %v3145
    %v3714 = vunpack.c.l.b16 %v3146
    %v3715 = vunpack.c.h.b16 %v3146
    %v3716 = vunpack.c.l.b16 %v3147
    %v3717 = vunpack.c.h.b16 %v3147
    %v3718 = vunpack.c.l.b16 %v3148
    %v3719 = vunpack.c.h.b16 %v3148
    %v3720 = vunpack.c.l.b16 %v3149
    %v3721 = vunpack.c.h.b16 %v3149
    %v3722 = vunpack.c.l.b16 %v3150
    %v3723 = vunpack.c.h.b16 %v3150
    %v3724 = vunpack.c.l.b16 %v3151
    %v3725 = vunpack.c.h.b16 %v3151
    %v3726 = vunpack.c.l.b16 %v3152
    %v3727 = vunpack.c.h.b16 %v3152
    %v3728 = vunpack.c.l.b16 %v3153
    %v3729 = vunpack.c.h.b16 %v3153
    %v3730 = vunpack.c.l.b16 %v3154
    %v3731 = vunpack.c.h.b16 %v3154
    %v3732 = vunpack.c.l.b16 %v3155
    %v3733 = vunpack.c.h.b16 %v3155
    %v3734 = vunpack.c.l.b16 %v3156
    %v3735 = vunpack.c.h.b16 %v3156
    %v3736 = vunpack.c.l.b16 %v3157
    %v3737 = vunpack.c.h.b16 %v3157
    %v3738 = vunpack.c.l.b16 %v3158
    %v3739 = vunpack.c.h.b16 %v3158
    %v3740 = vunpack.c.l.b16 %v3159
    %v3741 = vunpack.c.h.b16 %v3159
    %v3742 = vunpack.c.l.b16 %v3160
    %v3743 = vunpack.c.h.b16 %v3160
    %v3744 = vunpack.c.l.b16 %v3161
    %v3745 = vunpack.c.h.b16 %v3161
    %v3746 = vunpack.c.l.b16 %v3162
    %v3747 = vunpack.c.h.b16 %v3162
    %v3748 = vunpack.c.l.b16 %v3163
    %v3749 = vunpack.c.h.b16 %v3163
    %v3750 = vunpack.c.l.b16 %v3164
    %v3751 = vunpack.c.h.b16 %v3164
    %v3752 = vunpack.c.l.b16 %v3165
    %v3753 = vunpack.c.h.b16 %v3165
    %v3754 = vunpack.c.l.b16 %v3166
    %v3755 = vunpack.c.h.b16 %v3166
    %v3756 = vunpack.c.l.b16 %v3167
    %v3757 = vunpack.c.h.b16 %v3167
    %v3758 = vunpack.c.l.b16 %v3168
    %v3759 = vunpack.c.h.b16 %v3168
    %v3760 = vunpack.c.l.b16 %v3169
    %v3761 = vunpack.c.h.b16 %v3169
    %v3762 = vunpack.c.l.b16 %v3170
    %v3763 = vunpack.c.h.b16 %v3170
    %v3764 = vunpack.c.l.b16 %v3171
    %v3765 = vunpack.c.h.b16 %v3171
    %v3766 = vunpack.c.l.b16 %v3172
    %v3767 = vunpack.c.h.b16 %v3172
    %v3768 = vunpack.c.l.b16 %v3173
    %v3769 = vunpack.c.h.b16 %v3173
    %v3770 = vunpack.c.l.b16 %v3174
    %v3771 = vunpack.c.h.b16 %v3174
    %v3772 = vunpack.c.l.b16 %v3175
    %v3773 = vunpack.c.h.b16 %v3175
    %v3774 = vpack.c.b16 %v3394, %v3390
    %v3775 = vpack.c.b16 %v3395, %v3391
    %v3776 = vpack.c.b16 %v3396, %v3392
    %v3777 = vpack.c.b16 %v3397, %v3393
    %v3778 = vpack.c.b16 %v3402, %v3398
    %v3779 = vpack.c.b16 %v3403, %v3399
    %v3780 = vpack.c.b16 %v3404, %v3400
    %v3781 = vpack.c.b16 %v3405, %v3401
    %v3782 = vpack.c.b16 %v3410, %v3406
    %v3783 = vpack.c.b16 %v3411, %v3407
    %v3784 = vpack.c.b16 %v3412, %v3408
    %v3785 = vpack.c.b16 %v3413, %v3409
    %v3786 = vpack.c.b16 %v3418, %v3414
    %v3787 = vpack.c.b16 %v3419, %v3415
    %v3788 = vpack.c.b16 %v3420, %v3416
    %v3789 = vpack.c.b16 %v3421, %v3417
    %v3790 = vpack.c.b16 %v3426, %v3422
    %v3791 = vpack.c.b16 %v3427, %v3423
    %v3792 = vpack.c.b16 %v3428, %v3424
    %v3793 = vpack.c.b16 %v3429, %v3425
    %v3794 = vpack.c.b16 %v3434, %v3430
    %v3795 = vpack.c.b16 %v3435, %v3431
    %v3796 = vpack.c.b16 %v3436, %v3432
    %v3797 = vpack.c.b16 %v3437, %v3433
    %v3798 = vpack.c.b16 %v3442, %v3438
    %v3799 = vpack.c.b16 %v3443, %v3439
    %v3800 = vpack.c.b16 %v3444, %v3440
    %v3801 = vpack.c.b16 %v3445, %v3441
    %v3802 = vpack.c.b16 %v3450, %v3446
    %v3803 = vpack.c.b16 %v3451, %v3447
    %v3804 = vpack.c.b16 %v3452, %v3448
    %v3805 = vpack.c.b16 %v3453, %v3449
    %v3806 = vpack.c.b16 %v3458, %v3454
    %v3807 = vpack.c.b16 %v3459, %v3455
    %v3808 = vpack.c.b16 %v3460, %v3456
    %v3809 = vpack.c.b16 %v3461, %v3457
    %v3810 = vpack.c.b16 %v3466, %v3462
    %v3811 = vpack.c.b16 %v3467, %v3463
    %v3812 = vpack.c.b16 %v3468, %v3464
    %v3813 = vpack.c.b16 %v3469, %v3465
    %v3814 = vpack.c.b16 %v3474, %v3470
    %v3815 = vpack.c.b16 %v3475, %v3471
    %v3816 = vpack.c.b16 %v3476, %v3472
    %v3817 = vpack.c.b16 %v3477, %v3473
    %v3818 = vpack.c.b16 %v3482, %v3478
    %v3819 = vpack.c.b16 %v3483, %v3479
    %v3820 = vpack.c.b16 %v3484, %v3480
    %v3821 = vpack.c.b16 %v3485, %v3481
    %v3822 = vpack.c.b16 %v3490, %v3486
    %v3823 = vpack.c.b16 %v3491, %v3487
    %v3824 = vpack.c.b16 %v3492, %v3488
    %v3825 = vpack.c.b16 %v3493, %v3489
    %v3826 = vpack.c.b16 %v3498, %v3494
    %v3827 = vpack.c.b16 %v3499, %v3495
    %v3828 = vpack.c.b16 %v3500, %v3496
    %v3829 = vpack.c.b16 %v3501, %v3497
    %v3830 = vpack.c.b16 %v3506, %v3502
    %v3831 = vpack.c.b16 %v3507, %v3503
    %v3832 = vpack.c.b16 %v3508, %v3504
    %v3833 = vpack.c.b16 %v3509, %v3505
    %v3834 = vpack.c.b16 %v3514, %v3510
    %v3835 = vpack.c.b16 %v3515, %v3511
    %v3836 = vpack.c.b16 %v3516, %v3512
    %v3837 = vpack.c.b16 %v3517, %v3513
    %v3838 = vpack.c.b16 %v3522, %v3518
    %v3839 = vpack.c.b16 %v3523, %v3519
    %v3840 = vpack.c.b16 %v3524, %v3520
    %v3841 = vpack.c.b16 %v3525, %v3521
    %v3842 = vpack.c.b16 %v3530, %v3526
    %v3843 = vpack.c.b16 %v3531, %v3527
    %v3844 = vpack.c.b16 %v3532, %v3528
    %v3845 = vpack.c.b16 %v3533, %v3529
    %v3846 = vpack.c.b16 %v3538, %v3534
    %v3847 = vpack.c.b16 %v3539, %v3535
    %v3848 = vpack.c.b16 %v3540, %v3536
    %v3849 = vpack.c.b16 %v3541, %v3537
    %v3850 = vpack.c.b16 %v3546, %v3542
    %v3851 = vpack.c.b16 %v3547, %v3543
    %v3852 = vpack.c.b16 %v3548, %v3544
    %v3853 = vpack.c.b16 %v3549, %v3545
    %v3854 = vpack.c.b16 %v3554, %v3550
    %v3855 = vpack.c.b16 %v3555, %v3551
    %v3856 = vpack.c.b16 %v3556, %v3552
    %v3857 = vpack.c.b16 %v3557, %v3553
    %v3858 = vpack.c.b16 %v3562, %v3558
    %v3859 = vpack.c.b16 %v3563, %v3559
    %v3860 = vpack.c.b16 %v3564, %v3560
    %v3861 = vpack.c.b16 %v3565, %v3561
    %v3862 = vpack.c.b16 %v3570, %v3566
    %v3863 = vpack.c.b16 %v3571, %v3567
    %v3864 = vpack.c.b16 %v3572, %v3568
    %v3865 = vpack.c.b16 %v3573, %v3569
    %v3866 = vpack.c.b16 %v3578, %v3574
    %v3867 = vpack.c.b16 %v3579, %v3575
    %v3868 = vpack.c.b16 %v3580, %v3576
    %v3869 = vpack.c.b16 %v3581, %v3577
    %v3870 = vpack.c.b16 %v3586, %v3582
    %v3871 = vpack.c.b16 %v3587, %v3583
    %v3872 = vpack.c.b16 %v3588, %v3584
    %v3873 = vpack.c.b16 %v3589, %v3585
    %v3874 = vpack.c.b16 %v3594, %v3590
    %v3875 = vpack.c.b16 %v3595, %v3591
    %v3876 = vpack.c.b16 %v3596, %v3592
    %v3877 = vpack.c.b16 %v3597, %v3593
    %v3878 = vpack.c.b16 %v3602, %v3598
    %v3879 = vpack.c.b16 %v3603, %v3599
    %v3880 = vpack.c.b16 %v3604, %v3600
    %v3881 = vpack.c.b16 %v3605, %v3601
    %v3882 = vpack.c.b16 %v3610, %v3606
    %v3883 = vpack.c.b16 %v3611, %v3607
    %v3884 = vpack.c.b16 %v3612, %v3608
    %v3885 = vpack.c.b16 %v3613, %v3609
    %v3886 = vpack.c.b16 %v3618, %v3614
    %v3887 = vpack.c.b16 %v3619, %v3615
    %v3888 = vpack.c.b16 %v3620, %v3616
    %v3889 = vpack.c.b16 %v3621, %v3617
    %v3890 = vpack.c.b16 %v3626, %v3622
    %v3891 = vpack.c.b16 %v3627, %v3623
    %v3892 = vpack.c.b16 %v3628, %v3624
    %v3893 = vpack.c.b16 %v3629, %v3625
    %v3894 = vpack.c.b16 %v3634, %v3630
    %v3895 = vpack.c.b16 %v3635, %v3631
    %v3896 = vpack.c.b16 %v3636, %v3632
    %v3897 = vpack.c.b16 %v3637, %v3633
    %v3898 = vpack.c.b16 %v3642, %v3638
    %v3899 = vpack.c.b16 %v3643, %v3639
    %v3900 = vpack.c.b16 %v3644, %v3640
    %v3901 = vpack.c.b16 %v3645, %v3641
    %v3902 = vpack.c.b16 %v3650, %v3646
    %v3903 = vpack.c.b16 %v3651, %v3647
    %v3904 = vpack.c.b16 %v3652, %v3648
    %v3905 = vpack.c.b16 %v3653, %v3649
    %v3906 = vpack.c.b16 %v3658, %v3654
    %v3907 = vpack.c.b16 %v3659, %v3655
    %v3908 = vpack.c.b16 %v3660, %v3656
    %v3909 = vpack.c.b16 %v3661, %v3657
    %v3910 = vpack.c.b16 %v3666, %v3662
    %v3911 = vpack.c.b16 %v3667, %v3663
    %v3912 = vpack.c.b16 %v3668, %v3664
    %v3913 = vpack.c.b16 %v3669, %v3665
    %v3914 = vpack.c.b16 %v3674, %v3670
    %v3915 = vpack.c.b16 %v3675, %v3671
    %v3916 = vpack.c.b16 %v3676, %v3672
    %v3917 = vpack.c.b16 %v3677, %v3673
    %v3918 = vpack.c.b16 %v3682, %v3678
    %v3919 = vpack.c.b16 %v3683, %v3679
    %v3920 = vpack.c.b16 %v3684, %v3680
    %v3921 = vpack.c.b16 %v3685, %v3681
    %v3922 = vpack.c.b16 %v3690, %v3686
    %v3923 = vpack.c.b16 %v3691, %v3687
    %v3924 = vpack.c.b16 %v3692, %v3688
    %v3925 = vpack.c.b16 %v3693, %v3689
    %v3926 = vpack.c.b16 %v3698, %v3694
    %v3927 = vpack.c.b16 %v3699, %v3695
    %v3928 = vpack.c.b16 %v3700, %v3696
    %v3929 = vpack.c.b16 %v3701, %v3697
    %v3930 = vpack.c.b16 %v3706, %v3702
    %v3931 = vpack.c.b16 %v3707, %v3703
    %v3932 = vpack.c.b16 %v3708, %v3704
    %v3933 = vpack.c.b16 %v3709, %v3705
    %v3934 = vpack.c.b16 %v3714, %v3710
    %v3935 = vpack.c.b16 %v3715, %v3711
    %v3936 = vpack.c.b16 %v3716, %v3712
    %v3937 = vpack.c.b16 %v3717, %v3713
    %v3938 = vpack.c.b16 %v3722, %v3718
    %v3939 = vpack.c.b16 %v3723, %v3719
    %v3940 = vpack.c.b16 %v3724, %v3720
    %v3941 = vpack.c.b16 %v3725, %v3721
    %v3942 = vpack.c.b16 %v3730, %v3726
    %v3943 = vpack.c.b16 %v3731, %v3727
    %v3944 = vpack.c.b16 %v3732, %v3728
    %v3945 = vpack.c.b16 %v3733, %v3729
    %v3946 = vpack.c.b16 %v3738, %v3734
    %v3947 = vpack.c.b16 %v3739, %v3735
    %v3948 = vpack.c.b16 %v3740, %v3736
    %v3949 = vpack.c.b16 %v3741, %v3737
    %v3950 = vpack.c.b16 %v3746, %v3742
    %v3951 = vpack.c.b16 %v3747, %v3743
    %v3952 = vpack.c.b16 %v3748, %v3744
    %v3953 = vpack.c.b16 %v3749, %v3745
    %v3954 = vpack.c.b16 %v3754, %v3750
    %v3955 = vpack.c.b16 %v3755, %v3751
    %v3956 = vpack.c.b16 %v3756, %v3752
    %v3957 = vpack.c.b16 %v3757, %v3753
    %v3958 = vpack.c.b16 %v3762, %v3758
    %v3959 = vpack.c.b16 %v3763, %v3759
    %v3960 = vpack.c.b16 %v3764, %v3760
    %v3961 = vpack.c.b16 %v3765, %v3761
    %v3962 = vpack.c.b16 %v3770, %v3766
    %v3963 = vpack.c.b16 %v3771, %v3767
    %v3964 = vpack.c.b16 %v3772, %v3768
    %v3965 = vpack.c.b16 %v3773, %v3769
    %4158 = vmatprep.subr.bf16.mxu0 %v3775
    %4159 = vmatpush1.bf16.msra.mxu0 %v3774
    %4160 = vmatprep.subr.bf16.mxu0 %v3779
    %4161 = vmatpush1.bf16.msra.mxu0 %v3778
    %4162 = vmatprep.subr.bf16.mxu0 %v3783
    %4163 = vmatpush1.bf16.msra.mxu0 %v3782
    %4164 = vmatprep.subr.bf16.mxu0 %v3787
    %4165 = vmatpush1.bf16.msra.mxu0 %v3786
    %4166 = vmatprep.subr.bf16.mxu0 %v3791
    %4167 = vmatpush1.bf16.msra.mxu0 %v3790
    %4168 = vmatprep.subr.bf16.mxu0 %v3795
    %4169 = vmatpush1.bf16.msra.mxu0 %v3794
    %4170 = vmatprep.subr.bf16.mxu0 %v3799
    %4171 = vmatpush1.bf16.msra.mxu0 %v3798
    %4172 = vmatprep.subr.bf16.mxu0 %v3803
    %4173 = vmatpush1.bf16.msra.mxu0 %v3802
    %4174 = vmatprep.subr.bf16.mxu0 %v3807
    %4175 = vmatpush1.bf16.msra.mxu0 %v3806
    %4176 = vmatprep.subr.bf16.mxu0 %v3811
    %4177 = vmatpush1.bf16.msra.mxu0 %v3810
    %4178 = vmatprep.subr.bf16.mxu0 %v3815
    %4179 = vmatpush1.bf16.msra.mxu0 %v3814
    %4180 = vmatprep.subr.bf16.mxu0 %v3819
    %4181 = vmatpush1.bf16.msra.mxu0 %v3818
    %4182 = vmatprep.subr.bf16.mxu0 %v3823
    %4183 = vmatpush1.bf16.msra.mxu0 %v3822
    %4184 = vmatprep.subr.bf16.mxu0 %v3827
    %4185 = vmatpush1.bf16.msra.mxu0 %v3826
    %4186 = vmatprep.subr.bf16.mxu0 %v3831
    %4187 = vmatpush1.bf16.msra.mxu0 %v3830
    %4188 = vmatprep.subr.bf16.mxu0 %v3835
    %4189 = vmatpush1.bf16.msra.mxu0 %v3834
    %4190 = vmatprep.mubr.bf16.mxu0 %v2979
    %4191 = vmatmul.mubr.bf16.gmra.mrb[0].mxu0 %v2978
    %v4192 = vpop.f32.mrb[0].mxu0
    %v4193 = vadd.f32 %v3181, %v4192
    %v4194 = vpop.f32.mrb[0].mxu0
    %v4195 = vadd.f32 %v3185, %v4194
    %v4196 = vpop.f32.mrb[0].mxu0
    %v4197 = vpop.f32.mrb[0].mxu0
    %4198 = vdwg.mxu0
    %4199 = vmatprep.subr.bf16.mxu0 %v3839
    %4200 = vmatpush1.bf16.msra.mxu0 %v3838
    %4201 = vmatprep.subr.bf16.mxu0 %v3843
    %4202 = vmatpush1.bf16.msra.mxu0 %v3842
    %4203 = vmatprep.subr.bf16.mxu0 %v3847
    %4204 = vmatpush1.bf16.msra.mxu0 %v3846
    %4205 = vmatprep.subr.bf16.mxu0 %v3851
    %4206 = vmatpush1.bf16.msra.mxu0 %v3850
    %4207 = vmatprep.subr.bf16.mxu0 %v3855
    %4208 = vmatpush1.bf16.msra.mxu0 %v3854
    %4209 = vmatprep.subr.bf16.mxu0 %v3859
    %4210 = vmatpush1.bf16.msra.mxu0 %v3858
    %4211 = vmatprep.subr.bf16.mxu0 %v3863
    %4212 = vmatpush1.bf16.msra.mxu0 %v3862
    %4213 = vmatprep.subr.bf16.mxu0 %v3867
    %4214 = vmatpush1.bf16.msra.mxu0 %v3866
    %4215 = vmatprep.subr.bf16.mxu0 %v3871
    %4216 = vmatpush1.bf16.msra.mxu0 %v3870
    %4217 = vmatprep.subr.bf16.mxu0 %v3875
    %4218 = vmatpush1.bf16.msra.mxu0 %v3874
    %4219 = vmatprep.subr.bf16.mxu0 %v3879
    %4220 = vmatpush1.bf16.msra.mxu0 %v3878
    %4221 = vmatprep.subr.bf16.mxu0 %v3883
    %4222 = vmatpush1.bf16.msra.mxu0 %v3882
    %4223 = vmatprep.subr.bf16.mxu0 %v3887
    %4224 = vmatpush1.bf16.msra.mxu0 %v3886
    %4225 = vmatprep.subr.bf16.mxu0 %v3891
    %4226 = vmatpush1.bf16.msra.mxu0 %v3890
    %4227 = vmatprep.subr.bf16.mxu0 %v3895
    %4228 = vmatpush1.bf16.msra.mxu0 %v3894
    %4229 = vmatprep.subr.bf16.mxu0 %v3899
    %4230 = vmatpush1.bf16.msra.mxu0 %v3898
    %4231 = vmatprep.mubr.bf16.mxu0 %v2981
    %4232 = vmatmul.mubr.bf16.gmra.mrb[0].mxu0 %v2980
    %v4233 = vpop.f32.mrb[0].mxu0
    %v4234 = vadd.f32 %v4193, %v4233
    %v4235 = vpop.f32.mrb[0].mxu0
    %v4236 = vadd.f32 %v4195, %v4235
    %v4237 = vpop.f32.mrb[0].mxu0
    %v4238 = vpop.f32.mrb[0].mxu0
    %4239 = vdwg.mxu0
    %4240 = vmatprep.subr.bf16.mxu0 %v3903
    %4241 = vmatpush1.bf16.msra.mxu0 %v3902
    %4242 = vmatprep.subr.bf16.mxu0 %v3907
    %4243 = vmatpush1.bf16.msra.mxu0 %v3906
    %4244 = vmatprep.subr.bf16.mxu0 %v3911
    %4245 = vmatpush1.bf16.msra.mxu0 %v3910
    %4246 = vmatprep.subr.bf16.mxu0 %v3915
    %4247 = vmatpush1.bf16.msra.mxu0 %v3914
    %4248 = vmatprep.subr.bf16.mxu0 %v3919
    %4249 = vmatpush1.bf16.msra.mxu0 %v3918
    %4250 = vmatprep.subr.bf16.mxu0 %v3923
    %4251 = vmatpush1.bf16.msra.mxu0 %v3922
    %4252 = vmatprep.subr.bf16.mxu0 %v3927
    %4253 = vmatpush1.bf16.msra.mxu0 %v3926
    %4254 = vmatprep.subr.bf16.mxu0 %v3931
    %4255 = vmatpush1.bf16.msra.mxu0 %v3930
    %4256 = vmatprep.subr.bf16.mxu0 %v3935
    %4257 = vmatpush1.bf16.msra.mxu0 %v3934
    %4258 = vmatprep.subr.bf16.mxu0 %v3939
    %4259 = vmatpush1.bf16.msra.mxu0 %v3938
    %4260 = vmatprep.subr.bf16.mxu0 %v3943
    %4261 = vmatpush1.bf16.msra.mxu0 %v3942
    %4262 = vmatprep.subr.bf16.mxu0 %v3947
    %4263 = vmatpush1.bf16.msra.mxu0 %v3946
    %4264 = vmatprep.subr.bf16.mxu0 %v3951
    %4265 = vmatpush1.bf16.msra.mxu0 %v3950
    %4266 = vmatprep.subr.bf16.mxu0 %v3955
    %4267 = vmatpush1.bf16.msra.mxu0 %v3954
    %4268 = vmatprep.subr.bf16.mxu0 %v3959
    %4269 = vmatpush1.bf16.msra.mxu0 %v3958
    %4270 = vmatprep.subr.bf16.mxu0 %v3963
    %4271 = vmatpush1.bf16.msra.mxu0 %v3962
    %4272 = vmatprep.mubr.bf16.mxu0 %v2983
    %4273 = vmatmul.mubr.bf16.gmra.mrb[0].mxu0 %v2982
    %v4274 = vpop.f32.mrb[0].mxu0
    %v4275 = vadd.f32 %v4234, %v4274
    %v4276 = vpop.f32.mrb[0].mxu0
    %v4277 = vadd.f32 %v4236, %v4276
    %v4278 = vpop.f32.mrb[0].mxu0
    %v4279 = vpop.f32.mrb[0].mxu0
    %4280 = vdwg.mxu0
    %4281 = vmatprep.subr.bf16.mxu0 %v3777
    %4282 = vmatpush1.bf16.msra.mxu0 %v3776
    %4283 = vmatprep.subr.bf16.mxu0 %v3781
    %4284 = vmatpush1.bf16.msra.mxu0 %v3780
    %4285 = vmatprep.subr.bf16.mxu0 %v3785
    %4286 = vmatpush1.bf16.msra.mxu0 %v3784
    %4287 = vmatprep.subr.bf16.mxu0 %v3789
    %4288 = vmatpush1.bf16.msra.mxu0 %v3788
    %4289 = vmatprep.subr.bf16.mxu0 %v3793
    %4290 = vmatpush1.bf16.msra.mxu0 %v3792
    %4291 = vmatprep.subr.bf16.mxu0 %v3797
    %4292 = vmatpush1.bf16.msra.mxu0 %v3796
    %4293 = vmatprep.subr.bf16.mxu0 %v3801
    %4294 = vmatpush1.bf16.msra.mxu0 %v3800
    %4295 = vmatprep.subr.bf16.mxu0 %v3805
    %4296 = vmatpush1.bf16.msra.mxu0 %v3804
    %4297 = vmatprep.subr.bf16.mxu0 %v3809
    %4298 = vmatpush1.bf16.msra.mxu0 %v3808
    %4299 = vmatprep.subr.bf16.mxu0 %v3813
    %4300 = vmatpush1.bf16.msra.mxu0 %v3812
    %4301 = vmatprep.subr.bf16.mxu0 %v3817
    %4302 = vmatpush1.bf16.msra.mxu0 %v3816
    %4303 = vmatprep.subr.bf16.mxu0 %v3821
    %4304 = vmatpush1.bf16.msra.mxu0 %v3820
    %4305 = vmatprep.subr.bf16.mxu0 %v3825
    %4306 = vmatpush1.bf16.msra.mxu0 %v3824
    %4307 = vmatprep.subr.bf16.mxu0 %v3829
    %4308 = vmatpush1.bf16.msra.mxu0 %v3828
    %4309 = vmatprep.subr.bf16.mxu0 %v3833
    %4310 = vmatpush1.bf16.msra.mxu0 %v3832
    %4311 = vmatprep.subr.bf16.mxu0 %v3837
    %4312 = vmatpush1.bf16.msra.mxu0 %v3836
    %4313 = vmatprep.mubr.bf16.mxu0 %v2979
    %4314 = vmatmul.mubr.bf16.gmra.mrb[0].mxu0 %v2978
    %v4315 = vpop.f32.mrb[0].mxu0
    %v4316 = vadd.f32 %v3189, %v4315
    %v4317 = vpop.f32.mrb[0].mxu0
    %v4318 = vadd.f32 %v3193, %v4317
    %v4319 = vpop.f32.mrb[0].mxu0
    %v4320 = vpop.f32.mrb[0].mxu0
    %4321 = vdwg.mxu0
    %4322 = vmatprep.subr.bf16.mxu0 %v3841
    %4323 = vmatpush1.bf16.msra.mxu0 %v3840
    %4324 = vmatprep.subr.bf16.mxu0 %v3845
    %4325 = vmatpush1.bf16.msra.mxu0 %v3844
    %4326 = vmatprep.subr.bf16.mxu0 %v3849
    %4327 = vmatpush1.bf16.msra.mxu0 %v3848
    %4328 = vmatprep.subr.bf16.mxu0 %v3853
    %4329 = vmatpush1.bf16.msra.mxu0 %v3852
    %4330 = vmatprep.subr.bf16.mxu0 %v3857
    %4331 = vmatpush1.bf16.msra.mxu0 %v3856
    %4332 = vmatprep.subr.bf16.mxu0 %v3861
    %4333 = vmatpush1.bf16.msra.mxu0 %v3860
    %4334 = vmatprep.subr.bf16.mxu0 %v3865
    %4335 = vmatpush1.bf16.msra.mxu0 %v3864
    %4336 = vmatprep.subr.bf16.mxu0 %v3869
    %4337 = vmatpush1.bf16.msra.mxu0 %v3868
    %4338 = vmatprep.subr.bf16.mxu0 %v3873
    %4339 = vmatpush1.bf16.msra.mxu0 %v3872
    %4340 = vmatprep.subr.bf16.mxu0 %v3877
    %4341 = vmatpush1.bf16.msra.mxu0 %v3876
    %4342 = vmatprep.subr.bf16.mxu0 %v3881
    %4343 = vmatpush1.bf16.msra.mxu0 %v3880
    %4344 = vmatprep.subr.bf16.mxu0 %v3885
    %4345 = vmatpush1.bf16.msra.mxu0 %v3884
    %4346 = vmatprep.subr.bf16.mxu0 %v3889
    %4347 = vmatpush1.bf16.msra.mxu0 %v3888
    %4348 = vmatprep.subr.bf16.mxu0 %v3893
    %4349 = vmatpush1.bf16.msra.mxu0 %v3892
    %4350 = vmatprep.subr.bf16.mxu0 %v3897
    %4351 = vmatpush1.bf16.msra.mxu0 %v3896
    %4352 = vmatprep.subr.bf16.mxu0 %v3901
    %4353 = vmatpush1.bf16.msra.mxu0 %v3900
    %4354 = vmatprep.mubr.bf16.mxu0 %v2981
    %4355 = vmatmul.mubr.bf16.gmra.mrb[0].mxu0 %v2980
    %v4356 = vpop.f32.mrb[0].mxu0
    %v4357 = vadd.f32 %v4316, %v4356
    %v4358 = vpop.f32.mrb[0].mxu0
    %v4359 = vadd.f32 %v4318, %v4358
    %v4360 = vpop.f32.mrb[0].mxu0
    %v4361 = vpop.f32.mrb[0].mxu0
    %4362 = vdwg.mxu0
    %4363 = vmatprep.subr.bf16.mxu0 %v3905
    %4364 = vmatpush1.bf16.msra.mxu0 %v3904
    %4365 = vmatprep.subr.bf16.mxu0 %v3909
    %4366 = vmatpush1.bf16.msra.mxu0 %v3908
    %4367 = vmatprep.subr.bf16.mxu0 %v3913
    %4368 = vmatpush1.bf16.msra.mxu0 %v3912
    %4369 = vmatprep.subr.bf16.mxu0 %v3917
    %4370 = vmatpush1.bf16.msra.mxu0 %v3916
    %4371 = vmatprep.subr.bf16.mxu0 %v3921
    %4372 = vmatpush1.bf16.msra.mxu0 %v3920
    %4373 = vmatprep.subr.bf16.mxu0 %v3925
    %4374 = vmatpush1.bf16.msra.mxu0 %v3924
    %4375 = vmatprep.subr.bf16.mxu0 %v3929
    %4376 = vmatpush1.bf16.msra.mxu0 %v3928
    %4377 = vmatprep.subr.bf16.mxu0 %v3933
    %4378 = vmatpush1.bf16.msra.mxu0 %v3932
    %4379 = vmatprep.subr.bf16.mxu0 %v3937
    %4380 = vmatpush1.bf16.msra.mxu0 %v3936
    %4381 = vmatprep.subr.bf16.mxu0 %v3941
    %4382 = vmatpush1.bf16.msra.mxu0 %v3940
    %4383 = vmatprep.subr.bf16.mxu0 %v3945
    %4384 = vmatpush1.bf16.msra.mxu0 %v3944
    %4385 = vmatprep.subr.bf16.mxu0 %v3949
    %4386 = vmatpush1.bf16.msra.mxu0 %v3948
    %4387 = vmatprep.subr.bf16.mxu0 %v3953
    %4388 = vmatpush1.bf16.msra.mxu0 %v3952
    %4389 = vmatprep.subr.bf16.mxu0 %v3957
    %4390 = vmatpush1.bf16.msra.mxu0 %v3956
    %4391 = vmatprep.subr.bf16.mxu0 %v3961
    %4392 = vmatpush1.bf16.msra.mxu0 %v3960
    %4393 = vmatprep.subr.bf16.mxu0 %v3965
    %4394 = vmatpush1.bf16.msra.mxu0 %v3964
    %4395 = vmatprep.mubr.bf16.mxu0 %v2983
    %4396 = vmatmul.mubr.bf16.gmra.mrb[0].mxu0 %v2982
    %v4397 = vpop.f32.mrb[0].mxu0
    %v4398 = vadd.f32 %v4357, %v4397
    %v4399 = vpop.f32.mrb[0].mxu0
    %v4400 = vadd.f32 %v4359, %v4399
    %v4401 = vpop.f32.mrb[0].mxu0
    %v4402 = vpop.f32.mrb[0].mxu0
    %4403 = vdwg.mxu0
    %v4404 = vmax.f32 %v4275, 0.0
    %v4405 = vmax.f32 %v4277, 0.0
    %v4406 = vmax.f32 %v4398, 0.0
    %v4407 = vmax.f32 %v4400, 0.0
    %v4408 = vpack.c.bf16 %v4404, %v4404
    %v4409 = vpack.c.bf16 %v4405, %v4405
    %v4410 = vpack.c.bf16 %v4406, %v4406
    %v4411 = vpack.c.bf16 %v4407, %v4407
    %v4412 = vld [vmem:[#allocation11] sm:$0xff]
    %v4413 = vld [vmem:[#allocation11 + $0x8] sm:$0xff]
    %v4414 = vld [vmem:[#allocation11 + $0x10] sm:$0xff]
    %v4415 = vld [vmem:[#allocation11 + $0x18] sm:$0xff]
    %v4416 = vld [vmem:[#allocation11 + $0x20] sm:$0xff]
    %v4417 = vld [vmem:[#allocation11 + $0x28] sm:$0xff]
    %v4418 = vld [vmem:[#allocation11 + $0x30] sm:$0xff]
    %v4419 = vld [vmem:[#allocation11 + $0x38] sm:$0xff]
    %v4420 = vld [vmem:[#allocation11 + $0x40] sm:$0xff]
    %v4421 = vld [vmem:[#allocation11 + $0x48] sm:$0xff]
    %v4422 = vld [vmem:[#allocation11 + $0x50] sm:$0xff]
    %v4423 = vld [vmem:[#allocation11 + $0x58] sm:$0xff]
    %v4424 = vld [vmem:[#allocation11 + $0x60] sm:$0xff]
    %v4425 = vld [vmem:[#allocation11 + $0x68] sm:$0xff]
    %v4426 = vld [vmem:[#allocation11 + $0x70] sm:$0xff]
    %v4427 = vld [vmem:[#allocation11 + $0x78] sm:$0xff]
    %v4428 = vld [vmem:[#allocation11 + $0x80] sm:$0xff]
    %v4429 = vld [vmem:[#allocation11 + $0x88] sm:$0xff]
    %v4430 = vld [vmem:[#allocation11 + $0x90] sm:$0xff]
    %v4431 = vld [vmem:[#allocation11 + $0x98] sm:$0xff]
    %v4432 = vld [vmem:[#allocation11 + $0xa0] sm:$0xff]
    %v4433 = vld [vmem:[#allocation11 + $0xa8] sm:$0xff]
    %v4434 = vld [vmem:[#allocation11 + $0xb0] sm:$0xff]
    %v4435 = vld [vmem:[#allocation11 + $0xb8] sm:$0xff]
    %v4436 = vld [vmem:[#allocation11 + $0xc0] sm:$0xff]
    %v4437 = vld [vmem:[#allocation11 + $0xc8] sm:$0xff]
    %v4438 = vld [vmem:[#allocation11 + $0xd0] sm:$0xff]
    %v4439 = vld [vmem:[#allocation11 + $0xd8] sm:$0xff]
    %v4440 = vld [vmem:[#allocation11 + $0xe0] sm:$0xff]
    %v4441 = vld [vmem:[#allocation11 + $0xe8] sm:$0xff]
    %v4442 = vld [vmem:[#allocation11 + $0xf0] sm:$0xff]
    %v4443 = vld [vmem:[#allocation11 + $0xf8] sm:$0xff]
    %v4444 = vld [vmem:[#allocation11 + $0x100] sm:$0xff]
    %v4445 = vld [vmem:[#allocation11 + $0x108] sm:$0xff]
    %v4446 = vld [vmem:[#allocation11 + $0x110] sm:$0xff]
    %v4447 = vld [vmem:[#allocation11 + $0x118] sm:$0xff]
    %v4448 = vld [vmem:[#allocation11 + $0x120] sm:$0xff]
    %v4449 = vld [vmem:[#allocation11 + $0x128] sm:$0xff]
    %v4450 = vld [vmem:[#allocation11 + $0x130] sm:$0xff]
    %v4451 = vld [vmem:[#allocation11 + $0x138] sm:$0xff]
    %v4452 = vld [vmem:[#allocation11 + $0x140] sm:$0xff]
    %v4453 = vld [vmem:[#allocation11 + $0x148] sm:$0xff]
    %v4454 = vld [vmem:[#allocation11 + $0x150] sm:$0xff]
    %v4455 = vld [vmem:[#allocation11 + $0x158] sm:$0xff]
    %v4456 = vld [vmem:[#allocation11 + $0x160] sm:$0xff]
    %v4457 = vld [vmem:[#allocation11 + $0x168] sm:$0xff]
    %v4458 = vld [vmem:[#allocation11 + $0x170] sm:$0xff]
    %v4459 = vld [vmem:[#allocation11 + $0x178] sm:$0xff]
    %v4460 = vld [vmem:[#allocation11 + $0x180] sm:$0xff]
    %v4461 = vld [vmem:[#allocation11 + $0x188] sm:$0xff]
    %v4462 = vld [vmem:[#allocation11 + $0x190] sm:$0xff]
    %v4463 = vld [vmem:[#allocation11 + $0x198] sm:$0xff]
    %v4464 = vld [vmem:[#allocation11 + $0x1a0] sm:$0xff]
    %v4465 = vld [vmem:[#allocation11 + $0x1a8] sm:$0xff]
    %v4466 = vld [vmem:[#allocation11 + $0x1b0] sm:$0xff]
    %v4467 = vld [vmem:[#allocation11 + $0x1b8] sm:$0xff]
    %v4468 = vld [vmem:[#allocation11 + $0x1c0] sm:$0xff]
    %v4469 = vld [vmem:[#allocation11 + $0x1c8] sm:$0xff]
    %v4470 = vld [vmem:[#allocation11 + $0x1d0] sm:$0xff]
    %v4471 = vld [vmem:[#allocation11 + $0x1d8] sm:$0xff]
    %v4472 = vld [vmem:[#allocation11 + $0x1e0] sm:$0xff]
    %v4473 = vld [vmem:[#allocation11 + $0x1e8] sm:$0xff]
    %v4474 = vld [vmem:[#allocation11 + $0x1f0] sm:$0xff]
    %v4475 = vld [vmem:[#allocation11 + $0x1f8] sm:$0xff]
    %v4476 = vld [vmem:[#allocation11 + $0x200] sm:$0xff]
    %v4477 = vld [vmem:[#allocation11 + $0x208] sm:$0xff]
    %v4478 = vld [vmem:[#allocation11 + $0x210] sm:$0xff]
    %v4479 = vld [vmem:[#allocation11 + $0x218] sm:$0xff]
    %v4480 = vld [vmem:[#allocation11 + $0x220] sm:$0xff]
    %v4481 = vld [vmem:[#allocation11 + $0x228] sm:$0xff]
    %v4482 = vld [vmem:[#allocation11 + $0x230] sm:$0xff]
    %v4483 = vld [vmem:[#allocation11 + $0x238] sm:$0xff]
    %v4484 = vld [vmem:[#allocation11 + $0x240] sm:$0xff]
    %v4485 = vld [vmem:[#allocation11 + $0x248] sm:$0xff]
    %v4486 = vld [vmem:[#allocation11 + $0x250] sm:$0xff]
    %v4487 = vld [vmem:[#allocation11 + $0x258] sm:$0xff]
    %v4488 = vld [vmem:[#allocation11 + $0x260] sm:$0xff]
    %v4489 = vld [vmem:[#allocation11 + $0x268] sm:$0xff]
    %v4490 = vld [vmem:[#allocation11 + $0x270] sm:$0xff]
    %v4491 = vld [vmem:[#allocation11 + $0x278] sm:$0xff]
    %v4492 = vld [vmem:[#allocation11 + $0x280] sm:$0xff]
    %v4493 = vld [vmem:[#allocation11 + $0x288] sm:$0xff]
    %v4494 = vld [vmem:[#allocation11 + $0x290] sm:$0xff]
    %v4495 = vld [vmem:[#allocation11 + $0x298] sm:$0xff]
    %v4496 = vld [vmem:[#allocation11 + $0x2a0] sm:$0xff]
    %v4497 = vld [vmem:[#allocation11 + $0x2a8] sm:$0xff]
    %v4498 = vld [vmem:[#allocation11 + $0x2b0] sm:$0xff]
    %v4499 = vld [vmem:[#allocation11 + $0x2b8] sm:$0xff]
    %v4500 = vld [vmem:[#allocation11 + $0x2c0] sm:$0xff]
    %v4501 = vld [vmem:[#allocation11 + $0x2c8] sm:$0xff]
    %v4502 = vld [vmem:[#allocation11 + $0x2d0] sm:$0xff]
    %v4503 = vld [vmem:[#allocation11 + $0x2d8] sm:$0xff]
    %v4504 = vld [vmem:[#allocation11 + $0x2e0] sm:$0xff]
    %v4505 = vld [vmem:[#allocation11 + $0x2e8] sm:$0xff]
    %v4506 = vld [vmem:[#allocation11 + $0x2f0] sm:$0xff]
    %v4507 = vld [vmem:[#allocation11 + $0x2f8] sm:$0xff]
    %v4508 = vld [vmem:[#allocation11 + $0x300] sm:$0xff]
    %v4509 = vld [vmem:[#allocation11 + $0x308] sm:$0xff]
    %v4510 = vld [vmem:[#allocation11 + $0x310] sm:$0xff]
    %v4511 = vld [vmem:[#allocation11 + $0x318] sm:$0xff]
    %v4512 = vld [vmem:[#allocation11 + $0x320] sm:$0xff]
    %v4513 = vld [vmem:[#allocation11 + $0x328] sm:$0xff]
    %v4514 = vld [vmem:[#allocation11 + $0x330] sm:$0xff]
    %v4515 = vld [vmem:[#allocation11 + $0x338] sm:$0xff]
    %v4516 = vld [vmem:[#allocation11 + $0x340] sm:$0xff]
    %v4517 = vld [vmem:[#allocation11 + $0x348] sm:$0xff]
    %v4518 = vld [vmem:[#allocation11 + $0x350] sm:$0xff]
    %v4519 = vld [vmem:[#allocation11 + $0x358] sm:$0xff]
    %v4520 = vld [vmem:[#allocation11 + $0x360] sm:$0xff]
    %v4521 = vld [vmem:[#allocation11 + $0x368] sm:$0xff]
    %v4522 = vld [vmem:[#allocation11 + $0x370] sm:$0xff]
    %v4523 = vld [vmem:[#allocation11 + $0x378] sm:$0xff]
    %v4524 = vld [vmem:[#allocation11 + $0x380] sm:$0xff]
    %v4525 = vld [vmem:[#allocation11 + $0x388] sm:$0xff]
    %v4526 = vld [vmem:[#allocation11 + $0x390] sm:$0xff]
    %v4527 = vld [vmem:[#allocation11 + $0x398] sm:$0xff]
    %v4528 = vld [vmem:[#allocation11 + $0x3a0] sm:$0xff]
    %v4529 = vld [vmem:[#allocation11 + $0x3a8] sm:$0xff]
    %v4530 = vld [vmem:[#allocation11 + $0x3b0] sm:$0xff]
    %v4531 = vld [vmem:[#allocation11 + $0x3b8] sm:$0xff]
    %v4532 = vld [vmem:[#allocation11 + $0x3c0] sm:$0xff]
    %v4533 = vld [vmem:[#allocation11 + $0x3c8] sm:$0xff]
    %v4534 = vld [vmem:[#allocation11 + $0x3d0] sm:$0xff]
    %v4535 = vld [vmem:[#allocation11 + $0x3d8] sm:$0xff]
    %v4536 = vld [vmem:[#allocation11 + $0x3e0] sm:$0xff]
    %v4537 = vld [vmem:[#allocation11 + $0x3e8] sm:$0xff]
    %v4538 = vld [vmem:[#allocation11 + $0x3f0] sm:$0xff]
    %v4539 = vld [vmem:[#allocation11 + $0x3f8] sm:$0xff]
    %v4540 = vld [vmem:[#allocation13] sm:$0xf]
    %v4542 = vlaneseq
    %v4543 = vshrl.u32 %v4542, 7
    %v4544 = vsub.s32 0, %v4543
    %v4545 = vrot.slane %v4540, %v4544
    %v4546 = vlaneseq
    %v4547 = vshrl.u32 %v4546, 7
    %v4548 = vsub.s32 1, %v4547
    %v4549 = vrot.slane %v4540, %v4548
    %v4550 = vlaneseq
    %v4551 = vshrl.u32 %v4550, 7
    %v4552 = vsub.s32 2, %v4551
    %v4553 = vrot.slane %v4540, %v4552
    %v4554 = vlaneseq
    %v4555 = vshrl.u32 %v4554, 7
    %v4556 = vsub.s32 3, %v4555
    %v4557 = vrot.slane %v4540, %v4556
    %v4690 = vunpack.c.l.b16 %v4412
    %v4691 = vunpack.c.h.b16 %v4412
    %v4692 = vunpack.c.l.b16 %v4413
    %v4693 = vunpack.c.h.b16 %v4413
    %v4694 = vunpack.c.l.b16 %v4414
    %v4695 = vunpack.c.h.b16 %v4414
    %v4696 = vunpack.c.l.b16 %v4415
    %v4697 = vunpack.c.h.b16 %v4415
    %v4698 = vunpack.c.l.b16 %v4416
    %v4699 = vunpack.c.h.b16 %v4416
    %v4700 = vunpack.c.l.b16 %v4417
    %v4701 = vunpack.c.h.b16 %v4417
    %v4702 = vunpack.c.l.b16 %v4418
    %v4703 = vunpack.c.h.b16 %v4418
    %v4704 = vunpack.c.l.b16 %v4419
    %v4705 = vunpack.c.h.b16 %v4419
    %v4706 = vunpack.c.l.b16 %v4420
    %v4707 = vunpack.c.h.b16 %v4420
    %v4708 = vunpack.c.l.b16 %v4421
    %v4709 = vunpack.c.h.b16 %v4421
    %v4710 = vunpack.c.l.b16 %v4422
    %v4711 = vunpack.c.h.b16 %v4422
    %v4712 = vunpack.c.l.b16 %v4423
    %v4713 = vunpack.c.h.b16 %v4423
    %v4714 = vunpack.c.l.b16 %v4424
    %v4715 = vunpack.c.h.b16 %v4424
    %v4716 = vunpack.c.l.b16 %v4425
    %v4717 = vunpack.c.h.b16 %v4425
    %v4718 = vunpack.c.l.b16 %v4426
    %v4719 = vunpack.c.h.b16 %v4426
    %v4720 = vunpack.c.l.b16 %v4427
    %v4721 = vunpack.c.h.b16 %v4427
    %v4722 = vunpack.c.l.b16 %v4428
    %v4723 = vunpack.c.h.b16 %v4428
    %v4724 = vunpack.c.l.b16 %v4429
    %v4725 = vunpack.c.h.b16 %v4429
    %v4726 = vunpack.c.l.b16 %v4430
    %v4727 = vunpack.c.h.b16 %v4430
    %v4728 = vunpack.c.l.b16 %v4431
    %v4729 = vunpack.c.h.b16 %v4431
    %v4730 = vunpack.c.l.b16 %v4432
    %v4731 = vunpack.c.h.b16 %v4432
    %v4732 = vunpack.c.l.b16 %v4433
    %v4733 = vunpack.c.h.b16 %v4433
    %v4734 = vunpack.c.l.b16 %v4434
    %v4735 = vunpack.c.h.b16 %v4434
    %v4736 = vunpack.c.l.b16 %v4435
    %v4737 = vunpack.c.h.b16 %v4435
    %v4738 = vunpack.c.l.b16 %v4436
    %v4739 = vunpack.c.h.b16 %v4436
    %v4740 = vunpack.c.l.b16 %v4437
    %v4741 = vunpack.c.h.b16 %v4437
    %v4742 = vunpack.c.l.b16 %v4438
    %v4743 = vunpack.c.h.b16 %v4438
    %v4744 = vunpack.c.l.b16 %v4439
    %v4745 = vunpack.c.h.b16 %v4439
    %v4746 = vunpack.c.l.b16 %v4440
    %v4747 = vunpack.c.h.b16 %v4440
    %v4748 = vunpack.c.l.b16 %v4441
    %v4749 = vunpack.c.h.b16 %v4441
    %v4750 = vunpack.c.l.b16 %v4442
    %v4751 = vunpack.c.h.b16 %v4442
    %v4752 = vunpack.c.l.b16 %v4443
    %v4753 = vunpack.c.h.b16 %v4443
    %v4754 = vunpack.c.l.b16 %v4444
    %v4755 = vunpack.c.h.b16 %v4444
    %v4756 = vunpack.c.l.b16 %v4445
    %v4757 = vunpack.c.h.b16 %v4445
    %v4758 = vunpack.c.l.b16 %v4446
    %v4759 = vunpack.c.h.b16 %v4446
    %v4760 = vunpack.c.l.b16 %v4447
    %v4761 = vunpack.c.h.b16 %v4447
    %v4762 = vunpack.c.l.b16 %v4448
    %v4763 = vunpack.c.h.b16 %v4448
    %v4764 = vunpack.c.l.b16 %v4449
    %v4765 = vunpack.c.h.b16 %v4449
    %v4766 = vunpack.c.l.b16 %v4450
    %v4767 = vunpack.c.h.b16 %v4450
    %v4768 = vunpack.c.l.b16 %v4451
    %v4769 = vunpack.c.h.b16 %v4451
    %v4770 = vunpack.c.l.b16 %v4452
    %v4771 = vunpack.c.h.b16 %v4452
    %v4772 = vunpack.c.l.b16 %v4453
    %v4773 = vunpack.c.h.b16 %v4453
    %v4774 = vunpack.c.l.b16 %v4454
    %v4775 = vunpack.c.h.b16 %v4454
    %v4776 = vunpack.c.l.b16 %v4455
    %v4777 = vunpack.c.h.b16 %v4455
    %v4778 = vunpack.c.l.b16 %v4456
    %v4779 = vunpack.c.h.b16 %v4456
    %v4780 = vunpack.c.l.b16 %v4457
    %v4781 = vunpack.c.h.b16 %v4457
    %v4782 = vunpack.c.l.b16 %v4458
    %v4783 = vunpack.c.h.b16 %v4458
    %v4784 = vunpack.c.l.b16 %v4459
    %v4785 = vunpack.c.h.b16 %v4459
    %v4786 = vunpack.c.l.b16 %v4460
    %v4787 = vunpack.c.h.b16 %v4460
    %v4788 = vunpack.c.l.b16 %v4461
    %v4789 = vunpack.c.h.b16 %v4461
    %v4790 = vunpack.c.l.b16 %v4462
    %v4791 = vunpack.c.h.b16 %v4462
    %v4792 = vunpack.c.l.b16 %v4463
    %v4793 = vunpack.c.h.b16 %v4463
    %v4794 = vunpack.c.l.b16 %v4464
    %v4795 = vunpack.c.h.b16 %v4464
    %v4796 = vunpack.c.l.b16 %v4465
    %v4797 = vunpack.c.h.b16 %v4465
    %v4798 = vunpack.c.l.b16 %v4466
    %v4799 = vunpack.c.h.b16 %v4466
    %v4800 = vunpack.c.l.b16 %v4467
    %v4801 = vunpack.c.h.b16 %v4467
    %v4802 = vunpack.c.l.b16 %v4468
    %v4803 = vunpack.c.h.b16 %v4468
    %v4804 = vunpack.c.l.b16 %v4469
    %v4805 = vunpack.c.h.b16 %v4469
    %v4806 = vunpack.c.l.b16 %v4470
    %v4807 = vunpack.c.h.b16 %v4470
    %v4808 = vunpack.c.l.b16 %v4471
    %v4809 = vunpack.c.h.b16 %v4471
    %v4810 = vunpack.c.l.b16 %v4472
    %v4811 = vunpack.c.h.b16 %v4472
    %v4812 = vunpack.c.l.b16 %v4473
    %v4813 = vunpack.c.h.b16 %v4473
    %v4814 = vunpack.c.l.b16 %v4474
    %v4815 = vunpack.c.h.b16 %v4474
    %v4816 = vunpack.c.l.b16 %v4475
    %v4817 = vunpack.c.h.b16 %v4475
    %v4818 = vunpack.c.l.b16 %v4476
    %v4819 = vunpack.c.h.b16 %v4476
    %v4820 = vunpack.c.l.b16 %v4477
    %v4821 = vunpack.c.h.b16 %v4477
    %v4822 = vunpack.c.l.b16 %v4478
    %v4823 = vunpack.c.h.b16 %v4478
    %v4824 = vunpack.c.l.b16 %v4479
    %v4825 = vunpack.c.h.b16 %v4479
    %v4826 = vunpack.c.l.b16 %v4480
    %v4827 = vunpack.c.h.b16 %v4480
    %v4828 = vunpack.c.l.b16 %v4481
    %v4829 = vunpack.c.h.b16 %v4481
    %v4830 = vunpack.c.l.b16 %v4482
    %v4831 = vunpack.c.h.b16 %v4482
    %v4832 = vunpack.c.l.b16 %v4483
    %v4833 = vunpack.c.h.b16 %v4483
    %v4834 = vunpack.c.l.b16 %v4484
    %v4835 = vunpack.c.h.b16 %v4484
    %v4836 = vunpack.c.l.b16 %v4485
    %v4837 = vunpack.c.h.b16 %v4485
    %v4838 = vunpack.c.l.b16 %v4486
    %v4839 = vunpack.c.h.b16 %v4486
    %v4840 = vunpack.c.l.b16 %v4487
    %v4841 = vunpack.c.h.b16 %v4487
    %v4842 = vunpack.c.l.b16 %v4488
    %v4843 = vunpack.c.h.b16 %v4488
    %v4844 = vunpack.c.l.b16 %v4489
    %v4845 = vunpack.c.h.b16 %v4489
    %v4846 = vunpack.c.l.b16 %v4490
    %v4847 = vunpack.c.h.b16 %v4490
    %v4848 = vunpack.c.l.b16 %v4491
    %v4849 = vunpack.c.h.b16 %v4491
    %v4850 = vunpack.c.l.b16 %v4492
    %v4851 = vunpack.c.h.b16 %v4492
    %v4852 = vunpack.c.l.b16 %v4493
    %v4853 = vunpack.c.h.b16 %v4493
    %v4854 = vunpack.c.l.b16 %v4494
    %v4855 = vunpack.c.h.b16 %v4494
    %v4856 = vunpack.c.l.b16 %v4495
    %v4857 = vunpack.c.h.b16 %v4495
    %v4858 = vunpack.c.l.b16 %v4496
    %v4859 = vunpack.c.h.b16 %v4496
    %v4860 = vunpack.c.l.b16 %v4497
    %v4861 = vunpack.c.h.b16 %v4497
    %v4862 = vunpack.c.l.b16 %v4498
    %v4863 = vunpack.c.h.b16 %v4498
    %v4864 = vunpack.c.l.b16 %v4499
    %v4865 = vunpack.c.h.b16 %v4499
    %v4866 = vunpack.c.l.b16 %v4500
    %v4867 = vunpack.c.h.b16 %v4500
    %v4868 = vunpack.c.l.b16 %v4501
    %v4869 = vunpack.c.h.b16 %v4501
    %v4870 = vunpack.c.l.b16 %v4502
    %v4871 = vunpack.c.h.b16 %v4502
    %v4872 = vunpack.c.l.b16 %v4503
    %v4873 = vunpack.c.h.b16 %v4503
    %v4874 = vunpack.c.l.b16 %v4504
    %v4875 = vunpack.c.h.b16 %v4504
    %v4876 = vunpack.c.l.b16 %v4505
    %v4877 = vunpack.c.h.b16 %v4505
    %v4878 = vunpack.c.l.b16 %v4506
    %v4879 = vunpack.c.h.b16 %v4506
    %v4880 = vunpack.c.l.b16 %v4507
    %v4881 = vunpack.c.h.b16 %v4507
    %v4882 = vunpack.c.l.b16 %v4508
    %v4883 = vunpack.c.h.b16 %v4508
    %v4884 = vunpack.c.l.b16 %v4509
    %v4885 = vunpack.c.h.b16 %v4509
    %v4886 = vunpack.c.l.b16 %v4510
    %v4887 = vunpack.c.h.b16 %v4510
    %v4888 = vunpack.c.l.b16 %v4511
    %v4889 = vunpack.c.h.b16 %v4511
    %v4890 = vunpack.c.l.b16 %v4512
    %v4891 = vunpack.c.h.b16 %v4512
    %v4892 = vunpack.c.l.b16 %v4513
    %v4893 = vunpack.c.h.b16 %v4513
    %v4894 = vunpack.c.l.b16 %v4514
    %v4895 = vunpack.c.h.b16 %v4514
    %v4896 = vunpack.c.l.b16 %v4515
    %v4897 = vunpack.c.h.b16 %v4515
    %v4898 = vunpack.c.l.b16 %v4516
    %v4899 = vunpack.c.h.b16 %v4516
    %v4900 = vunpack.c.l.b16 %v4517
    %v4901 = vunpack.c.h.b16 %v4517
    %v4902 = vunpack.c.l.b16 %v4518
    %v4903 = vunpack.c.h.b16 %v4518
    %v4904 = vunpack.c.l.b16 %v4519
    %v4905 = vunpack.c.h.b16 %v4519
    %v4906 = vunpack.c.l.b16 %v4520
    %v4907 = vunpack.c.h.b16 %v4520
    %v4908 = vunpack.c.l.b16 %v4521
    %v4909 = vunpack.c.h.b16 %v4521
    %v4910 = vunpack.c.l.b16 %v4522
    %v4911 = vunpack.c.h.b16 %v4522
    %v4912 = vunpack.c.l.b16 %v4523
    %v4913 = vunpack.c.h.b16 %v4523
    %v4914 = vunpack.c.l.b16 %v4524
    %v4915 = vunpack.c.h.b16 %v4524
    %v4916 = vunpack.c.l.b16 %v4525
    %v4917 = vunpack.c.h.b16 %v4525
    %v4918 = vunpack.c.l.b16 %v4526
    %v4919 = vunpack.c.h.b16 %v4526
    %v4920 = vunpack.c.l.b16 %v4527
    %v4921 = vunpack.c.h.b16 %v4527
    %v4922 = vunpack.c.l.b16 %v4528
    %v4923 = vunpack.c.h.b16 %v4528
    %v4924 = vunpack.c.l.b16 %v4529
    %v4925 = vunpack.c.h.b16 %v4529
    %v4926 = vunpack.c.l.b16 %v4530
    %v4927 = vunpack.c.h.b16 %v4530
    %v4928 = vunpack.c.l.b16 %v4531
    %v4929 = vunpack.c.h.b16 %v4531
    %v4930 = vunpack.c.l.b16 %v4532
    %v4931 = vunpack.c.h.b16 %v4532
    %v4932 = vunpack.c.l.b16 %v4533
    %v4933 = vunpack.c.h.b16 %v4533
    %v4934 = vunpack.c.l.b16 %v4534
    %v4935 = vunpack.c.h.b16 %v4534
    %v4936 = vunpack.c.l.b16 %v4535
    %v4937 = vunpack.c.h.b16 %v4535
    %v4938 = vunpack.c.l.b16 %v4536
    %v4939 = vunpack.c.h.b16 %v4536
    %v4940 = vunpack.c.l.b16 %v4537
    %v4941 = vunpack.c.h.b16 %v4537
    %v4942 = vunpack.c.l.b16 %v4538
    %v4943 = vunpack.c.h.b16 %v4538
    %v4944 = vunpack.c.l.b16 %v4539
    %v4945 = vunpack.c.h.b16 %v4539
    %v4946 = vpack.c.b16 %v4694, %v4690
    %v4947 = vpack.c.b16 %v4695, %v4691
    %v4948 = vpack.c.b16 %v4696, %v4692
    %v4949 = vpack.c.b16 %v4697, %v4693
    %v4950 = vpack.c.b16 %v4702, %v4698
    %v4951 = vpack.c.b16 %v4703, %v4699
    %v4952 = vpack.c.b16 %v4704, %v4700
    %v4953 = vpack.c.b16 %v4705, %v4701
    %v4954 = vpack.c.b16 %v4710, %v4706
    %v4955 = vpack.c.b16 %v4711, %v4707
    %v4956 = vpack.c.b16 %v4712, %v4708
    %v4957 = vpack.c.b16 %v4713, %v4709
    %v4958 = vpack.c.b16 %v4718, %v4714
    %v4959 = vpack.c.b16 %v4719, %v4715
    %v4960 = vpack.c.b16 %v4720, %v4716
    %v4961 = vpack.c.b16 %v4721, %v4717
    %v4962 = vpack.c.b16 %v4726, %v4722
    %v4963 = vpack.c.b16 %v4727, %v4723
    %v4964 = vpack.c.b16 %v4728, %v4724
    %v4965 = vpack.c.b16 %v4729, %v4725
    %v4966 = vpack.c.b16 %v4734, %v4730
    %v4967 = vpack.c.b16 %v4735, %v4731
    %v4968 = vpack.c.b16 %v4736, %v4732
    %v4969 = vpack.c.b16 %v4737, %v4733
    %v4970 = vpack.c.b16 %v4742, %v4738
    %v4971 = vpack.c.b16 %v4743, %v4739
    %v4972 = vpack.c.b16 %v4744, %v4740
    %v4973 = vpack.c.b16 %v4745, %v4741
    %v4974 = vpack.c.b16 %v4750, %v4746
    %v4975 = vpack.c.b16 %v4751, %v4747
    %v4976 = vpack.c.b16 %v4752, %v4748
    %v4977 = vpack.c.b16 %v4753, %v4749
    %v4978 = vpack.c.b16 %v4758, %v4754
    %v4979 = vpack.c.b16 %v4759, %v4755
    %v4980 = vpack.c.b16 %v4760, %v4756
    %v4981 = vpack.c.b16 %v4761, %v4757
    %v4982 = vpack.c.b16 %v4766, %v4762
    %v4983 = vpack.c.b16 %v4767, %v4763
    %v4984 = vpack.c.b16 %v4768, %v4764
    %v4985 = vpack.c.b16 %v4769, %v4765
    %v4986 = vpack.c.b16 %v4774, %v4770
    %v4987 = vpack.c.b16 %v4775, %v4771
    %v4988 = vpack.c.b16 %v4776, %v4772
    %v4989 = vpack.c.b16 %v4777, %v4773
    %v4990 = vpack.c.b16 %v4782, %v4778
    %v4991 = vpack.c.b16 %v4783, %v4779
    %v4992 = vpack.c.b16 %v4784, %v4780
    %v4993 = vpack.c.b16 %v4785, %v4781
    %v4994 = vpack.c.b16 %v4790, %v4786
    %v4995 = vpack.c.b16 %v4791, %v4787
    %v4996 = vpack.c.b16 %v4792, %v4788
    %v4997 = vpack.c.b16 %v4793, %v4789
    %v4998 = vpack.c.b16 %v4798, %v4794
    %v4999 = vpack.c.b16 %v4799, %v4795
    %v5000 = vpack.c.b16 %v4800, %v4796
    %v5001 = vpack.c.b16 %v4801, %v4797
    %v5002 = vpack.c.b16 %v4806, %v4802
    %v5003 = vpack.c.b16 %v4807, %v4803
    %v5004 = vpack.c.b16 %v4808, %v4804
    %v5005 = vpack.c.b16 %v4809, %v4805
    %v5006 = vpack.c.b16 %v4814, %v4810
    %v5007 = vpack.c.b16 %v4815, %v4811
    %v5008 = vpack.c.b16 %v4816, %v4812
    %v5009 = vpack.c.b16 %v4817, %v4813
    %v5010 = vpack.c.b16 %v4822, %v4818
    %v5011 = vpack.c.b16 %v4823, %v4819
    %v5012 = vpack.c.b16 %v4824, %v4820
    %v5013 = vpack.c.b16 %v4825, %v4821
    %v5014 = vpack.c.b16 %v4830, %v4826
    %v5015 = vpack.c.b16 %v4831, %v4827
    %v5016 = vpack.c.b16 %v4832, %v4828
    %v5017 = vpack.c.b16 %v4833, %v4829
    %v5018 = vpack.c.b16 %v4838, %v4834
    %v5019 = vpack.c.b16 %v4839, %v4835
    %v5020 = vpack.c.b16 %v4840, %v4836
    %v5021 = vpack.c.b16 %v4841, %v4837
    %v5022 = vpack.c.b16 %v4846, %v4842
    %v5023 = vpack.c.b16 %v4847, %v4843
    %v5024 = vpack.c.b16 %v4848, %v4844
    %v5025 = vpack.c.b16 %v4849, %v4845
    %v5026 = vpack.c.b16 %v4854, %v4850
    %v5027 = vpack.c.b16 %v4855, %v4851
    %v5028 = vpack.c.b16 %v4856, %v4852
    %v5029 = vpack.c.b16 %v4857, %v4853
    %v5030 = vpack.c.b16 %v4862, %v4858
    %v5031 = vpack.c.b16 %v4863, %v4859
    %v5032 = vpack.c.b16 %v4864, %v4860
    %v5033 = vpack.c.b16 %v4865, %v4861
    %v5034 = vpack.c.b16 %v4870, %v4866
    %v5035 = vpack.c.b16 %v4871, %v4867
    %v5036 = vpack.c.b16 %v4872, %v4868
    %v5037 = vpack.c.b16 %v4873, %v4869
    %v5038 = vpack.c.b16 %v4878, %v4874
    %v5039 = vpack.c.b16 %v4879, %v4875
    %v5040 = vpack.c.b16 %v4880, %v4876
    %v5041 = vpack.c.b16 %v4881, %v4877
    %v5042 = vpack.c.b16 %v4886, %v4882
    %v5043 = vpack.c.b16 %v4887, %v4883
    %v5044 = vpack.c.b16 %v4888, %v4884
    %v5045 = vpack.c.b16 %v4889, %v4885
    %v5046 = vpack.c.b16 %v4894, %v4890
    %v5047 = vpack.c.b16 %v4895, %v4891
    %v5048 = vpack.c.b16 %v4896, %v4892
    %v5049 = vpack.c.b16 %v4897, %v4893
    %v5050 = vpack.c.b16 %v4902, %v4898
    %v5051 = vpack.c.b16 %v4903, %v4899
    %v5052 = vpack.c.b16 %v4904, %v4900
    %v5053 = vpack.c.b16 %v4905, %v4901
    %v5054 = vpack.c.b16 %v4910, %v4906
    %v5055 = vpack.c.b16 %v4911, %v4907
    %v5056 = vpack.c.b16 %v4912, %v4908
    %v5057 = vpack.c.b16 %v4913, %v4909
    %v5058 = vpack.c.b16 %v4918, %v4914
    %v5059 = vpack.c.b16 %v4919, %v4915
    %v5060 = vpack.c.b16 %v4920, %v4916
    %v5061 = vpack.c.b16 %v4921, %v4917
    %v5062 = vpack.c.b16 %v4926, %v4922
    %v5063 = vpack.c.b16 %v4927, %v4923
    %v5064 = vpack.c.b16 %v4928, %v4924
    %v5065 = vpack.c.b16 %v4929, %v4925
    %v5066 = vpack.c.b16 %v4934, %v4930
    %v5067 = vpack.c.b16 %v4935, %v4931
    %v5068 = vpack.c.b16 %v4936, %v4932
    %v5069 = vpack.c.b16 %v4937, %v4933
    %v5070 = vpack.c.b16 %v4942, %v4938
    %v5071 = vpack.c.b16 %v4943, %v4939
    %v5072 = vpack.c.b16 %v4944, %v4940
    %v5073 = vpack.c.b16 %v4945, %v4941
    %5202 = vmatprep.subr.bf16.mxu0 %v4947
    %5203 = vmatpush1.bf16.msra.mxu0 %v4946
    %5204 = vmatprep.subr.bf16.mxu0 %v4951
    %5205 = vmatpush1.bf16.msra.mxu0 %v4950
    %5206 = vmatprep.subr.bf16.mxu0 %v4955
    %5207 = vmatpush1.bf16.msra.mxu0 %v4954
    %5208 = vmatprep.subr.bf16.mxu0 %v4959
    %5209 = vmatpush1.bf16.msra.mxu0 %v4958
    %5210 = vmatprep.subr.bf16.mxu0 %v4963
    %5211 = vmatpush1.bf16.msra.mxu0 %v4962
    %5212 = vmatprep.subr.bf16.mxu0 %v4967
    %5213 = vmatpush1.bf16.msra.mxu0 %v4966
    %5214 = vmatprep.subr.bf16.mxu0 %v4971
    %5215 = vmatpush1.bf16.msra.mxu0 %v4970
    %5216 = vmatprep.subr.bf16.mxu0 %v4975
    %5217 = vmatpush1.bf16.msra.mxu0 %v4974
    %5218 = vmatprep.subr.bf16.mxu0 %v4979
    %5219 = vmatpush1.bf16.msra.mxu0 %v4978
    %5220 = vmatprep.subr.bf16.mxu0 %v4983
    %5221 = vmatpush1.bf16.msra.mxu0 %v4982
    %5222 = vmatprep.subr.bf16.mxu0 %v4987
    %5223 = vmatpush1.bf16.msra.mxu0 %v4986
    %5224 = vmatprep.subr.bf16.mxu0 %v4991
    %5225 = vmatpush1.bf16.msra.mxu0 %v4990
    %5226 = vmatprep.subr.bf16.mxu0 %v4995
    %5227 = vmatpush1.bf16.msra.mxu0 %v4994
    %5228 = vmatprep.subr.bf16.mxu0 %v4999
    %5229 = vmatpush1.bf16.msra.mxu0 %v4998
    %5230 = vmatprep.subr.bf16.mxu0 %v5003
    %5231 = vmatpush1.bf16.msra.mxu0 %v5002
    %5232 = vmatprep.subr.bf16.mxu0 %v5007
    %5233 = vmatpush1.bf16.msra.mxu0 %v5006
    %5234 = vmatprep.mubr.bf16.mxu0 %v4409
    %5235 = vmatmul.mubr.bf16.gmra.mrb[0].mxu0 %v4408
    %v5236 = vpop.f32.mrb[0].mxu0
    %v5237 = vadd.f32 %v4545, %v5236
    %v5238 = vpop.f32.mrb[0].mxu0
    %v5239 = vadd.f32 %v4549, %v5238
    %v5240 = vpop.f32.mrb[0].mxu0
    %v5241 = vpop.f32.mrb[0].mxu0
    %5242 = vdwg.mxu0
    %5243 = vmatprep.subr.bf16.mxu0 %v5011
    %5244 = vmatpush1.bf16.msra.mxu0 %v5010
    %5245 = vmatprep.subr.bf16.mxu0 %v5015
    %5246 = vmatpush1.bf16.msra.mxu0 %v5014
    %5247 = vmatprep.subr.bf16.mxu0 %v5019
    %5248 = vmatpush1.bf16.msra.mxu0 %v5018
    %5249 = vmatprep.subr.bf16.mxu0 %v5023
    %5250 = vmatpush1.bf16.msra.mxu0 %v5022
    %5251 = vmatprep.subr.bf16.mxu0 %v5027
    %5252 = vmatpush1.bf16.msra.mxu0 %v5026
    %5253 = vmatprep.subr.bf16.mxu0 %v5031
    %5254 = vmatpush1.bf16.msra.mxu0 %v5030
    %5255 = vmatprep.subr.bf16.mxu0 %v5035
    %5256 = vmatpush1.bf16.msra.mxu0 %v5034
    %5257 = vmatprep.subr.bf16.mxu0 %v5039
    %5258 = vmatpush1.bf16.msra.mxu0 %v5038
    %5259 = vmatprep.subr.bf16.mxu0 %v5043
    %5260 = vmatpush1.bf16.msra.mxu0 %v5042
    %5261 = vmatprep.subr.bf16.mxu0 %v5047
    %5262 = vmatpush1.bf16.msra.mxu0 %v5046
    %5263 = vmatprep.subr.bf16.mxu0 %v5051
    %5264 = vmatpush1.bf16.msra.mxu0 %v5050
    %5265 = vmatprep.subr.bf16.mxu0 %v5055
    %5266 = vmatpush1.bf16.msra.mxu0 %v5054
    %5267 = vmatprep.subr.bf16.mxu0 %v5059
    %5268 = vmatpush1.bf16.msra.mxu0 %v5058
    %5269 = vmatprep.subr.bf16.mxu0 %v5063
    %5270 = vmatpush1.bf16.msra.mxu0 %v5062
    %5271 = vmatprep.subr.bf16.mxu0 %v5067
    %5272 = vmatpush1.bf16.msra.mxu0 %v5066
    %5273 = vmatprep.subr.bf16.mxu0 %v5071
    %5274 = vmatpush1.bf16.msra.mxu0 %v5070
    %5275 = vmatprep.mubr.bf16.mxu0 %v4411
    %5276 = vmatmul.mubr.bf16.gmra.mrb[0].mxu0 %v4410
    %v5277 = vpop.f32.mrb[0].mxu0
    %v5278 = vadd.f32 %v5237, %v5277
    %v5279 = vpop.f32.mrb[0].mxu0
    %v5280 = vadd.f32 %v5239, %v5279
    %v5281 = vpop.f32.mrb[0].mxu0
    %v5282 = vpop.f32.mrb[0].mxu0
    %5283 = vdwg.mxu0
    %5284 = vmatprep.subr.bf16.mxu0 %v4949
    %5285 = vmatpush1.bf16.msra.mxu0 %v4948
    %5286 = vmatprep.subr.bf16.mxu0 %v4953
    %5287 = vmatpush1.bf16.msra.mxu0 %v4952
    %5288 = vmatprep.subr.bf16.mxu0 %v4957
    %5289 = vmatpush1.bf16.msra.mxu0 %v4956
    %5290 = vmatprep.subr.bf16.mxu0 %v4961
    %5291 = vmatpush1.bf16.msra.mxu0 %v4960
    %5292 = vmatprep.subr.bf16.mxu0 %v4965
    %5293 = vmatpush1.bf16.msra.mxu0 %v4964
    %5294 = vmatprep.subr.bf16.mxu0 %v4969
    %5295 = vmatpush1.bf16.msra.mxu0 %v4968
    %5296 = vmatprep.subr.bf16.mxu0 %v4973
    %5297 = vmatpush1.bf16.msra.mxu0 %v4972
    %5298 = vmatprep.subr.bf16.mxu0 %v4977
    %5299 = vmatpush1.bf16.msra.mxu0 %v4976
    %5300 = vmatprep.subr.bf16.mxu0 %v4981
    %5301 = vmatpush1.bf16.msra.mxu0 %v4980
    %5302 = vmatprep.subr.bf16.mxu0 %v4985
    %5303 = vmatpush1.bf16.msra.mxu0 %v4984
    %5304 = vmatprep.subr.bf16.mxu0 %v4989
    %5305 = vmatpush1.bf16.msra.mxu0 %v4988
    %5306 = vmatprep.subr.bf16.mxu0 %v4993
    %5307 = vmatpush1.bf16.msra.mxu0 %v4992
    %5308 = vmatprep.subr.bf16.mxu0 %v4997
    %5309 = vmatpush1.bf16.msra.mxu0 %v4996
    %5310 = vmatprep.subr.bf16.mxu0 %v5001
    %5311 = vmatpush1.bf16.msra.mxu0 %v5000
    %5312 = vmatprep.subr.bf16.mxu0 %v5005
    %5313 = vmatpush1.bf16.msra.mxu0 %v5004
    %5314 = vmatprep.subr.bf16.mxu0 %v5009
    %5315 = vmatpush1.bf16.msra.mxu0 %v5008
    %5316 = vmatprep.mubr.bf16.mxu0 %v4409
    %5317 = vmatmul.mubr.bf16.gmra.mrb[0].mxu0 %v4408
    %v5318 = vpop.f32.mrb[0].mxu0
    %v5319 = vadd.f32 %v4553, %v5318
    %v5320 = vpop.f32.mrb[0].mxu0
    %v5321 = vadd.f32 %v4557, %v5320
    %v5322 = vpop.f32.mrb[0].mxu0
    %v5323 = vpop.f32.mrb[0].mxu0
    %5324 = vdwg.mxu0
    %5325 = vmatprep.subr.bf16.mxu0 %v5013
    %5326 = vmatpush1.bf16.msra.mxu0 %v5012
    %5327 = vmatprep.subr.bf16.mxu0 %v5017
    %5328 = vmatpush1.bf16.msra.mxu0 %v5016
    %5329 = vmatprep.subr.bf16.mxu0 %v5021
    %5330 = vmatpush1.bf16.msra.mxu0 %v5020
    %5331 = vmatprep.subr.bf16.mxu0 %v5025
    %5332 = vmatpush1.bf16.msra.mxu0 %v5024
    %5333 = vmatprep.subr.bf16.mxu0 %v5029
    %5334 = vmatpush1.bf16.msra.mxu0 %v5028
    %5335 = vmatprep.subr.bf16.mxu0 %v5033
    %5336 = vmatpush1.bf16.msra.mxu0 %v5032
    %5337 = vmatprep.subr.bf16.mxu0 %v5037
    %5338 = vmatpush1.bf16.msra.mxu0 %v5036
    %5339 = vmatprep.subr.bf16.mxu0 %v5041
    %5340 = vmatpush1.bf16.msra.mxu0 %v5040
    %5341 = vmatprep.subr.bf16.mxu0 %v5045
    %5342 = vmatpush1.bf16.msra.mxu0 %v5044
    %5343 = vmatprep.subr.bf16.mxu0 %v5049
    %5344 = vmatpush1.bf16.msra.mxu0 %v5048
    %5345 = vmatprep.subr.bf16.mxu0 %v5053
    %5346 = vmatpush1.bf16.msra.mxu0 %v5052
    %5347 = vmatprep.subr.bf16.mxu0 %v5057
    %5348 = vmatpush1.bf16.msra.mxu0 %v5056
    %5349 = vmatprep.subr.bf16.mxu0 %v5061
    %5350 = vmatpush1.bf16.msra.mxu0 %v5060
    %5351 = vmatprep.subr.bf16.mxu0 %v5065
    %5352 = vmatpush1.bf16.msra.mxu0 %v5064
    %5353 = vmatprep.subr.bf16.mxu0 %v5069
    %5354 = vmatpush1.bf16.msra.mxu0 %v5068
    %5355 = vmatprep.subr.bf16.mxu0 %v5073
    %5356 = vmatpush1.bf16.msra.mxu0 %v5072
    %5357 = vmatprep.mubr.bf16.mxu0 %v4411
    %5358 = vmatmul.mubr.bf16.gmra.mrb[0].mxu0 %v4410
    %v5359 = vpop.f32.mrb[0].mxu0
    %v5360 = vadd.f32 %v5319, %v5359
    %v5361 = vpop.f32.mrb[0].mxu0
    %v5362 = vadd.f32 %v5321, %v5361
    %v5363 = vpop.f32.mrb[0].mxu0
    %v5364 = vpop.f32.mrb[0].mxu0
    %5365 = vdwg.mxu0
    %v5366 = vmax.f32 %v5278, 0.0
    %v5367 = vmax.f32 %v5280, 0.0
    %v5368 = vmax.f32 %v5360, 0.0
    %v5369 = vmax.f32 %v5362, 0.0
    %v5370 = vpack.c.bf16 %v5366, %v5366
    %v5371 = vpack.c.bf16 %v5367, %v5367
    %v5372 = vpack.c.bf16 %v5368, %v5368
    %v5373 = vpack.c.bf16 %v5369, %v5369
    %v5374 = vld [vmem:[#allocation14] sm:$0xff]
    %v5375 = vld [vmem:[#allocation14 + $0x8] sm:$0xff]
    %v5376 = vld [vmem:[#allocation14 + $0x10] sm:$0xff]
    %v5377 = vld [vmem:[#allocation14 + $0x18] sm:$0xff]
    %v5378 = vld [vmem:[#allocation14 + $0x20] sm:$0xff]
    %v5379 = vld [vmem:[#allocation14 + $0x28] sm:$0xff]
    %v5380 = vld [vmem:[#allocation14 + $0x30] sm:$0xff]
    %v5381 = vld [vmem:[#allocation14 + $0x38] sm:$0xff]
    %v5382 = vld [vmem:[#allocation14 + $0x40] sm:$0xff]
    %v5383 = vld [vmem:[#allocation14 + $0x48] sm:$0xff]
    %v5384 = vld [vmem:[#allocation14 + $0x50] sm:$0xff]
    %v5385 = vld [vmem:[#allocation14 + $0x58] sm:$0xff]
    %v5386 = vld [vmem:[#allocation14 + $0x60] sm:$0xff]
    %v5387 = vld [vmem:[#allocation14 + $0x68] sm:$0xff]
    %v5388 = vld [vmem:[#allocation14 + $0x70] sm:$0xff]
    %v5389 = vld [vmem:[#allocation14 + $0x78] sm:$0xff]
    %v5390 = vld [vmem:[#allocation14 + $0x80] sm:$0xff]
    %v5391 = vld [vmem:[#allocation14 + $0x88] sm:$0xff]
    %v5392 = vld [vmem:[#allocation14 + $0x90] sm:$0xff]
    %v5393 = vld [vmem:[#allocation14 + $0x98] sm:$0xff]
    %v5394 = vld [vmem:[#allocation14 + $0xa0] sm:$0xff]
    %v5395 = vld [vmem:[#allocation14 + $0xa8] sm:$0xff]
    %v5396 = vld [vmem:[#allocation14 + $0xb0] sm:$0xff]
    %v5397 = vld [vmem:[#allocation14 + $0xb8] sm:$0xff]
    %v5398 = vld [vmem:[#allocation14 + $0xc0] sm:$0xff]
    %v5399 = vld [vmem:[#allocation14 + $0xc8] sm:$0xff]
    %v5400 = vld [vmem:[#allocation14 + $0xd0] sm:$0xff]
    %v5401 = vld [vmem:[#allocation14 + $0xd8] sm:$0xff]
    %v5402 = vld [vmem:[#allocation14 + $0xe0] sm:$0xff]
    %v5403 = vld [vmem:[#allocation14 + $0xe8] sm:$0xff]
    %v5404 = vld [vmem:[#allocation14 + $0xf0] sm:$0xff]
    %v5405 = vld [vmem:[#allocation14 + $0xf8] sm:$0xff]
    %v5406 = vld [vmem:[#allocation14 + $0x100] sm:$0xff]
    %v5407 = vld [vmem:[#allocation14 + $0x108] sm:$0xff]
    %v5408 = vld [vmem:[#allocation14 + $0x110] sm:$0xff]
    %v5409 = vld [vmem:[#allocation14 + $0x118] sm:$0xff]
    %v5410 = vld [vmem:[#allocation14 + $0x120] sm:$0xff]
    %v5411 = vld [vmem:[#allocation14 + $0x128] sm:$0xff]
    %v5412 = vld [vmem:[#allocation14 + $0x130] sm:$0xff]
    %v5413 = vld [vmem:[#allocation14 + $0x138] sm:$0xff]
    %v5414 = vld [vmem:[#allocation14 + $0x140] sm:$0xff]
    %v5415 = vld [vmem:[#allocation14 + $0x148] sm:$0xff]
    %v5416 = vld [vmem:[#allocation14 + $0x150] sm:$0xff]
    %v5417 = vld [vmem:[#allocation14 + $0x158] sm:$0xff]
    %v5418 = vld [vmem:[#allocation14 + $0x160] sm:$0xff]
    %v5419 = vld [vmem:[#allocation14 + $0x168] sm:$0xff]
    %v5420 = vld [vmem:[#allocation14 + $0x170] sm:$0xff]
    %v5421 = vld [vmem:[#allocation14 + $0x178] sm:$0xff]
    %v5422 = vld [vmem:[#allocation14 + $0x180] sm:$0xff]
    %v5423 = vld [vmem:[#allocation14 + $0x188] sm:$0xff]
    %v5424 = vld [vmem:[#allocation14 + $0x190] sm:$0xff]
    %v5425 = vld [vmem:[#allocation14 + $0x198] sm:$0xff]
    %v5426 = vld [vmem:[#allocation14 + $0x1a0] sm:$0xff]
    %v5427 = vld [vmem:[#allocation14 + $0x1a8] sm:$0xff]
    %v5428 = vld [vmem:[#allocation14 + $0x1b0] sm:$0xff]
    %v5429 = vld [vmem:[#allocation14 + $0x1b8] sm:$0xff]
    %v5430 = vld [vmem:[#allocation14 + $0x1c0] sm:$0xff]
    %v5431 = vld [vmem:[#allocation14 + $0x1c8] sm:$0xff]
    %v5432 = vld [vmem:[#allocation14 + $0x1d0] sm:$0xff]
    %v5433 = vld [vmem:[#allocation14 + $0x1d8] sm:$0xff]
    %v5434 = vld [vmem:[#allocation14 + $0x1e0] sm:$0xff]
    %v5435 = vld [vmem:[#allocation14 + $0x1e8] sm:$0xff]
    %v5436 = vld [vmem:[#allocation14 + $0x1f0] sm:$0xff]
    %v5437 = vld [vmem:[#allocation14 + $0x1f8] sm:$0xff]
    %v5438 = vld [vmem:[#allocation16] sm:$0x3]
    %v5440 = vlaneseq
    %v5441 = vshrl.u32 %v5440, 7
    %v5442 = vsub.s32 0, %v5441
    %v5443 = vrot.slane %v5438, %v5442
    %v5444 = vlaneseq
    %v5445 = vshrl.u32 %v5444, 7
    %v5446 = vsub.s32 1, %v5445
    %v5447 = vrot.slane %v5438, %v5446
    %v5514 = vunpack.c.l.b16 %v5374
    %v5515 = vunpack.c.h.b16 %v5374
    %v5516 = vunpack.c.l.b16 %v5375
    %v5517 = vunpack.c.h.b16 %v5375
    %v5518 = vunpack.c.l.b16 %v5376
    %v5519 = vunpack.c.h.b16 %v5376
    %v5520 = vunpack.c.l.b16 %v5377
    %v5521 = vunpack.c.h.b16 %v5377
    %v5522 = vunpack.c.l.b16 %v5378
    %v5523 = vunpack.c.h.b16 %v5378
    %v5524 = vunpack.c.l.b16 %v5379
    %v5525 = vunpack.c.h.b16 %v5379
    %v5526 = vunpack.c.l.b16 %v5380
    %v5527 = vunpack.c.h.b16 %v5380
    %v5528 = vunpack.c.l.b16 %v5381
    %v5529 = vunpack.c.h.b16 %v5381
    %v5530 = vunpack.c.l.b16 %v5382
    %v5531 = vunpack.c.h.b16 %v5382
    %v5532 = vunpack.c.l.b16 %v5383
    %v5533 = vunpack.c.h.b16 %v5383
    %v5534 = vunpack.c.l.b16 %v5384
    %v5535 = vunpack.c.h.b16 %v5384
    %v5536 = vunpack.c.l.b16 %v5385
    %v5537 = vunpack.c.h.b16 %v5385
    %v5538 = vunpack.c.l.b16 %v5386
    %v5539 = vunpack.c.h.b16 %v5386
    %v5540 = vunpack.c.l.b16 %v5387
    %v5541 = vunpack.c.h.b16 %v5387
    %v5542 = vunpack.c.l.b16 %v5388
    %v5543 = vunpack.c.h.b16 %v5388
    %v5544 = vunpack.c.l.b16 %v5389
    %v5545 = vunpack.c.h.b16 %v5389
    %v5546 = vunpack.c.l.b16 %v5390
    %v5547 = vunpack.c.h.b16 %v5390
    %v5548 = vunpack.c.l.b16 %v5391
    %v5549 = vunpack.c.h.b16 %v5391
    %v5550 = vunpack.c.l.b16 %v5392
    %v5551 = vunpack.c.h.b16 %v5392
    %v5552 = vunpack.c.l.b16 %v5393
    %v5553 = vunpack.c.h.b16 %v5393
    %v5554 = vunpack.c.l.b16 %v5394
    %v5555 = vunpack.c.h.b16 %v5394
    %v5556 = vunpack.c.l.b16 %v5395
    %v5557 = vunpack.c.h.b16 %v5395
    %v5558 = vunpack.c.l.b16 %v5396
    %v5559 = vunpack.c.h.b16 %v5396
    %v5560 = vunpack.c.l.b16 %v5397
    %v5561 = vunpack.c.h.b16 %v5397
    %v5562 = vunpack.c.l.b16 %v5398
    %v5563 = vunpack.c.h.b16 %v5398
    %v5564 = vunpack.c.l.b16 %v5399
    %v5565 = vunpack.c.h.b16 %v5399
    %v5566 = vunpack.c.l.b16 %v5400
    %v5567 = vunpack.c.h.b16 %v5400
    %v5568 = vunpack.c.l.b16 %v5401
    %v5569 = vunpack.c.h.b16 %v5401
    %v5570 = vunpack.c.l.b16 %v5402
    %v5571 = vunpack.c.h.b16 %v5402
    %v5572 = vunpack.c.l.b16 %v5403
    %v5573 = vunpack.c.h.b16 %v5403
    %v5574 = vunpack.c.l.b16 %v5404
    %v5575 = vunpack.c.h.b16 %v5404
    %v5576 = vunpack.c.l.b16 %v5405
    %v5577 = vunpack.c.h.b16 %v5405
    %v5578 = vunpack.c.l.b16 %v5406
    %v5579 = vunpack.c.h.b16 %v5406
    %v5580 = vunpack.c.l.b16 %v5407
    %v5581 = vunpack.c.h.b16 %v5407
    %v5582 = vunpack.c.l.b16 %v5408
    %v5583 = vunpack.c.h.b16 %v5408
    %v5584 = vunpack.c.l.b16 %v5409
    %v5585 = vunpack.c.h.b16 %v5409
    %v5586 = vunpack.c.l.b16 %v5410
    %v5587 = vunpack.c.h.b16 %v5410
    %v5588 = vunpack.c.l.b16 %v5411
    %v5589 = vunpack.c.h.b16 %v5411
    %v5590 = vunpack.c.l.b16 %v5412
    %v5591 = vunpack.c.h.b16 %v5412
    %v5592 = vunpack.c.l.b16 %v5413
    %v5593 = vunpack.c.h.b16 %v5413
    %v5594 = vunpack.c.l.b16 %v5414
    %v5595 = vunpack.c.h.b16 %v5414
    %v5596 = vunpack.c.l.b16 %v5415
    %v5597 = vunpack.c.h.b16 %v5415
    %v5598 = vunpack.c.l.b16 %v5416
    %v5599 = vunpack.c.h.b16 %v5416
    %v5600 = vunpack.c.l.b16 %v5417
    %v5601 = vunpack.c.h.b16 %v5417
    %v5602 = vunpack.c.l.b16 %v5418
    %v5603 = vunpack.c.h.b16 %v5418
    %v5604 = vunpack.c.l.b16 %v5419
    %v5605 = vunpack.c.h.b16 %v5419
    %v5606 = vunpack.c.l.b16 %v5420
    %v5607 = vunpack.c.h.b16 %v5420
    %v5608 = vunpack.c.l.b16 %v5421
    %v5609 = vunpack.c.h.b16 %v5421
    %v5610 = vunpack.c.l.b16 %v5422
    %v5611 = vunpack.c.h.b16 %v5422
    %v5612 = vunpack.c.l.b16 %v5423
    %v5613 = vunpack.c.h.b16 %v5423
    %v5614 = vunpack.c.l.b16 %v5424
    %v5615 = vunpack.c.h.b16 %v5424
    %v5616 = vunpack.c.l.b16 %v5425
    %v5617 = vunpack.c.h.b16 %v5425
    %v5618 = vunpack.c.l.b16 %v5426
    %v5619 = vunpack.c.h.b16 %v5426
    %v5620 = vunpack.c.l.b16 %v5427
    %v5621 = vunpack.c.h.b16 %v5427
    %v5622 = vunpack.c.l.b16 %v5428
    %v5623 = vunpack.c.h.b16 %v5428
    %v5624 = vunpack.c.l.b16 %v5429
    %v5625 = vunpack.c.h.b16 %v5429
    %v5626 = vunpack.c.l.b16 %v5430
    %v5627 = vunpack.c.h.b16 %v5430
    %v5628 = vunpack.c.l.b16 %v5431
    %v5629 = vunpack.c.h.b16 %v5431
    %v5630 = vunpack.c.l.b16 %v5432
    %v5631 = vunpack.c.h.b16 %v5432
    %v5632 = vunpack.c.l.b16 %v5433
    %v5633 = vunpack.c.h.b16 %v5433
    %v5634 = vunpack.c.l.b16 %v5434
    %v5635 = vunpack.c.h.b16 %v5434
    %v5636 = vunpack.c.l.b16 %v5435
    %v5637 = vunpack.c.h.b16 %v5435
    %v5638 = vunpack.c.l.b16 %v5436
    %v5639 = vunpack.c.h.b16 %v5436
    %v5640 = vunpack.c.l.b16 %v5437
    %v5641 = vunpack.c.h.b16 %v5437
    %v5642 = vpack.c.b16 %v5516, %v5514
    %v5643 = vpack.c.b16 %v5517, %v5515
    %v5644 = vpack.c.b16 %v5520, %v5518
    %v5645 = vpack.c.b16 %v5521, %v5519
    %v5646 = vpack.c.b16 %v5524, %v5522
    %v5647 = vpack.c.b16 %v5525, %v5523
    %v5648 = vpack.c.b16 %v5528, %v5526
    %v5649 = vpack.c.b16 %v5529, %v5527
    %v5650 = vpack.c.b16 %v5532, %v5530
    %v5651 = vpack.c.b16 %v5533, %v5531
    %v5652 = vpack.c.b16 %v5536, %v5534
    %v5653 = vpack.c.b16 %v5537, %v5535
    %v5654 = vpack.c.b16 %v5540, %v5538
    %v5655 = vpack.c.b16 %v5541, %v5539
    %v5656 = vpack.c.b16 %v5544, %v5542
    %v5657 = vpack.c.b16 %v5545, %v5543
    %v5658 = vpack.c.b16 %v5548, %v5546
    %v5659 = vpack.c.b16 %v5549, %v5547
    %v5660 = vpack.c.b16 %v5552, %v5550
    %v5661 = vpack.c.b16 %v5553, %v5551
    %v5662 = vpack.c.b16 %v5556, %v5554
    %v5663 = vpack.c.b16 %v5557, %v5555
    %v5664 = vpack.c.b16 %v5560, %v5558
    %v5665 = vpack.c.b16 %v5561, %v5559
    %v5666 = vpack.c.b16 %v5564, %v5562
    %v5667 = vpack.c.b16 %v5565, %v5563
    %v5668 = vpack.c.b16 %v5568, %v5566
    %v5669 = vpack.c.b16 %v5569, %v5567
    %v5670 = vpack.c.b16 %v5572, %v5570
    %v5671 = vpack.c.b16 %v5573, %v5571
    %v5672 = vpack.c.b16 %v5576, %v5574
    %v5673 = vpack.c.b16 %v5577, %v5575
    %v5674 = vpack.c.b16 %v5580, %v5578
    %v5675 = vpack.c.b16 %v5581, %v5579
    %v5676 = vpack.c.b16 %v5584, %v5582
    %v5677 = vpack.c.b16 %v5585, %v5583
    %v5678 = vpack.c.b16 %v5588, %v5586
    %v5679 = vpack.c.b16 %v5589, %v5587
    %v5680 = vpack.c.b16 %v5592, %v5590
    %v5681 = vpack.c.b16 %v5593, %v5591
    %v5682 = vpack.c.b16 %v5596, %v5594
    %v5683 = vpack.c.b16 %v5597, %v5595
    %v5684 = vpack.c.b16 %v5600, %v5598
    %v5685 = vpack.c.b16 %v5601, %v5599
    %v5686 = vpack.c.b16 %v5604, %v5602
    %v5687 = vpack.c.b16 %v5605, %v5603
    %v5688 = vpack.c.b16 %v5608, %v5606
    %v5689 = vpack.c.b16 %v5609, %v5607
    %v5690 = vpack.c.b16 %v5612, %v5610
    %v5691 = vpack.c.b16 %v5613, %v5611
    %v5692 = vpack.c.b16 %v5616, %v5614
    %v5693 = vpack.c.b16 %v5617, %v5615
    %v5694 = vpack.c.b16 %v5620, %v5618
    %v5695 = vpack.c.b16 %v5621, %v5619
    %v5696 = vpack.c.b16 %v5624, %v5622
    %v5697 = vpack.c.b16 %v5625, %v5623
    %v5698 = vpack.c.b16 %v5628, %v5626
    %v5699 = vpack.c.b16 %v5629, %v5627
    %v5700 = vpack.c.b16 %v5632, %v5630
    %v5701 = vpack.c.b16 %v5633, %v5631
    %v5702 = vpack.c.b16 %v5636, %v5634
    %v5703 = vpack.c.b16 %v5637, %v5635
    %v5704 = vpack.c.b16 %v5640, %v5638
    %v5705 = vpack.c.b16 %v5641, %v5639
    %5770 = vmatprep.subr.bf16.mxu0 %v5643
    %5771 = vmatpush1.bf16.msra.mxu0 %v5642
    %5772 = vmatprep.subr.bf16.mxu0 %v5645
    %5773 = vmatpush1.bf16.msra.mxu0 %v5644
    %5774 = vmatprep.subr.bf16.mxu0 %v5647
    %5775 = vmatpush1.bf16.msra.mxu0 %v5646
    %5776 = vmatprep.subr.bf16.mxu0 %v5649
    %5777 = vmatpush1.bf16.msra.mxu0 %v5648
    %5778 = vmatprep.subr.bf16.mxu0 %v5651
    %5779 = vmatpush1.bf16.msra.mxu0 %v5650
    %5780 = vmatprep.subr.bf16.mxu0 %v5653
    %5781 = vmatpush1.bf16.msra.mxu0 %v5652
    %5782 = vmatprep.subr.bf16.mxu0 %v5655
    %5783 = vmatpush1.bf16.msra.mxu0 %v5654
    %5784 = vmatprep.subr.bf16.mxu0 %v5657
    %5785 = vmatpush1.bf16.msra.mxu0 %v5656
    %5786 = vmatprep.subr.bf16.mxu0 %v5659
    %5787 = vmatpush1.bf16.msra.mxu0 %v5658
    %5788 = vmatprep.subr.bf16.mxu0 %v5661
    %5789 = vmatpush1.bf16.msra.mxu0 %v5660
    %5790 = vmatprep.subr.bf16.mxu0 %v5663
    %5791 = vmatpush1.bf16.msra.mxu0 %v5662
    %5792 = vmatprep.subr.bf16.mxu0 %v5665
    %5793 = vmatpush1.bf16.msra.mxu0 %v5664
    %5794 = vmatprep.subr.bf16.mxu0 %v5667
    %5795 = vmatpush1.bf16.msra.mxu0 %v5666
    %5796 = vmatprep.subr.bf16.mxu0 %v5669
    %5797 = vmatpush1.bf16.msra.mxu0 %v5668
    %5798 = vmatprep.subr.bf16.mxu0 %v5671
    %5799 = vmatpush1.bf16.msra.mxu0 %v5670
    %5800 = vmatprep.subr.bf16.mxu0 %v5673
    %5801 = vmatpush1.bf16.msra.mxu0 %v5672
    %5802 = vmatprep.mubr.bf16.mxu0 %v5371
    %5803 = vmatmul.mubr.bf16.gmra.mrb[0].mxu0 %v5370
    %v5804 = vpop.f32.mrb[0].mxu0
    %v5805 = vadd.f32 %v5443, %v5804
    %v5806 = vpop.f32.mrb[0].mxu0
    %v5807 = vadd.f32 %v5447, %v5806
    %v5808 = vpop.f32.mrb[0].mxu0
    %v5809 = vpop.f32.mrb[0].mxu0
    %5810 = vdwg.mxu0
    %5811 = vmatprep.subr.bf16.mxu0 %v5675
    %5812 = vmatpush1.bf16.msra.mxu0 %v5674
    %5813 = vmatprep.subr.bf16.mxu0 %v5677
    %5814 = vmatpush1.bf16.msra.mxu0 %v5676
    %5815 = vmatprep.subr.bf16.mxu0 %v5679
    %5816 = vmatpush1.bf16.msra.mxu0 %v5678
    %5817 = vmatprep.subr.bf16.mxu0 %v5681
    %5818 = vmatpush1.bf16.msra.mxu0 %v5680
    %5819 = vmatprep.subr.bf16.mxu0 %v5683
    %5820 = vmatpush1.bf16.msra.mxu0 %v5682
    %5821 = vmatprep.subr.bf16.mxu0 %v5685
    %5822 = vmatpush1.bf16.msra.mxu0 %v5684
    %5823 = vmatprep.subr.bf16.mxu0 %v5687
    %5824 = vmatpush1.bf16.msra.mxu0 %v5686
    %5825 = vmatprep.subr.bf16.mxu0 %v5689
    %5826 = vmatpush1.bf16.msra.mxu0 %v5688
    %5827 = vmatprep.subr.bf16.mxu0 %v5691
    %5828 = vmatpush1.bf16.msra.mxu0 %v5690
    %5829 = vmatprep.subr.bf16.mxu0 %v5693
    %5830 = vmatpush1.bf16.msra.mxu0 %v5692
    %5831 = vmatprep.subr.bf16.mxu0 %v5695
    %5832 = vmatpush1.bf16.msra.mxu0 %v5694
    %5833 = vmatprep.subr.bf16.mxu0 %v5697
    %5834 = vmatpush1.bf16.msra.mxu0 %v5696
    %5835 = vmatprep.subr.bf16.mxu0 %v5699
    %5836 = vmatpush1.bf16.msra.mxu0 %v5698
    %5837 = vmatprep.subr.bf16.mxu0 %v5701
    %5838 = vmatpush1.bf16.msra.mxu0 %v5700
    %5839 = vmatprep.subr.bf16.mxu0 %v5703
    %5840 = vmatpush1.bf16.msra.mxu0 %v5702
    %5841 = vmatprep.subr.bf16.mxu0 %v5705
    %5842 = vmatpush1.bf16.msra.mxu0 %v5704
    %5843 = vmatprep.mubr.bf16.mxu0 %v5373
    %5844 = vmatmul.mubr.bf16.gmra.mrb[0].mxu0 %v5372
    %v5845 = vpop.f32.mrb[0].mxu0
    %v5846 = vadd.f32 %v5805, %v5845
    %v5847 = vpop.f32.mrb[0].mxu0
    %v5848 = vadd.f32 %v5807, %v5847
    %v5849 = vpop.f32.mrb[0].mxu0
    %v5850 = vpop.f32.mrb[0].mxu0
    %5851 = vdwg.mxu0
    %5852 = vst [vmem:[#allocation17] sm:$0xff] %v5846
    %5853 = vst [vmem:[#allocation17 + $0x8] sm:$0xff] %v5848
    // Predicated region
    $region74: #{tpu_custom_call.1} parent=1 // pred_check
      _
    $region75: #{tpu_custom_call.1} parent=1 // pred_check_branch
      %5855 = sbr.rel (0) target = $region77
    $region76: #{tpu_custom_call.1} parent=1 // pred_region
      %s5857 = ssub.s32 256, 256
      %5858 = vsyncadd [#allocation4], %s5857
      %s5860 = sshll.u32 [#allocation17], 4
      %s5861 = int_to_ptr.vmem [resolvable:$true] %s5860
      %5863 = dma.vmem_to_hbm [thread:$0]  %s5861, 256, %s9, [#allocation4]
    $region77: #{tpu_custom_call.1} parent=1 // pred_fallthru
      _
    // Predicated region
    $region78: #{tpu_custom_call.1} parent=1 // pred_check
      _
    $region79: #{tpu_custom_call.1} parent=1 // pred_check_branch
      %5865 = sbr.rel (0) target = $region81
    $region80: #{tpu_custom_call.1} parent=1 // pred_region
      %5866 = dma.done [#allocation4], 256
    $region81: #{tpu_custom_call.1} parent=1 // pred_fallthru
      _
    %5867 = vsyncpa [#allocation3], 1
    %5868 = vsyncpa [#allocation6], 1
    %5869 = vsyncpa [#allocation9], 1
    %5870 = vsyncpa [#allocation12], 1
    %5871 = vsyncpa [#allocation15], 1
    %5872 = vsyncpa [#allocation4], 1

</llo_original>
